<compile_context>
chip_gen: v7x
topology: tpu7x:2x2x1
jax: 0.10.0
libtpu: 0.0.40
codegen_flags: <defaults>
</compile_context>

<pallas_src>
import functools

import jax
import jax.numpy as jnp
import numpy as np
from jax import lax
from jax.experimental import pallas as pl
from jax.experimental.pallas import tpu as pltpu


def _round_up(x, m):
    return ((x + m - 1) // m) * m


def _largest_divisor_leq(n, cap):
    best = 1
    for t in range(1, min(n, cap) + 1):
        if n % t == 0:
            best = t
    return best


def _chip_budget():
    """(max pooled rows per slab, vmem_limit_bytes), keyed on physical VMEM."""
    try:
        info = pltpu.get_tpu_info()
        vmem = getattr(info, "vmem_capacity_bytes", None)
    except Exception:
        vmem = None
    if vmem is not None and vmem >= 100 * 1024 * 1024:
        # v5e / v6e: 128 MiB VMEM -> bigger slabs, raised scoped-VMEM limit.
        return 16, 96 * 1024 * 1024
    # v7x (64 MiB per TensorCore) or unknown chip: stay conservative.
    return 8, 32 * 1024 * 1024


# -----------------------------------------------------------------------------
# Fused kernel: conv1+ReLU -> conv2+ReLU -> 2x2 maxpool -> conv3 (+bias).
# Flat "wide" row layout inside the kernel: row r = y*Wp + u, channels on the
# 128-lane dim; the zero ring around the image implements SAME padding.
# -----------------------------------------------------------------------------
def _vgg_slice1_kernel(x1_ref, w1_ref, b1_ref, w2_ref, b2_ref, w3_ref, b3_ref,
                       o_ref, *, TP, H, W, Wp, Wq):
    bf16, f32 = jnp.bfloat16, jnp.float32
    TH = 2 * TP            # conv2 rows covering this slab's pooled output
    NR1 = TH + 7           # conv1 rows held per slab (halos + 1 slack row)
    NR2 = TH + 4           # conv2 rows computed (1 pooled-row halo each side)
    NPH = TP + 2           # pooled rows incl. conv3 halo
    H2, W2 = H // 2, W // 2
    L1 = NR1 * Wp
    L2 = NR2 * Wp
    L3 = TP * Wq

    s = pl.program_id(0)
    y0 = 2 * s * TP - 3    # global image row of conv1 slab row 0

    # ---- conv1: all 9 taps pre-fused into K=27 (wrapper im2col), bias+ReLU --
    a1 = jnp.dot(x1_ref[0, 0], w1_ref[...], preferred_element_type=f32)
    a1 = jnp.maximum(a1 + b1_ref[...], 0.0)                        # (L1,64) f32
    # Zero everything outside the image: this *is* conv2's SAME padding.
    row1 = lax.broadcasted_iota(jnp.int32, (NR1, Wp, 1), 0) + y0
    col1 = lax.broadcasted_iota(jnp.int32, (NR1, Wp, 1), 1)
    ok1 = (row1 >= 0) & (row1 < H) & (col1 >= 1) & (col1 <= W)
    a1 = jnp.where(ok1, a1.reshape(NR1, Wp, 64), 0.0)
    a1 = a1.reshape(L1, 64).astype(bf16)

    # ---- conv2: all 9 taps fused along K (K=576, Cout=64) -------------------
    lhs2 = jnp.concatenate(
        [a1[dy * Wp + dx:dy * Wp + dx + L2, :]
         for dy in range(3) for dx in range(3)], axis=1)           # (L2,576)
    a2 = jnp.dot(lhs2, w2_ref[...], preferred_element_type=f32)
    a2 = jnp.maximum(a2 + b2_ref[...], 0.0).astype(bf16)           # (L2,64)

    # ---- 2x2 max-pool, stride 2 (bf16; bf16 rounding commutes with max) -----
    a2 = a2.reshape(NPH, 2, Wp, 64)
    h2 = jnp.maximum(a2[:, 0], a2[:, 1])                           # row pool
    h2 = h2[:, :2 * W2, :].reshape(NPH, W2, 2, 64)
    pooled = jnp.maximum(h2[:, :, 0, :], h2[:, :, 1, :])           # (NPH,W2,64)
    # Pooled halo rows outside the image must be zero (conv3's SAME padding).
    prow = lax.broadcasted_iota(jnp.int32, (NPH, W2, 1), 0) + (s * TP - 1)
    pooled = jnp.where((prow >= 0) & (prow < H2), pooled, 0.0)

    # ---- conv3 layout: left/right zero ring + one zero slack row ------------
    zl = jnp.zeros((NPH, 1, 64), bf16)
    zr = jnp.zeros((NPH, Wq - W2 - 1, 64), bf16)
    p3 = jnp.concatenate([zl, pooled, zr], axis=1)                 # (NPH,Wq,64)
    p3 = jnp.concatenate([p3, jnp.zeros((1, Wq, 64), bf16)], axis=0)
    p3 = p3.reshape((NPH + 1) * Wq, 64)

    # ---- conv3: all 9 taps fused along K (K=576, Cout=128), no ReLU ---------
    lhs3 = jnp.concatenate(
        [p3[dy * Wq + dx:dy * Wq + dx + L3, :]
         for dy in range(3) for dx in range(3)], axis=1)           # (L3,576)
    a3 = jnp.dot(lhs3, w3_ref[...], preferred_element_type=f32) + b3_ref[...]
    o_ref[0] = a3.reshape(TP, Wq, 128)[:, :W2, :]                  # lane-dense


# -----------------------------------------------------------------------------
# VGG19.slice1 forward (module-level I/O is NCHW, like PyTorch).
# -----------------------------------------------------------------------------
def vgg19_slice1_forward(x_nchw, params):
    bf16, f32 = jnp.bfloat16, jnp.float32
    x = jnp.transpose(x_nchw, (0, 2, 3, 1)).astype(bf16)      # NCHW -> NHWC
    N, H, W, Cin = x.shape
    assert Cin == 3, "VGG slice1 expects 3 input channels"
    # TODO(synk): odd H/W (floor-pooling) not supported; VGG inputs are even.
    assert H % 2 == 0 and W % 2 == 0, "2x2/stride-2 maxpool needs even H, W"
    H2, W2 = H // 2, W // 2

    cap_tp, vmem_limit = _chip_budget()
    # TODO(synk): divisor-only slab tiling; a padded/ragged last slab would
    # avoid tiny slabs when H/2 has no divisor <= cap_tp.
    TP = _largest_divisor_leq(H2, cap_tp)       # pooled rows per grid step
    S = H2 // TP
    TH = 2 * TP
    NR1 = TH + 7
    Wp = _round_up(W + 2, 8)
    Wq = _round_up(W2 + 2, 8)

    # im2col of the 3-channel input (K = 27), built in bf16, zero-padded so
    # every slab window (incl. conv1/conv2/pool/conv3 halos) is contiguous.
    x_big = jnp.zeros((N, H + 9, Wp + 2, 3), bf16)
    x_big = x_big.at[:, 4:4 + H, 2:2 + W, :].set(x)
    taps = [x_big[:, dy:dy + H + 7, dx:dx + Wp, :]
            for dy in range(3) for dx in range(3)]
    xf = jnp.concatenate(taps, axis=-1)                       # (N, H+7, Wp, 27)
    # Overlapping pre-haloed row slabs, flattened to wide rows (r = y*Wp + u).
    # TODO(synk): slab overlap duplicates a 7-row halo in HBM; an in-kernel
    # DMA-halo scheme would remove that last wrapper copy.
    slabs = [xf[:, 2 * s * TP:2 * s * TP + NR1] for s in range(S)]
    x1 = jnp.stack(slabs, axis=1).reshape(N, S, NR1 * Wp, 27)

    # Tap-fused weights: rows are (dy, dx, cin) flattened, matching the kernel.
    w1c = params["w1"].reshape(27, 64).astype(bf16)
    w2c = params["w2"].reshape(576, 64).astype(bf16)
    w3c = params["w3"].reshape(576, 128).astype(bf16)
    b1 = params["b1"].reshape(1, 64).astype(f32)
    b2 = params["b2"].reshape(1, 64).astype(f32)
    b3 = params["b3"].reshape(1, 128).astype(f32)

    out_nhwc = pl.pallas_call(
        functools.partial(_vgg_slice1_kernel, TP=TP, H=H, W=W, Wp=Wp, Wq=Wq),
        out_shape=jax.ShapeDtypeStruct((N, H2, W2, 128), f32),
        grid=(S, N),
        in_specs=[
            pl.BlockSpec((1, 1, NR1 * Wp, 27), lambda s, n: (n, s, 0, 0)),
            pl.BlockSpec((27, 64), lambda s, n: (0, 0)),
            pl.BlockSpec((1, 64), lambda s, n: (0, 0)),
            pl.BlockSpec((576, 64), lambda s, n: (0, 0)),
            pl.BlockSpec((1, 64), lambda s, n: (0, 0)),
            pl.BlockSpec((576, 128), lambda s, n: (0, 0)),
            pl.BlockSpec((1, 128), lambda s, n: (0, 0)),
        ],
        out_specs=pl.BlockSpec((1, TP, W2, 128), lambda s, n: (n, s, 0, 0)),
        compiler_params=pltpu.CompilerParams(
            dimension_semantics=("parallel", "parallel"),
            vmem_limit_bytes=vmem_limit),
    )(x1, w1c, b1, w2c, b2, w3c, b3)

    return jnp.transpose(out_nhwc, (0, 3, 1, 2))              # NHWC -> NCHW


# -----------------------------------------------------------------------------
# Pure-JAX reference.  Matches the kernel's numerics: conv operands are rounded
# to bf16 but accumulated in f32 (preferred_element_type); bias/ReLU/pool f32.
# -----------------------------------------------------------------------------
def ref_forward(x_nchw, params):
    f32 = jnp.float32
    x = jnp.transpose(x_nchw, (0, 2, 3, 1)).astype(f32)

    def conv(h, w, b):
        y = jax.lax.conv_general_dilated(
            h.astype(jnp.bfloat16), w.astype(jnp.bfloat16),
            window_strides=(1, 1), padding="SAME",
            dimension_numbers=("NHWC", "HWIO", "NHWC"),
            preferred_element_type=jnp.float32)
        return y + b

    h = jax.nn.relu(conv(x, params["w1"], params["b1"]))
    h = jax.nn.relu(conv(h, params["w2"], params["b2"]))
    h = jax.lax.reduce_window(h, -jnp.inf, jax.lax.max,
                              (1, 2, 2, 1), (1, 2, 2, 1), "VALID")
    h = conv(h, params["w3"], params["b3"])
    return jnp.transpose(h, (0, 3, 1, 2))


def init_params(key):
    def init_conv(k, cin, cout):
        kw, kb = jax.random.split(k)
        w = jax.random.normal(kw, (3, 3, cin, cout), jnp.float32)
        w = w * (1.0 / np.sqrt(9.0 * cin))
        b = 0.01 * jax.random.normal(kb, (cout,), jnp.float32)
        return w, b

    k1, k2, k3 = jax.random.split(key, 3)
    w1, b1 = init_conv(k1, 3, 64)
    w2, b2 = init_conv(k2, 64, 64)
    w3, b3 = init_conv(k3, 64, 128)
    return {"w1": w1, "b1": b1, "w2": w2, "b2": b2, "w3": w3, "b3": b3}


if __name__ == "__main__":
    key = jax.random.PRNGKey(0)
    kx, kp = jax.random.split(key)

    # Small input consistent with VGG: NCHW, 3 input channels.
    X = jax.random.normal(kx, (2, 3, 16, 16), jnp.float32)
    params = init_params(kp)

    fwd = jax.jit(vgg19_slice1_forward)
    out = jax.block_until_ready(fwd(X, params))
    ref = jax.block_until_ready(ref_forward(X, params))

    assert out.shape == (2, 128, 8, 8), out.shape
    assert out.dtype == jnp.float32
    np.testing.assert_allclose(np.asarray(out), np.asarray(ref),
                               rtol=2e-3, atol=2e-3)
    print("KERNEL_OK")
</pallas_src>

<mosaic_0001>
module attributes {stable_mosaic.version = 11 : i64} {
  func.func @_vgg_slice1_kernel(%arg0: i32, %arg1: i32, %arg2: memref<1x1x552x27xbf16, #tpu.memory_space<vmem>>, %arg3: memref<27x64xbf16, #tpu.memory_space<vmem>>, %arg4: memref<1x64xf32, #tpu.memory_space<vmem>>, %arg5: memref<576x64xbf16, #tpu.memory_space<vmem>>, %arg6: memref<1x64xf32, #tpu.memory_space<vmem>>, %arg7: memref<576x128xbf16, #tpu.memory_space<vmem>>, %arg8: memref<1x128xf32, #tpu.memory_space<vmem>>, %arg9: memref<1x8x8x128xf32, #tpu.memory_space<vmem>>) attributes {dimension_semantics = [#tpu.dimension_semantics<parallel>, #tpu.dimension_semantics<parallel>], iteration_bounds = array<i64: 1, 2>, scalar_prefetch = 0 : i64, scratch_operands = 0 : i64, tpu.core_type = #tpu.core_type<tc>, window_params = [{transform_indices = @transform_0, window_bounds = array<i64: 1, 1, 552, 27>}, {pipeline_mode = #tpu.pipeline_mode<synchronous>, transform_indices = @transform_1, window_bounds = array<i64: 27, 64>}, {pipeline_mode = #tpu.pipeline_mode<synchronous>, transform_indices = @transform_2, window_bounds = array<i64: 1, 64>}, {pipeline_mode = #tpu.pipeline_mode<synchronous>, transform_indices = @transform_3, window_bounds = array<i64: 576, 64>}, {pipeline_mode = #tpu.pipeline_mode<synchronous>, transform_indices = @transform_4, window_bounds = array<i64: 1, 64>}, {pipeline_mode = #tpu.pipeline_mode<synchronous>, transform_indices = @transform_5, window_bounds = array<i64: 576, 128>}, {pipeline_mode = #tpu.pipeline_mode<synchronous>, transform_indices = @transform_6, window_bounds = array<i64: 1, 128>}, {transform_indices = @transform_7, window_bounds = array<i64: 1, 8, 8, 128>}]} {
    %c2_i32 = arith.constant 2 : i32
    %0 = arith.muli %c2_i32, %arg0 : i32
    %c8_i32 = arith.constant 8 : i32
    %1 = arith.muli %0, %c8_i32 : i32
    %c3_i32 = arith.constant 3 : i32
    %2 = arith.subi %1, %c3_i32 : i32
    %c0 = arith.constant 0 : index
    %c0_0 = arith.constant 0 : index
    %c0_1 = arith.constant 0 : index
    %c0_2 = arith.constant 0 : index
    %3 = vector.load %arg2[%c0, %c0_0, %c0_1, %c0_2] : memref<1x1x552x27xbf16, #tpu.memory_space<vmem>>, vector<1x1x552x27xbf16>
    %4 = vector.shape_cast %3 : vector<1x1x552x27xbf16> to vector<552x27xbf16>
    %c0_3 = arith.constant 0 : index
    %c0_4 = arith.constant 0 : index
    %5 = vector.load %arg3[%c0_3, %c0_4] : memref<27x64xbf16, #tpu.memory_space<vmem>>, vector<27x64xbf16>
    %cst = arith.constant dense<0.000000e+00> : vector<552x64xf32>
    %6 = tpu.matmul %4, %5, %cst {dimension_numbers = #tpu.dot_dimension_numbers<[1], [0], [0], [1], [0, 0, 1, 1], [], []>} : vector<552x27xbf16>, vector<27x64xbf16>, vector<552x64xf32> -> vector<552x64xf32>
    %c0_5 = arith.constant 0 : index
    %c0_6 = arith.constant 0 : index
    %7 = vector.load %arg4[%c0_5, %c0_6] : memref<1x64xf32, #tpu.memory_space<vmem>>, vector<1x64xf32>
    %8 = vector.broadcast %7 : vector<1x64xf32> to vector<552x64xf32>
    %9 = arith.addf %6, %8 : vector<552x64xf32>
    %cst_7 = arith.constant 0.000000e+00 : f32
    %10 = vector.broadcast %cst_7 : f32 to vector<552x64xf32>
    %11 = arith.maximumf %9, %10 : vector<552x64xf32>
    %12 = tpu.iota {dimensions = array<i32: 0>} : vector<23x24x1xi32>
    %13 = vector.broadcast %2 : i32 to vector<23x24x1xi32>
    %14 = arith.addi %12, %13 : vector<23x24x1xi32>
    %15 = tpu.iota {dimensions = array<i32: 1>} : vector<23x24x1xi32>
    %c0_i32 = arith.constant 0 : i32
    %16 = vector.broadcast %c0_i32 : i32 to vector<23x24x1xi32>
    %17 = arith.cmpi sge, %14, %16 : vector<23x24x1xi32>
    %c16_i32 = arith.constant 16 : i32
    %18 = vector.broadcast %c16_i32 : i32 to vector<23x24x1xi32>
    %19 = arith.cmpi slt, %14, %18 : vector<23x24x1xi32>
    %20 = arith.andi %17, %19 : vector<23x24x1xi1>
    %c1_i32 = arith.constant 1 : i32
    %21 = vector.broadcast %c1_i32 : i32 to vector<23x24x1xi32>
    %22 = arith.cmpi sge, %15, %21 : vector<23x24x1xi32>
    %23 = arith.andi %20, %22 : vector<23x24x1xi1>
    %c16_i32_8 = arith.constant 16 : i32
    %24 = vector.broadcast %c16_i32_8 : i32 to vector<23x24x1xi32>
    %25 = arith.cmpi sle, %15, %24 : vector<23x24x1xi32>
    %26 = arith.andi %23, %25 : vector<23x24x1xi1>
    %27 = vector.shape_cast %11 : vector<552x64xf32> to vector<23x24x64xf32>
    %cst_9 = arith.constant 0.000000e+00 : f32
    %28 = vector.shape_cast %26 : vector<23x24x1xi1> to vector<23x24x1xi1>
    %29 = vector.broadcast %28 : vector<23x24x1xi1> to vector<23x24x64xi1>
    %30 = vector.broadcast %cst_9 : f32 to vector<23x24x64xf32>
    %31 = arith.select %29, %27, %30 : vector<23x24x64xi1>, vector<23x24x64xf32>
    %32 = vector.shape_cast %31 : vector<23x24x64xf32> to vector<552x64xf32>
    %33 = arith.truncf %32 : vector<552x64xf32> to vector<552x64xbf16>
    %34 = vector.extract_strided_slice %33 {offsets = [0, 0], sizes = [480, 64], strides = [1, 1]} : vector<552x64xbf16> to vector<480x64xbf16>
    %35 = vector.extract_strided_slice %33 {offsets = [1, 0], sizes = [480, 64], strides = [1, 1]} : vector<552x64xbf16> to vector<480x64xbf16>
    %36 = vector.extract_strided_slice %33 {offsets = [2, 0], sizes = [480, 64], strides = [1, 1]} : vector<552x64xbf16> to vector<480x64xbf16>
    %37 = vector.extract_strided_slice %33 {offsets = [24, 0], sizes = [480, 64], strides = [1, 1]} : vector<552x64xbf16> to vector<480x64xbf16>
    %38 = vector.extract_strided_slice %33 {offsets = [25, 0], sizes = [480, 64], strides = [1, 1]} : vector<552x64xbf16> to vector<480x64xbf16>
    %39 = vector.extract_strided_slice %33 {offsets = [26, 0], sizes = [480, 64], strides = [1, 1]} : vector<552x64xbf16> to vector<480x64xbf16>
    %40 = vector.extract_strided_slice %33 {offsets = [48, 0], sizes = [480, 64], strides = [1, 1]} : vector<552x64xbf16> to vector<480x64xbf16>
    %41 = vector.extract_strided_slice %33 {offsets = [49, 0], sizes = [480, 64], strides = [1, 1]} : vector<552x64xbf16> to vector<480x64xbf16>
    %42 = vector.extract_strided_slice %33 {offsets = [50, 0], sizes = [480, 64], strides = [1, 1]} : vector<552x64xbf16> to vector<480x64xbf16>
    %43 = tpu.concatenate %34, %35, %36, %37, %38, %39, %40, %41, %42 in 1 : vector<480x64xbf16>, vector<480x64xbf16>, vector<480x64xbf16>, vector<480x64xbf16>, vector<480x64xbf16>, vector<480x64xbf16>, vector<480x64xbf16>, vector<480x64xbf16>, vector<480x64xbf16> -> vector<480x576xbf16>
    %c0_10 = arith.constant 0 : index
    %c0_11 = arith.constant 0 : index
    %44 = vector.load %arg5[%c0_10, %c0_11] : memref<576x64xbf16, #tpu.memory_space<vmem>>, vector<576x64xbf16>
    %cst_12 = arith.constant dense<0.000000e+00> : vector<480x64xf32>
    %45 = tpu.matmul %43, %44, %cst_12 {dimension_numbers = #tpu.dot_dimension_numbers<[1], [0], [0], [1], [0, 0, 1, 1], [], []>} : vector<480x576xbf16>, vector<576x64xbf16>, vector<480x64xf32> -> vector<480x64xf32>
    %c0_13 = arith.constant 0 : index
    %c0_14 = arith.constant 0 : index
    %46 = vector.load %arg6[%c0_13, %c0_14] : memref<1x64xf32, #tpu.memory_space<vmem>>, vector<1x64xf32>
    %47 = vector.broadcast %46 : vector<1x64xf32> to vector<480x64xf32>
    %48 = arith.addf %45, %47 : vector<480x64xf32>
    %cst_15 = arith.constant 0.000000e+00 : f32
    %49 = vector.broadcast %cst_15 : f32 to vector<480x64xf32>
    %50 = arith.maximumf %48, %49 : vector<480x64xf32>
    %51 = arith.truncf %50 : vector<480x64xf32> to vector<480x64xbf16>
    %52 = vector.shape_cast %51 : vector<480x64xbf16> to vector<10x2x24x64xbf16>
    %53 = vector.extract_strided_slice %52 {offsets = [0, 0, 0, 0], sizes = [10, 1, 24, 64], strides = [1, 1, 1, 1]} : vector<10x2x24x64xbf16> to vector<10x1x24x64xbf16>
    %54 = vector.shape_cast %53 : vector<10x1x24x64xbf16> to vector<10x24x64xbf16>
    %55 = vector.extract_strided_slice %52 {offsets = [0, 1, 0, 0], sizes = [10, 1, 24, 64], strides = [1, 1, 1, 1]} : vector<10x2x24x64xbf16> to vector<10x1x24x64xbf16>
    %56 = vector.shape_cast %55 : vector<10x1x24x64xbf16> to vector<10x24x64xbf16>
    %57 = arith.maximumf %54, %56 : vector<10x24x64xbf16>
    %58 = vector.extract_strided_slice %57 {offsets = [0, 0, 0], sizes = [10, 16, 64], strides = [1, 1, 1]} : vector<10x24x64xbf16> to vector<10x16x64xbf16>
    %59 = vector.shape_cast %58 : vector<10x16x64xbf16> to vector<10x8x2x64xbf16>
    %60 = vector.extract_strided_slice %59 {offsets = [0, 0, 0, 0], sizes = [10, 8, 1, 64], strides = [1, 1, 1, 1]} : vector<10x8x2x64xbf16> to vector<10x8x1x64xbf16>
    %61 = vector.shape_cast %60 : vector<10x8x1x64xbf16> to vector<10x8x64xbf16>
    %62 = vector.extract_strided_slice %59 {offsets = [0, 0, 1, 0], sizes = [10, 8, 1, 64], strides = [1, 1, 1, 1]} : vector<10x8x2x64xbf16> to vector<10x8x1x64xbf16>
    %63 = vector.shape_cast %62 : vector<10x8x1x64xbf16> to vector<10x8x64xbf16>
    %64 = arith.maximumf %61, %63 : vector<10x8x64xbf16>
    %65 = tpu.iota {dimensions = array<i32: 0>} : vector<10x8x1xi32>
    %c8_i32_16 = arith.constant 8 : i32
    %66 = arith.muli %arg0, %c8_i32_16 : i32
    %c1_i32_17 = arith.constant 1 : i32
    %67 = arith.subi %66, %c1_i32_17 : i32
    %68 = vector.broadcast %67 : i32 to vector<10x8x1xi32>
    %69 = arith.addi %65, %68 : vector<10x8x1xi32>
    %c0_i32_18 = arith.constant 0 : i32
    %70 = vector.broadcast %c0_i32_18 : i32 to vector<10x8x1xi32>
    %71 = arith.cmpi sge, %69, %70 : vector<10x8x1xi32>
    %c8_i32_19 = arith.constant 8 : i32
    %72 = vector.broadcast %c8_i32_19 : i32 to vector<10x8x1xi32>
    %73 = arith.cmpi slt, %69, %72 : vector<10x8x1xi32>
    %74 = arith.andi %71, %73 : vector<10x8x1xi1>
    %cst_20 = arith.constant 0.000000e+00 : f32
    %75 = arith.truncf %cst_20 : f32 to bf16
    %76 = vector.shape_cast %74 : vector<10x8x1xi1> to vector<10x8x1xi1>
    %77 = vector.broadcast %76 : vector<10x8x1xi1> to vector<10x8x64xi1>
    %78 = vector.broadcast %75 : bf16 to vector<10x8x64xbf16>
    %79 = arith.select %77, %64, %78 : vector<10x8x64xi1>, vector<10x8x64xbf16>
    %cst_21 = arith.constant 0.000000e+00 : bf16
    %80 = vector.broadcast %cst_21 : bf16 to vector<10x1x64xbf16>
    %cst_22 = arith.constant 0.000000e+00 : bf16
    %81 = vector.broadcast %cst_22 : bf16 to vector<10x7x64xbf16>
    %82 = tpu.concatenate %80, %79, %81 in 1 : vector<10x1x64xbf16>, vector<10x8x64xbf16>, vector<10x7x64xbf16> -> vector<10x16x64xbf16>
    %cst_23 = arith.constant 0.000000e+00 : bf16
    %83 = vector.broadcast %cst_23 : bf16 to vector<1x16x64xbf16>
    %84 = tpu.concatenate %82, %83 in 0 : vector<10x16x64xbf16>, vector<1x16x64xbf16> -> vector<11x16x64xbf16>
    %85 = vector.shape_cast %84 : vector<11x16x64xbf16> to vector<176x64xbf16>
    %86 = vector.extract_strided_slice %85 {offsets = [0, 0], sizes = [128, 64], strides = [1, 1]} : vector<176x64xbf16> to vector<128x64xbf16>
    %87 = vector.extract_strided_slice %85 {offsets = [1, 0], sizes = [128, 64], strides = [1, 1]} : vector<176x64xbf16> to vector<128x64xbf16>
    %88 = vector.extract_strided_slice %85 {offsets = [2, 0], sizes = [128, 64], strides = [1, 1]} : vector<176x64xbf16> to vector<128x64xbf16>
    %89 = vector.extract_strided_slice %85 {offsets = [16, 0], sizes = [128, 64], strides = [1, 1]} : vector<176x64xbf16> to vector<128x64xbf16>
    %90 = vector.extract_strided_slice %85 {offsets = [17, 0], sizes = [128, 64], strides = [1, 1]} : vector<176x64xbf16> to vector<128x64xbf16>
    %91 = vector.extract_strided_slice %85 {offsets = [18, 0], sizes = [128, 64], strides = [1, 1]} : vector<176x64xbf16> to vector<128x64xbf16>
    %92 = vector.extract_strided_slice %85 {offsets = [32, 0], sizes = [128, 64], strides = [1, 1]} : vector<176x64xbf16> to vector<128x64xbf16>
    %93 = vector.extract_strided_slice %85 {offsets = [33, 0], sizes = [128, 64], strides = [1, 1]} : vector<176x64xbf16> to vector<128x64xbf16>
    %94 = vector.extract_strided_slice %85 {offsets = [34, 0], sizes = [128, 64], strides = [1, 1]} : vector<176x64xbf16> to vector<128x64xbf16>
    %95 = tpu.concatenate %86, %87, %88, %89, %90, %91, %92, %93, %94 in 1 : vector<128x64xbf16>, vector<128x64xbf16>, vector<128x64xbf16>, vector<128x64xbf16>, vector<128x64xbf16>, vector<128x64xbf16>, vector<128x64xbf16>, vector<128x64xbf16>, vector<128x64xbf16> -> vector<128x576xbf16>
    %c0_24 = arith.constant 0 : index
    %c0_25 = arith.constant 0 : index
    %96 = vector.load %arg7[%c0_24, %c0_25] : memref<576x128xbf16, #tpu.memory_space<vmem>>, vector<576x128xbf16>
    %cst_26 = arith.constant dense<0.000000e+00> : vector<128x128xf32>
    %97 = tpu.matmul %95, %96, %cst_26 {dimension_numbers = #tpu.dot_dimension_numbers<[1], [0], [0], [1], [0, 0, 1, 1], [], []>} : vector<128x576xbf16>, vector<576x128xbf16>, vector<128x128xf32> -> vector<128x128xf32>
    %c0_27 = arith.constant 0 : index
    %c0_28 = arith.constant 0 : index
    %98 = vector.load %arg8[%c0_27, %c0_28] : memref<1x128xf32, #tpu.memory_space<vmem>>, vector<1x128xf32>
    %99 = vector.broadcast %98 : vector<1x128xf32> to vector<128x128xf32>
    %100 = arith.addf %97, %99 : vector<128x128xf32>
    %101 = vector.shape_cast %100 : vector<128x128xf32> to vector<8x16x128xf32>
    %102 = vector.extract_strided_slice %101 {offsets = [0, 0, 0], sizes = [8, 8, 128], strides = [1, 1, 1]} : vector<8x16x128xf32> to vector<8x8x128xf32>
    %c0_29 = arith.constant 0 : index
    %c0_30 = arith.constant 0 : index
    %c0_31 = arith.constant 0 : index
    %c0_32 = arith.constant 0 : index
    %103 = vector.load %arg9[%c0_29, %c0_30, %c0_31, %c0_32] : memref<1x8x8x128xf32, #tpu.memory_space<vmem>>, vector<1x8x8x128xf32>
    %104 = vector.shape_cast %103 : vector<1x8x8x128xf32> to vector<8x8x128xf32>
    %105 = vector.shape_cast %102 : vector<8x8x128xf32> to vector<1x8x8x128xf32>
    tpu.vector_store %arg9[%c0_29, %c0_30, %c0_31, %c0_32], %105 {strides = array<i32>} : memref<1x8x8x128xf32, #tpu.memory_space<vmem>>, vector<1x8x8x128xf32>,
    return
  }
  func.func @transform_0(%arg0: i32, %arg1: i32) -> (i32, i32, i32, i32) {
    %c0_i32 = arith.constant 0 : i32
    %c0_i32_0 = arith.constant 0 : i32
    %c0_i32_1 = arith.constant 0 : i32
    return %arg1, %arg0, %c0_i32, %c0_i32_0 : i32, i32, i32, i32
  }
  func.func @transform_1(%arg0: i32, %arg1: i32) -> (i32, i32) {
    %c0_i32 = arith.constant 0 : i32
    %c0_i32_0 = arith.constant 0 : i32
    %c0_i32_1 = arith.constant 0 : i32
    return %c0_i32, %c0_i32_0 : i32, i32
  }
  func.func @transform_2(%arg0: i32, %arg1: i32) -> (i32, i32) {
    %c0_i32 = arith.constant 0 : i32
    %c0_i32_0 = arith.constant 0 : i32
    %c0_i32_1 = arith.constant 0 : i32
    return %c0_i32, %c0_i32_0 : i32, i32
  }
  func.func @transform_3(%arg0: i32, %arg1: i32) -> (i32, i32) {
    %c0_i32 = arith.constant 0 : i32
    %c0_i32_0 = arith.constant 0 : i32
    %c0_i32_1 = arith.constant 0 : i32
    return %c0_i32, %c0_i32_0 : i32, i32
  }
  func.func @transform_4(%arg0: i32, %arg1: i32) -> (i32, i32) {
    %c0_i32 = arith.constant 0 : i32
    %c0_i32_0 = arith.constant 0 : i32
    %c0_i32_1 = arith.constant 0 : i32
    return %c0_i32, %c0_i32_0 : i32, i32
  }
  func.func @transform_5(%arg0: i32, %arg1: i32) -> (i32, i32) {
    %c0_i32 = arith.constant 0 : i32
    %c0_i32_0 = arith.constant 0 : i32
    %c0_i32_1 = arith.constant 0 : i32
    return %c0_i32, %c0_i32_0 : i32, i32
  }
  func.func @transform_6(%arg0: i32, %arg1: i32) -> (i32, i32) {
    %c0_i32 = arith.constant 0 : i32
    %c0_i32_0 = arith.constant 0 : i32
    %c0_i32_1 = arith.constant 0 : i32
    return %c0_i32, %c0_i32_0 : i32, i32
  }
  func.func @transform_7(%arg0: i32, %arg1: i32) -> (i32, i32, i32, i32) {
    %c0_i32 = arith.constant 0 : i32
    %c0_i32_0 = arith.constant 0 : i32
    %c0_i32_1 = arith.constant 0 : i32
    return %arg1, %arg0, %c0_i32, %c0_i32_0 : i32, i32, i32, i32
  }
}

</mosaic_0001>

<llo_original>
// kernel: vgg19_slice1_forward.1
$region0: #{vgg19_slice1_forward.1}
  #allocation0 [shape = 'u32[]', space=smem, size = 0x4, offset = 0x4, fixed_abs, tag = 'smem constant byte address 0x4 - core index']
  #allocation1 [shape = 'u32[144,128]{1,0:T(1,128)}', space=vmem, size = 0x12000, scoped, tag = 'internal scratch']
  %s0 = inlined_call_operand.vmem [shape: bf16[2,1,552,27], index: 0, kind: input, shape index: {}]
  %s1 = inlined_call_operand.vmem [shape: bf16[27,64], index: 1, kind: input, shape index: {}]
  %s2 = inlined_call_operand.vmem [shape: f32[1,64], index: 2, kind: input, shape index: {}]
  %s3 = inlined_call_operand.vmem [shape: bf16[576,64], index: 3, kind: input, shape index: {}]
  %s4 = inlined_call_operand.vmem [shape: f32[1,64], index: 4, kind: input, shape index: {}]
  %s5 = inlined_call_operand.vmem [shape: bf16[576,128], index: 5, kind: input, shape index: {}]
  %s6 = inlined_call_operand.vmem [shape: f32[1,128], index: 6, kind: input, shape index: {}]
  %s7 = inlined_call_operand.hbm [shape: f32[2,8,8,128], index: 7, kind: output, shape index: {}]
  %s8 = sld [smem:[#allocation0]]
  $region61: #{vgg19_slice1_forward.1} parent=0
    _
  %s10 = ssub.s32 1, %s8
  %s11 = scalar_select 0, %s10, %s8
  $region1: #{vgg19_slice1_forward.1} parent=0
    #allocation2 [shape = 'u8[65536]{0}', space=vmem, size = 0x10000, scoped, tag = 'output window, operand 0']
    #allocation3 [shape = 's32[2]{0}', space=sflag, size = 0x8, scoped, tag = 'scoped memory for vgg19_slice1_forward.1']
    %12 = vsyncpa [#allocation3], 0
    %s13 = scalar_lea.sflag [#allocation3], 1
    %14 = vsyncpa %s13, 0
    loop: start=0, step=1, limit=4
    $region2: #{vgg19_slice1_forward.1} parent=1 // loop_pre_header
      _
    $region3: #{vgg19_slice1_forward.1} parent=1 // loop_header
      %s16 = sphi 0, %s20
      %p17 = scmp.ge.s32.totalorder %s16, 4
      %s23 = sphi 0, %s35
      %s24 = sphi 0, %s31
      %s25 = sphi 0, %s23
      %s26 = sphi 0, %s24
      %s27 = sphi 0, %s25
      %s28 = sphi 0, %s26
      %s40 = sphi 0, %s42
      %s43 = sphi 0, %s40
      %s44 = sphi 0, %s43
      %s60 = sphi 0, %s44
      %s64 = sphi 0, %s64
      %s66 = sphi 0, %s64
      %s67 = sphi 0, %s66
      %s81 = sphi 0, %s67
      %s85 = sphi 0, %s85
      %s87 = sphi 0, %s85
      %s88 = sphi 0, %s87
      %s102 = sphi 0, %s88
      %s106 = sphi 0, %s106
      %s108 = sphi 0, %s106
      %s109 = sphi 0, %s108
      %s123 = sphi 0, %s109
      %s127 = sphi 0, %s127
      %s129 = sphi 0, %s127
      %s130 = sphi 0, %s129
      %s144 = sphi 0, %s130
      %s148 = sphi 0, %s148
      %s150 = sphi 0, %s148
      %s151 = sphi 0, %s150
      %s165 = sphi 0, %s151
      %s169 = sphi 0, %s169
      %s171 = sphi 0, %s169
      %s172 = sphi 0, %s171
      %s186 = sphi 0, %s172
      %s194 = sphi 0, %s196
      %s197 = sphi 0, %s194
      %s198 = sphi 0, %s197
      %s214 = sphi 0, %s198
    $region4: #{vgg19_slice1_forward.1} parent=1 // loop_header_branch
      %19 = sbr.rel (%p17) target = $region8
    $region5: #{vgg19_slice1_forward.1} parent=1 // loop_body
      %s21 = ssub.s32 %s16, 1
      %s22 = ssub.s32 %s16, 2
      %s29 = sadd.s32 1, %s24
      %p30 = scmp.ge.s32.totalorder %s29, 2
      %s31 = scalar_select %p30, 0, %s29
      %s32 = sadd.s32 1, %s23
      %s33 = scalar_select %p30, %s32, %s23
      %p34 = scmp.ge.s32.totalorder %s33, 1
      %s35 = scalar_select %p34, 0, %s33
      %s36 = ssub.s32 %s24, %s31
      %s37 = ssub.s32 %s23, %s35
      %s38 = sor.u32 %s36, %s37
      %p39 = scmp.eq.s32.totalorder %s38, 0
      %s41 = sadd.s32 %s40, 1
      %s42 = scalar_select %p39, %s40, %s41
      %p45 = pneg %p39
      %p46 = scmp.eq.s32.totalorder %s16, 1
      %p47 = por %p45, %p46
      %p48 = scmp.ne.s32.totalorder %s40, %s43
      %p49 = scmp.eq.s32.totalorder %s16, 0
      %p50 = por %p48, %p49
      %p51 = scmp.ne.s32.totalorder %s40, %s43
      %p52 = scmp.eq.s32.totalorder %s21, 1
      %p53 = por %p51, %p52
      %p54 = scmp.ne.s32.totalorder %s43, %s44
      %p55 = scmp.eq.s32.totalorder %s21, 0
      %p56 = por %p54, %p55
      %p57 = scmp.ne.s32.totalorder %s43, %s44
      %p58 = scmp.eq.s32.totalorder %s22, 1
      %p59 = por %p57, %p58
      %p61 = scmp.ne.s32.totalorder %s44, %s60
      %p62 = scmp.eq.s32.totalorder %s22, 0
      %p63 = por %p61, %p62
      %s65 = sadd.s32 %s64, 1
      %p68 = scmp.eq.s32.totalorder %s16, 1
      %p69 = scmp.ne.s32.totalorder %s64, %s66
      %p70 = scmp.eq.s32.totalorder %s16, 0
      %p71 = por %p69, %p70
      %p72 = scmp.ne.s32.totalorder %s64, %s66
      %p73 = scmp.eq.s32.totalorder %s21, 1
      %p74 = por %p72, %p73
      %p75 = scmp.ne.s32.totalorder %s66, %s67
      %p76 = scmp.eq.s32.totalorder %s21, 0
      %p77 = por %p75, %p76
      %p78 = scmp.ne.s32.totalorder %s66, %s67
      %p79 = scmp.eq.s32.totalorder %s22, 1
      %p80 = por %p78, %p79
      %p82 = scmp.ne.s32.totalorder %s67, %s81
      %p83 = scmp.eq.s32.totalorder %s22, 0
      %p84 = por %p82, %p83
      %s86 = sadd.s32 %s85, 1
      %p89 = scmp.eq.s32.totalorder %s16, 1
      %p90 = scmp.ne.s32.totalorder %s85, %s87
      %p91 = scmp.eq.s32.totalorder %s16, 0
      %p92 = por %p90, %p91
      %p93 = scmp.ne.s32.totalorder %s85, %s87
      %p94 = scmp.eq.s32.totalorder %s21, 1
      %p95 = por %p93, %p94
      %p96 = scmp.ne.s32.totalorder %s87, %s88
      %p97 = scmp.eq.s32.totalorder %s21, 0
      %p98 = por %p96, %p97
      %p99 = scmp.ne.s32.totalorder %s87, %s88
      %p100 = scmp.eq.s32.totalorder %s22, 1
      %p101 = por %p99, %p100
      %p103 = scmp.ne.s32.totalorder %s88, %s102
      %p104 = scmp.eq.s32.totalorder %s22, 0
      %p105 = por %p103, %p104
      %s107 = sadd.s32 %s106, 1
      %p110 = scmp.eq.s32.totalorder %s16, 1
      %p111 = scmp.ne.s32.totalorder %s106, %s108
      %p112 = scmp.eq.s32.totalorder %s16, 0
      %p113 = por %p111, %p112
      %p114 = scmp.ne.s32.totalorder %s106, %s108
      %p115 = scmp.eq.s32.totalorder %s21, 1
      %p116 = por %p114, %p115
      %p117 = scmp.ne.s32.totalorder %s108, %s109
      %p118 = scmp.eq.s32.totalorder %s21, 0
      %p119 = por %p117, %p118
      %p120 = scmp.ne.s32.totalorder %s108, %s109
      %p121 = scmp.eq.s32.totalorder %s22, 1
      %p122 = por %p120, %p121
      %p124 = scmp.ne.s32.totalorder %s109, %s123
      %p125 = scmp.eq.s32.totalorder %s22, 0
      %p126 = por %p124, %p125
      %s128 = sadd.s32 %s127, 1
      %p131 = scmp.eq.s32.totalorder %s16, 1
      %p132 = scmp.ne.s32.totalorder %s127, %s129
      %p133 = scmp.eq.s32.totalorder %s16, 0
      %p134 = por %p132, %p133
      %p135 = scmp.ne.s32.totalorder %s127, %s129
      %p136 = scmp.eq.s32.totalorder %s21, 1
      %p137 = por %p135, %p136
      %p138 = scmp.ne.s32.totalorder %s129, %s130
      %p139 = scmp.eq.s32.totalorder %s21, 0
      %p140 = por %p138, %p139
      %p141 = scmp.ne.s32.totalorder %s129, %s130
      %p142 = scmp.eq.s32.totalorder %s22, 1
      %p143 = por %p141, %p142
      %p145 = scmp.ne.s32.totalorder %s130, %s144
      %p146 = scmp.eq.s32.totalorder %s22, 0
      %p147 = por %p145, %p146
      %s149 = sadd.s32 %s148, 1
      %p152 = scmp.eq.s32.totalorder %s16, 1
      %p153 = scmp.ne.s32.totalorder %s148, %s150
      %p154 = scmp.eq.s32.totalorder %s16, 0
      %p155 = por %p153, %p154
      %p156 = scmp.ne.s32.totalorder %s148, %s150
      %p157 = scmp.eq.s32.totalorder %s21, 1
      %p158 = por %p156, %p157
      %p159 = scmp.ne.s32.totalorder %s150, %s151
      %p160 = scmp.eq.s32.totalorder %s21, 0
      %p161 = por %p159, %p160
      %p162 = scmp.ne.s32.totalorder %s150, %s151
      %p163 = scmp.eq.s32.totalorder %s22, 1
      %p164 = por %p162, %p163
      %p166 = scmp.ne.s32.totalorder %s151, %s165
      %p167 = scmp.eq.s32.totalorder %s22, 0
      %p168 = por %p166, %p167
      %s170 = sadd.s32 %s169, 1
      %p173 = scmp.eq.s32.totalorder %s16, 1
      %p174 = scmp.ne.s32.totalorder %s169, %s171
      %p175 = scmp.eq.s32.totalorder %s16, 0
      %p176 = por %p174, %p175
      %p177 = scmp.ne.s32.totalorder %s169, %s171
      %p178 = scmp.eq.s32.totalorder %s21, 1
      %p179 = por %p177, %p178
      %p180 = scmp.ne.s32.totalorder %s171, %s172
      %p181 = scmp.eq.s32.totalorder %s21, 0
      %p182 = por %p180, %p181
      %p183 = scmp.ne.s32.totalorder %s171, %s172
      %p184 = scmp.eq.s32.totalorder %s22, 1
      %p185 = por %p183, %p184
      %p187 = scmp.ne.s32.totalorder %s172, %s186
      %p188 = scmp.eq.s32.totalorder %s22, 0
      %p189 = por %p187, %p188
      %s190 = ssub.s32 %s24, %s31
      %s191 = ssub.s32 %s23, %s35
      %s192 = sor.u32 %s190, %s191
      %p193 = scmp.eq.s32.totalorder %s192, 0
      %s195 = sadd.s32 %s194, 1
      %s196 = scalar_select %p193, %s194, %s195
      %p199 = pneg %p193
      %p200 = scmp.eq.s32.totalorder %s16, 1
      %p201 = por %p199, %p200
      %p202 = scmp.ne.s32.totalorder %s194, %s197
      %p203 = scmp.eq.s32.totalorder %s16, 0
      %p204 = por %p202, %p203
      %p205 = scmp.ne.s32.totalorder %s194, %s197
      %p206 = scmp.eq.s32.totalorder %s21, 1
      %p207 = por %p205, %p206
      %p208 = scmp.ne.s32.totalorder %s197, %s198
      %p209 = scmp.eq.s32.totalorder %s21, 0
      %p210 = por %p208, %p209
      %p211 = scmp.ne.s32.totalorder %s197, %s198
      %p212 = scmp.eq.s32.totalorder %s22, 1
      %p213 = por %p211, %p212
      %p215 = scmp.ne.s32.totalorder %s198, %s214
      %p216 = scmp.eq.s32.totalorder %s22, 0
      %p217 = por %p215, %p216
      %p218 = scmp.le.s32.totalorder 1, %s16
      %p219 = scmp.lt.s32.totalorder %s16, 3
      %p220 = pnand %p218, %p219
      %p221 = pneg %p220
      // Predicated region
      $region9: #{vgg19_slice1_forward.1} parent=5 // pred_check
        _
      $region10: #{vgg19_slice1_forward.1} parent=5 // pred_check_branch
        %223 = sbr.rel (%p220) target = $region12
      $region11: #{vgg19_slice1_forward.1} parent=5 // pred_region
        %s224 = ssub.s32 %s16, 1
        // Predicated region
        $region13: #{vgg19_slice1_forward.1} parent=11 // pred_check
          %p225 = pneg %p77
        $region14: #{vgg19_slice1_forward.1} parent=11 // pred_check_branch
          %227 = sbr.rel (%p225) target = $region16
        $region15: #{vgg19_slice1_forward.1} parent=11 // pred_region
          _
        $region16: #{vgg19_slice1_forward.1} parent=11 // pred_fallthru
          _
        // Predicated region
        $region17: #{vgg19_slice1_forward.1} parent=11 // pred_check
          %p228 = pneg %p98
        $region18: #{vgg19_slice1_forward.1} parent=11 // pred_check_branch
          %230 = sbr.rel (%p228) target = $region20
        $region19: #{vgg19_slice1_forward.1} parent=11 // pred_region
          _
        $region20: #{vgg19_slice1_forward.1} parent=11 // pred_fallthru
          _
        // Predicated region
        $region21: #{vgg19_slice1_forward.1} parent=11 // pred_check
          %p231 = pneg %p119
        $region22: #{vgg19_slice1_forward.1} parent=11 // pred_check_branch
          %233 = sbr.rel (%p231) target = $region24
        $region23: #{vgg19_slice1_forward.1} parent=11 // pred_region
          _
        $region24: #{vgg19_slice1_forward.1} parent=11 // pred_fallthru
          _
        // Predicated region
        $region25: #{vgg19_slice1_forward.1} parent=11 // pred_check
          %p234 = pneg %p140
        $region26: #{vgg19_slice1_forward.1} parent=11 // pred_check_branch
          %236 = sbr.rel (%p234) target = $region28
        $region27: #{vgg19_slice1_forward.1} parent=11 // pred_region
          _
        $region28: #{vgg19_slice1_forward.1} parent=11 // pred_fallthru
          _
        // Predicated region
        $region29: #{vgg19_slice1_forward.1} parent=11 // pred_check
          %p237 = pneg %p161
        $region30: #{vgg19_slice1_forward.1} parent=11 // pred_check_branch
          %239 = sbr.rel (%p237) target = $region32
        $region31: #{vgg19_slice1_forward.1} parent=11 // pred_region
          _
        $region32: #{vgg19_slice1_forward.1} parent=11 // pred_fallthru
          _
        // Predicated region
        $region33: #{vgg19_slice1_forward.1} parent=11 // pred_check
          %p240 = pneg %p182
        $region34: #{vgg19_slice1_forward.1} parent=11 // pred_check_branch
          %242 = sbr.rel (%p240) target = $region36
        $region35: #{vgg19_slice1_forward.1} parent=11 // pred_region
          _
        $region36: #{vgg19_slice1_forward.1} parent=11 // pred_fallthru
          _
      $region12: #{vgg19_slice1_forward.1} parent=5 // pred_fallthru
        _
      %p243 = scmp.lt.s32.totalorder %s16, 2
      // Predicated region
      $region37: #{vgg19_slice1_forward.1} parent=5 // pred_check
        %p244 = pneg %p243
      $region38: #{vgg19_slice1_forward.1} parent=5 // pred_check_branch
        %246 = sbr.rel (%p244) target = $region40
      $region39: #{vgg19_slice1_forward.1} parent=5 // pred_region
        // Predicated region
        $region41: #{vgg19_slice1_forward.1} parent=39 // pred_check
          %p247 = pneg %p50
        $region42: #{vgg19_slice1_forward.1} parent=39 // pred_check_branch
          %249 = sbr.rel (%p247) target = $region44
        $region43: #{vgg19_slice1_forward.1} parent=39 // pred_region
          %p250 = scmp.lt.s32.totalorder %s24, 1
          %s251 = scalar_select %p250, %s24, 1
          %p252 = scmp.lt.s32.totalorder %s23, 0
          %s253 = scalar_select %p252, %s23, 0
          %s254 = smul.addr %s253, 69
          %s255 = smul.addr %s251, 69
          %s256 = sadd.s32 %s254, %s255
          %s257 = smul.addr %s256, 4
          %s258 = scalar_lea.vmem %s0, %s257
        $region44: #{vgg19_slice1_forward.1} parent=39 // pred_fallthru
          _
      $region40: #{vgg19_slice1_forward.1} parent=5 // pred_fallthru
        _
      %p259 = scmp.le.s32.totalorder 1, %s16
      %p260 = scmp.lt.s32.totalorder %s16, 3
      %p261 = pnand %p259, %p260
      %p262 = pneg %p261
      // Predicated region
      $region45: #{vgg19_slice1_forward.1} parent=5 // pred_check
        _
      $region46: #{vgg19_slice1_forward.1} parent=5 // pred_check_branch
        %264 = sbr.rel (%p261) target = $region48
      $region47: #{vgg19_slice1_forward.1} parent=5 // pred_region
        %s265 = ssub.s32 %s16, 1
        %p266 = scmp.lt.s32.totalorder %s26, 1
        %s267 = scalar_select %p266, %s26, 1
        %p268 = scmp.lt.s32.totalorder %s25, 0
        %s269 = scalar_select %p268, %s25, 0
        %s270 = smul.addr %s269, 69
        %s271 = smul.addr %s267, 69
        %s272 = sadd.s32 %s270, %s271
        %s273 = smul.addr %s272, 4
        %s274 = scalar_lea.vmem %s0, %s273
        %p275 = pneg %p56
        %p276 = pneg %p53
        %p277 = pneg %p77
        %p278 = pneg %p74
        %p279 = pneg %p98
        %p280 = pneg %p95
        %p281 = pneg %p119
        %p282 = pneg %p116
        %p283 = pneg %p140
        %p284 = pneg %p137
        %p285 = pneg %p161
        %p286 = pneg %p158
        %p287 = pneg %p182
        %p288 = pneg %p179
        %p289 = pneg %p210
        %p290 = pneg %p207
        %s291 = sand.u32 %s197, 1
        %s292 = scalar_lea.sflag [#allocation3], %s291
        %s293 = sand.u32 %s197, 1
        %s294 = smul.addr %s293, 64
        %s295 = scalar_lea.vmem [#allocation2], %s294
        %p296 = scmp.lt.s32.totalorder %s26, 1
        %s297 = scalar_select %p296, %s26, 1
        %p298 = scmp.lt.s32.totalorder %s25, 0
        %s299 = scalar_select %p298, %s25, 0
        %s300 = smul.addr %s299, 69
        %s301 = smul.addr %s297, 69
        %s302 = sadd.s32 %s300, %s301
        %s303 = smul.addr %s302, 4
        %s304 = scalar_lea.vmem %s0, %s303
        %s305 = smul.u32 8, %s25
        %s308 = smul.u32 %s25, 16
        %s309 = ssub.s32 %s308, 3
        %v310 = vld [vmem:[%s304] sm:$0xf]
        %v311 = vld [vmem:[%s304 + $0x4] sm:$0xf]
        %v312 = vld [vmem:[%s304 + $0x8] sm:$0xf]
        %v313 = vld [vmem:[%s304 + $0xc] sm:$0xf]
        %v314 = vld [vmem:[%s304 + $0x10] sm:$0xf]
        %v315 = vld [vmem:[%s304 + $0x14] sm:$0xf]
        %v316 = vld [vmem:[%s304 + $0x18] sm:$0xf]
        %v317 = vld [vmem:[%s304 + $0x1c] sm:$0xf]
        %v318 = vld [vmem:[%s304 + $0x20] sm:$0xf]
        %v319 = vld [vmem:[%s304 + $0x24] sm:$0xf]
        %v320 = vld [vmem:[%s304 + $0x28] sm:$0xf]
        %v321 = vld [vmem:[%s304 + $0x2c] sm:$0xf]
        %v322 = vld [vmem:[%s304 + $0x30] sm:$0xf]
        %v323 = vld [vmem:[%s304 + $0x34] sm:$0xf]
        %v324 = vld [vmem:[%s304 + $0x38] sm:$0xf]
        %v325 = vld [vmem:[%s304 + $0x3c] sm:$0xf]
        %v326 = vld [vmem:[%s304 + $0x40] sm:$0xf]
        %v327 = vld [vmem:[%s304 + $0x44] sm:$0xf]
        %v328 = vld [vmem:[%s304 + $0x48] sm:$0xf]
        %v329 = vld [vmem:[%s304 + $0x4c] sm:$0xf]
        %v330 = vld [vmem:[%s304 + $0x50] sm:$0xf]
        %v331 = vld [vmem:[%s304 + $0x54] sm:$0xf]
        %v332 = vld [vmem:[%s304 + $0x58] sm:$0xf]
        %v333 = vld [vmem:[%s304 + $0x5c] sm:$0xf]
        %v334 = vld [vmem:[%s304 + $0x60] sm:$0xf]
        %v335 = vld [vmem:[%s304 + $0x64] sm:$0xf]
        %v336 = vld [vmem:[%s304 + $0x68] sm:$0xf]
        %v337 = vld [vmem:[%s304 + $0x6c] sm:$0xf]
        %v338 = vld [vmem:[%s304 + $0x70] sm:$0xf]
        %v339 = vld [vmem:[%s304 + $0x74] sm:$0xf]
        %v340 = vld [vmem:[%s304 + $0x78] sm:$0xf]
        %v341 = vld [vmem:[%s304 + $0x7c] sm:$0xf]
        %v342 = vld [vmem:[%s304 + $0x80] sm:$0xf]
        %v343 = vld [vmem:[%s304 + $0x84] sm:$0xf]
        %v344 = vld [vmem:[%s304 + $0x88] sm:$0xf]
        %v345 = vld [vmem:[%s304 + $0x8c] sm:$0xf]
        %v346 = vld [vmem:[%s304 + $0x90] sm:$0xf]
        %v347 = vld [vmem:[%s304 + $0x94] sm:$0xf]
        %v348 = vld [vmem:[%s304 + $0x98] sm:$0xf]
        %v349 = vld [vmem:[%s304 + $0x9c] sm:$0xf]
        %v350 = vld [vmem:[%s304 + $0xa0] sm:$0xf]
        %v351 = vld [vmem:[%s304 + $0xa4] sm:$0xf]
        %v352 = vld [vmem:[%s304 + $0xa8] sm:$0xf]
        %v353 = vld [vmem:[%s304 + $0xac] sm:$0xf]
        %v354 = vld [vmem:[%s304 + $0xb0] sm:$0xf]
        %v355 = vld [vmem:[%s304 + $0xb4] sm:$0xf]
        %v356 = vld [vmem:[%s304 + $0xb8] sm:$0xf]
        %v357 = vld [vmem:[%s304 + $0xbc] sm:$0xf]
        %v358 = vld [vmem:[%s304 + $0xc0] sm:$0xf]
        %v359 = vld [vmem:[%s304 + $0xc4] sm:$0xf]
        %v360 = vld [vmem:[%s304 + $0xc8] sm:$0xf]
        %v361 = vld [vmem:[%s304 + $0xcc] sm:$0xf]
        %v362 = vld [vmem:[%s304 + $0xd0] sm:$0xf]
        %v363 = vld [vmem:[%s304 + $0xd4] sm:$0xf]
        %v364 = vld [vmem:[%s304 + $0xd8] sm:$0xf]
        %v365 = vld [vmem:[%s304 + $0xdc] sm:$0xf]
        %v366 = vld [vmem:[%s304 + $0xe0] sm:$0xf]
        %v367 = vld [vmem:[%s304 + $0xe4] sm:$0xf]
        %v368 = vld [vmem:[%s304 + $0xe8] sm:$0xf]
        %v369 = vld [vmem:[%s304 + $0xec] sm:$0xf]
        %v370 = vld [vmem:[%s304 + $0xf0] sm:$0xf]
        %v371 = vld [vmem:[%s304 + $0xf4] sm:$0xf]
        %v372 = vld [vmem:[%s304 + $0xf8] sm:$0xf]
        %v373 = vld [vmem:[%s304 + $0xfc] sm:$0xf]
        %v374 = vld [vmem:[%s304 + $0x100] sm:$0xf]
        %v375 = vld [vmem:[%s304 + $0x104] sm:$0xf]
        %v376 = vld [vmem:[%s304 + $0x108] sm:$0xf]
        %v377 = vld [vmem:[%s304 + $0x10c] sm:$0xf]
        %v378 = vld [vmem:[%s304 + $0x110] sm:$0xf]
        %v379 = vld [vmem:[%s1] sm:$0xf]
        %v380 = vld [vmem:[%s1 + $0x4] sm:$0xf]
        %v381 = vld [vmem:[%s1 + $0x8] sm:$0xf]
        %v382 = vld [vmem:[%s1 + $0xc] sm:$0x3]
        %v383 = vld [vmem:[%s2] sm:$0x1]
        %v385 = vlaneseq
        %v386 = vshrl.u32 %v385, 7
        %v387 = vsub.s32 0, %v386
        %v388 = vrot.slane %v383, %v387
        %v459 = vunpack.c.l.b16 %v310
        %v460 = vunpack.c.l.b16 %v311
        %v461 = vunpack.c.l.b16 %v312
        %v462 = vunpack.c.l.b16 %v313
        %v463 = vunpack.c.l.b16 %v314
        %v464 = vunpack.c.l.b16 %v315
        %v465 = vunpack.c.l.b16 %v316
        %v466 = vunpack.c.l.b16 %v317
        %v467 = vunpack.c.l.b16 %v318
        %v468 = vunpack.c.l.b16 %v319
        %v469 = vunpack.c.l.b16 %v320
        %v470 = vunpack.c.l.b16 %v321
        %v471 = vunpack.c.l.b16 %v322
        %v472 = vunpack.c.l.b16 %v323
        %v473 = vunpack.c.l.b16 %v324
        %v474 = vunpack.c.l.b16 %v325
        %v475 = vunpack.c.l.b16 %v326
        %v476 = vunpack.c.l.b16 %v327
        %v477 = vunpack.c.l.b16 %v328
        %v478 = vunpack.c.l.b16 %v329
        %v479 = vunpack.c.l.b16 %v330
        %v480 = vunpack.c.l.b16 %v331
        %v481 = vunpack.c.l.b16 %v332
        %v482 = vunpack.c.l.b16 %v333
        %v483 = vunpack.c.l.b16 %v334
        %v484 = vunpack.c.l.b16 %v335
        %v485 = vunpack.c.l.b16 %v336
        %v486 = vunpack.c.l.b16 %v337
        %v487 = vunpack.c.l.b16 %v338
        %v488 = vunpack.c.l.b16 %v339
        %v489 = vunpack.c.l.b16 %v340
        %v490 = vunpack.c.l.b16 %v341
        %v491 = vunpack.c.l.b16 %v342
        %v492 = vunpack.c.l.b16 %v343
        %v493 = vunpack.c.l.b16 %v344
        %v494 = vunpack.c.l.b16 %v345
        %v495 = vunpack.c.l.b16 %v346
        %v496 = vunpack.c.l.b16 %v347
        %v497 = vunpack.c.l.b16 %v348
        %v498 = vunpack.c.l.b16 %v349
        %v499 = vunpack.c.l.b16 %v350
        %v500 = vunpack.c.l.b16 %v351
        %v501 = vunpack.c.l.b16 %v352
        %v502 = vunpack.c.l.b16 %v353
        %v503 = vunpack.c.l.b16 %v354
        %v504 = vunpack.c.l.b16 %v355
        %v505 = vunpack.c.l.b16 %v356
        %v506 = vunpack.c.l.b16 %v357
        %v507 = vunpack.c.l.b16 %v358
        %v508 = vunpack.c.l.b16 %v359
        %v509 = vunpack.c.l.b16 %v360
        %v510 = vunpack.c.l.b16 %v361
        %v511 = vunpack.c.l.b16 %v362
        %v512 = vunpack.c.l.b16 %v363
        %v513 = vunpack.c.l.b16 %v364
        %v514 = vunpack.c.l.b16 %v365
        %v515 = vunpack.c.l.b16 %v366
        %v516 = vunpack.c.l.b16 %v367
        %v517 = vunpack.c.l.b16 %v368
        %v518 = vunpack.c.l.b16 %v369
        %v519 = vunpack.c.l.b16 %v370
        %v520 = vunpack.c.l.b16 %v371
        %v521 = vunpack.c.l.b16 %v372
        %v522 = vunpack.c.l.b16 %v373
        %v523 = vunpack.c.l.b16 %v374
        %v524 = vunpack.c.l.b16 %v375
        %v525 = vunpack.c.l.b16 %v376
        %v526 = vunpack.c.l.b16 %v377
        %v527 = vunpack.c.l.b16 %v378
        %v528 = vpack.c.b16 %v460, %v459
        %v529 = vpack.c.b16 %v462, %v461
        %v530 = vpack.c.b16 %v464, %v463
        %v531 = vpack.c.b16 %v466, %v465
        %v532 = vpack.c.b16 %v468, %v467
        %v533 = vpack.c.b16 %v470, %v469
        %v534 = vpack.c.b16 %v472, %v471
        %v535 = vpack.c.b16 %v474, %v473
        %v536 = vpack.c.b16 %v476, %v475
        %v537 = vpack.c.b16 %v478, %v477
        %v538 = vpack.c.b16 %v480, %v479
        %v539 = vpack.c.b16 %v482, %v481
        %v540 = vpack.c.b16 %v484, %v483
        %v541 = vpack.c.b16 %v486, %v485
        %v542 = vpack.c.b16 %v488, %v487
        %v543 = vpack.c.b16 %v490, %v489
        %v544 = vpack.c.b16 %v492, %v491
        %v545 = vpack.c.b16 %v494, %v493
        %v546 = vpack.c.b16 %v496, %v495
        %v547 = vpack.c.b16 %v498, %v497
        %v548 = vpack.c.b16 %v500, %v499
        %v549 = vpack.c.b16 %v502, %v501
        %v550 = vpack.c.b16 %v504, %v503
        %v551 = vpack.c.b16 %v506, %v505
        %v552 = vpack.c.b16 %v508, %v507
        %v553 = vpack.c.b16 %v510, %v509
        %v554 = vpack.c.b16 %v512, %v511
        %v555 = vpack.c.b16 %v514, %v513
        %v556 = vpack.c.b16 %v516, %v515
        %v557 = vpack.c.b16 %v518, %v517
        %v558 = vpack.c.b16 %v520, %v519
        %v559 = vpack.c.b16 %v522, %v521
        %v560 = vpack.c.b16 %v524, %v523
        %v561 = vpack.c.b16 %v526, %v525
        %v562 = vpack.c.b16 %v527, %v527
        %v567 = vunpack.c.l.b16 %v379
        %v568 = vunpack.c.l.b16 %v380
        %v569 = vunpack.c.l.b16 %v381
        %v570 = vunpack.c.l.b16 %v382
        %v571 = vpack.c.b16 %v568, %v567
        %v572 = vpack.c.b16 %v570, %v569
        %vm574 = vcmask 220160
        %v576 = vsel %vm574, %v528, 0
        %v579 = vsel %vm574, %v529, 0
        %v582 = vsel %vm574, %v530, 0
        %v585 = vsel %vm574, %v531, 0
        %v588 = vsel %vm574, %v532, 0
        %v591 = vsel %vm574, %v533, 0
        %v594 = vsel %vm574, %v534, 0
        %v597 = vsel %vm574, %v535, 0
        %v600 = vsel %vm574, %v536, 0
        %v603 = vsel %vm574, %v537, 0
        %v606 = vsel %vm574, %v538, 0
        %v609 = vsel %vm574, %v539, 0
        %v612 = vsel %vm574, %v540, 0
        %v615 = vsel %vm574, %v541, 0
        %v618 = vsel %vm574, %v542, 0
        %v621 = vsel %vm574, %v543, 0
        %v624 = vsel %vm574, %v544, 0
        %v627 = vsel %vm574, %v545, 0
        %v630 = vsel %vm574, %v546, 0
        %v633 = vsel %vm574, %v547, 0
        %v636 = vsel %vm574, %v548, 0
        %v639 = vsel %vm574, %v549, 0
        %v642 = vsel %vm574, %v550, 0
        %v645 = vsel %vm574, %v551, 0
        %v648 = vsel %vm574, %v552, 0
        %v651 = vsel %vm574, %v553, 0
        %v654 = vsel %vm574, %v554, 0
        %v657 = vsel %vm574, %v555, 0
        %v660 = vsel %vm574, %v556, 0
        %v663 = vsel %vm574, %v557, 0
        %v666 = vsel %vm574, %v558, 0
        %v669 = vsel %vm574, %v559, 0
        %v672 = vsel %vm574, %v560, 0
        %v675 = vsel %vm574, %v561, 0
        %v678 = vsel %vm574, %v562, 0
        %vm680 = vcmask 1044480
        %vm681 = vcmask 1045504
        %v682 = vsel %vm680, 4294967295, 65535
        %v683 = vsel %vm681, %v682, 0
        %v685 = vand.u32 %v572, %v683
        %687 = vmatprep.subr.bf16.mxu0 0
        %688 = vmatpush1.bf16.msra.mxu0 %v571
        %689 = vmatprep.subr.bf16.mxu0 0
        %690 = vmatpush1.bf16.msra.mxu0 %v685
        %691 = vmatprep.subr.bf16.mxu0 0
        %692 = vmatpush1.bf16.msra.mxu0 0
        %693 = vmatprep.subr.bf16.mxu0 0
        %694 = vmatpush1.bf16.msra.mxu0 0
        %695 = vmatprep.subr.bf16.mxu0 0
        %696 = vmatpush1.bf16.msra.mxu0 0
        %697 = vmatprep.subr.bf16.mxu0 0
        %698 = vmatpush1.bf16.msra.mxu0 0
        %699 = vmatprep.subr.bf16.mxu0 0
        %700 = vmatpush1.bf16.msra.mxu0 0
        %701 = vmatprep.subr.bf16.mxu0 0
        %702 = vmatpush1.bf16.msra.mxu0 0
        %703 = vmatprep.subr.bf16.mxu0 0
        %704 = vmatpush1.bf16.msra.mxu0 0
        %705 = vmatprep.subr.bf16.mxu0 0
        %706 = vmatpush1.bf16.msra.mxu0 0
        %707 = vmatprep.subr.bf16.mxu0 0
        %708 = vmatpush1.bf16.msra.mxu0 0
        %709 = vmatprep.subr.bf16.mxu0 0
        %710 = vmatpush1.bf16.msra.mxu0 0
        %711 = vmatprep.subr.bf16.mxu0 0
        %712 = vmatpush1.bf16.msra.mxu0 0
        %713 = vmatprep.subr.bf16.mxu0 0
        %714 = vmatpush1.bf16.msra.mxu0 0
        %715 = vmatprep.subr.bf16.mxu0 0
        %716 = vmatpush1.bf16.msra.mxu0 0
        %717 = vmatprep.subr.bf16.mxu0 0
        %718 = vmatpush1.bf16.msra.mxu0 0
        %719 = vmatprep.mubr.bf16.mxu0 0
        %720 = vmatmul.mubr.bf16.gmra.mrb[0].mxu0 %v576
        %v721 = vpop.f32.mrb[0].mxu0
        %v722 = vadd.f32 %v388, %v721
        %v723 = vpop.f32.mrb[0].mxu0
        %v724 = vpop.f32.mrb[0].mxu0
        %v725 = vadd.f32 %v388, %v724
        %v726 = vpop.f32.mrb[0].mxu0
        %727 = vmatprep.mubr.bf16.mxu0 0
        %728 = vmatmul.mubr.bf16.gmra.mrb[0].mxu0 %v579
        %v729 = vpop.f32.mrb[0].mxu0
        %v730 = vadd.f32 %v388, %v729
        %v731 = vpop.f32.mrb[0].mxu0
        %v732 = vpop.f32.mrb[0].mxu0
        %v733 = vadd.f32 %v388, %v732
        %v734 = vpop.f32.mrb[0].mxu0
        %735 = vmatprep.mubr.bf16.mxu0 0
        %736 = vmatmul.mubr.bf16.gmra.mrb[0].mxu0 %v582
        %v737 = vpop.f32.mrb[0].mxu0
        %v738 = vadd.f32 %v388, %v737
        %v739 = vpop.f32.mrb[0].mxu0
        %v740 = vpop.f32.mrb[0].mxu0
        %v741 = vadd.f32 %v388, %v740
        %v742 = vpop.f32.mrb[0].mxu0
        %743 = vmatprep.mubr.bf16.mxu0 0
        %744 = vmatmul.mubr.bf16.gmra.mrb[0].mxu0 %v585
        %v745 = vpop.f32.mrb[0].mxu0
        %v746 = vadd.f32 %v388, %v745
        %v747 = vpop.f32.mrb[0].mxu0
        %v748 = vpop.f32.mrb[0].mxu0
        %v749 = vadd.f32 %v388, %v748
        %v750 = vpop.f32.mrb[0].mxu0
        %751 = vmatprep.mubr.bf16.mxu0 0
        %752 = vmatmul.mubr.bf16.gmra.mrb[0].mxu0 %v588
        %v753 = vpop.f32.mrb[0].mxu0
        %v754 = vadd.f32 %v388, %v753
        %v755 = vpop.f32.mrb[0].mxu0
        %v756 = vpop.f32.mrb[0].mxu0
        %v757 = vadd.f32 %v388, %v756
        %v758 = vpop.f32.mrb[0].mxu0
        %759 = vmatprep.mubr.bf16.mxu0 0
        %760 = vmatmul.mubr.bf16.gmra.mrb[0].mxu0 %v591
        %v761 = vpop.f32.mrb[0].mxu0
        %v762 = vadd.f32 %v388, %v761
        %v763 = vpop.f32.mrb[0].mxu0
        %v764 = vpop.f32.mrb[0].mxu0
        %v765 = vadd.f32 %v388, %v764
        %v766 = vpop.f32.mrb[0].mxu0
        %767 = vmatprep.mubr.bf16.mxu0 0
        %768 = vmatmul.mubr.bf16.gmra.mrb[0].mxu0 %v594
        %v769 = vpop.f32.mrb[0].mxu0
        %v770 = vadd.f32 %v388, %v769
        %v771 = vpop.f32.mrb[0].mxu0
        %v772 = vpop.f32.mrb[0].mxu0
        %v773 = vadd.f32 %v388, %v772
        %v774 = vpop.f32.mrb[0].mxu0
        %775 = vmatprep.mubr.bf16.mxu0 0
        %776 = vmatmul.mubr.bf16.gmra.mrb[0].mxu0 %v597
        %v777 = vpop.f32.mrb[0].mxu0
        %v778 = vadd.f32 %v388, %v777
        %v779 = vpop.f32.mrb[0].mxu0
        %v780 = vpop.f32.mrb[0].mxu0
        %v781 = vadd.f32 %v388, %v780
        %v782 = vpop.f32.mrb[0].mxu0
        %783 = vmatprep.mubr.bf16.mxu0 0
        %784 = vmatmul.mubr.bf16.gmra.mrb[0].mxu0 %v600
        %v785 = vpop.f32.mrb[0].mxu0
        %v786 = vadd.f32 %v388, %v785
        %v787 = vpop.f32.mrb[0].mxu0
        %v788 = vpop.f32.mrb[0].mxu0
        %v789 = vadd.f32 %v388, %v788
        %v790 = vpop.f32.mrb[0].mxu0
        %791 = vmatprep.mubr.bf16.mxu0 0
        %792 = vmatmul.mubr.bf16.gmra.mrb[0].mxu0 %v603
        %v793 = vpop.f32.mrb[0].mxu0
        %v794 = vadd.f32 %v388, %v793
        %v795 = vpop.f32.mrb[0].mxu0
        %v796 = vpop.f32.mrb[0].mxu0
        %v797 = vadd.f32 %v388, %v796
        %v798 = vpop.f32.mrb[0].mxu0
        %799 = vmatprep.mubr.bf16.mxu0 0
        %800 = vmatmul.mubr.bf16.gmra.mrb[0].mxu0 %v606
        %v801 = vpop.f32.mrb[0].mxu0
        %v802 = vadd.f32 %v388, %v801
        %v803 = vpop.f32.mrb[0].mxu0
        %v804 = vpop.f32.mrb[0].mxu0
        %v805 = vadd.f32 %v388, %v804
        %v806 = vpop.f32.mrb[0].mxu0
        %807 = vmatprep.mubr.bf16.mxu0 0
        %808 = vmatmul.mubr.bf16.gmra.mrb[0].mxu0 %v609
        %v809 = vpop.f32.mrb[0].mxu0
        %v810 = vadd.f32 %v388, %v809
        %v811 = vpop.f32.mrb[0].mxu0
        %v812 = vpop.f32.mrb[0].mxu0
        %v813 = vadd.f32 %v388, %v812
        %v814 = vpop.f32.mrb[0].mxu0
        %815 = vmatprep.mubr.bf16.mxu0 0
        %816 = vmatmul.mubr.bf16.gmra.mrb[0].mxu0 %v612
        %v817 = vpop.f32.mrb[0].mxu0
        %v818 = vadd.f32 %v388, %v817
        %v819 = vpop.f32.mrb[0].mxu0
        %v820 = vpop.f32.mrb[0].mxu0
        %v821 = vadd.f32 %v388, %v820
        %v822 = vpop.f32.mrb[0].mxu0
        %823 = vmatprep.mubr.bf16.mxu0 0
        %824 = vmatmul.mubr.bf16.gmra.mrb[0].mxu0 %v615
        %v825 = vpop.f32.mrb[0].mxu0
        %v826 = vadd.f32 %v388, %v825
        %v827 = vpop.f32.mrb[0].mxu0
        %v828 = vpop.f32.mrb[0].mxu0
        %v829 = vadd.f32 %v388, %v828
        %v830 = vpop.f32.mrb[0].mxu0
        %831 = vmatprep.mubr.bf16.mxu0 0
        %832 = vmatmul.mubr.bf16.gmra.mrb[0].mxu0 %v618
        %v833 = vpop.f32.mrb[0].mxu0
        %v834 = vadd.f32 %v388, %v833
        %v835 = vpop.f32.mrb[0].mxu0
        %v836 = vpop.f32.mrb[0].mxu0
        %v837 = vadd.f32 %v388, %v836
        %v838 = vpop.f32.mrb[0].mxu0
        %839 = vmatprep.mubr.bf16.mxu0 0
        %840 = vmatmul.mubr.bf16.gmra.mrb[0].mxu0 %v621
        %v841 = vpop.f32.mrb[0].mxu0
        %v842 = vadd.f32 %v388, %v841
        %v843 = vpop.f32.mrb[0].mxu0
        %v844 = vpop.f32.mrb[0].mxu0
        %v845 = vadd.f32 %v388, %v844
        %v846 = vpop.f32.mrb[0].mxu0
        %847 = vmatprep.mubr.bf16.mxu0 0
        %848 = vmatmul.mubr.bf16.gmra.mrb[0].mxu0 %v624
        %v849 = vpop.f32.mrb[0].mxu0
        %v850 = vadd.f32 %v388, %v849
        %v851 = vpop.f32.mrb[0].mxu0
        %v852 = vpop.f32.mrb[0].mxu0
        %v853 = vadd.f32 %v388, %v852
        %v854 = vpop.f32.mrb[0].mxu0
        %855 = vmatprep.mubr.bf16.mxu0 0
        %856 = vmatmul.mubr.bf16.gmra.mrb[0].mxu0 %v627
        %v857 = vpop.f32.mrb[0].mxu0
        %v858 = vadd.f32 %v388, %v857
        %v859 = vpop.f32.mrb[0].mxu0
        %v860 = vpop.f32.mrb[0].mxu0
        %v861 = vadd.f32 %v388, %v860
        %v862 = vpop.f32.mrb[0].mxu0
        %863 = vmatprep.mubr.bf16.mxu0 0
        %864 = vmatmul.mubr.bf16.gmra.mrb[0].mxu0 %v630
        %v865 = vpop.f32.mrb[0].mxu0
        %v866 = vadd.f32 %v388, %v865
        %v867 = vpop.f32.mrb[0].mxu0
        %v868 = vpop.f32.mrb[0].mxu0
        %v869 = vadd.f32 %v388, %v868
        %v870 = vpop.f32.mrb[0].mxu0
        %871 = vmatprep.mubr.bf16.mxu0 0
        %872 = vmatmul.mubr.bf16.gmra.mrb[0].mxu0 %v633
        %v873 = vpop.f32.mrb[0].mxu0
        %v874 = vadd.f32 %v388, %v873
        %v875 = vpop.f32.mrb[0].mxu0
        %v876 = vpop.f32.mrb[0].mxu0
        %v877 = vadd.f32 %v388, %v876
        %v878 = vpop.f32.mrb[0].mxu0
        %879 = vmatprep.mubr.bf16.mxu0 0
        %880 = vmatmul.mubr.bf16.gmra.mrb[0].mxu0 %v636
        %v881 = vpop.f32.mrb[0].mxu0
        %v882 = vadd.f32 %v388, %v881
        %v883 = vpop.f32.mrb[0].mxu0
        %v884 = vpop.f32.mrb[0].mxu0
        %v885 = vadd.f32 %v388, %v884
        %v886 = vpop.f32.mrb[0].mxu0
        %887 = vmatprep.mubr.bf16.mxu0 0
        %888 = vmatmul.mubr.bf16.gmra.mrb[0].mxu0 %v639
        %v889 = vpop.f32.mrb[0].mxu0
        %v890 = vadd.f32 %v388, %v889
        %v891 = vpop.f32.mrb[0].mxu0
        %v892 = vpop.f32.mrb[0].mxu0
        %v893 = vadd.f32 %v388, %v892
        %v894 = vpop.f32.mrb[0].mxu0
        %895 = vmatprep.mubr.bf16.mxu0 0
        %896 = vmatmul.mubr.bf16.gmra.mrb[0].mxu0 %v642
        %v897 = vpop.f32.mrb[0].mxu0
        %v898 = vadd.f32 %v388, %v897
        %v899 = vpop.f32.mrb[0].mxu0
        %v900 = vpop.f32.mrb[0].mxu0
        %v901 = vadd.f32 %v388, %v900
        %v902 = vpop.f32.mrb[0].mxu0
        %903 = vmatprep.mubr.bf16.mxu0 0
        %904 = vmatmul.mubr.bf16.gmra.mrb[0].mxu0 %v645
        %v905 = vpop.f32.mrb[0].mxu0
        %v906 = vadd.f32 %v388, %v905
        %v907 = vpop.f32.mrb[0].mxu0
        %v908 = vpop.f32.mrb[0].mxu0
        %v909 = vadd.f32 %v388, %v908
        %v910 = vpop.f32.mrb[0].mxu0
        %911 = vmatprep.mubr.bf16.mxu0 0
        %912 = vmatmul.mubr.bf16.gmra.mrb[0].mxu0 %v648
        %v913 = vpop.f32.mrb[0].mxu0
        %v914 = vadd.f32 %v388, %v913
        %v915 = vpop.f32.mrb[0].mxu0
        %v916 = vpop.f32.mrb[0].mxu0
        %v917 = vadd.f32 %v388, %v916
        %v918 = vpop.f32.mrb[0].mxu0
        %919 = vmatprep.mubr.bf16.mxu0 0
        %920 = vmatmul.mubr.bf16.gmra.mrb[0].mxu0 %v651
        %v921 = vpop.f32.mrb[0].mxu0
        %v922 = vadd.f32 %v388, %v921
        %v923 = vpop.f32.mrb[0].mxu0
        %v924 = vpop.f32.mrb[0].mxu0
        %v925 = vadd.f32 %v388, %v924
        %v926 = vpop.f32.mrb[0].mxu0
        %927 = vmatprep.mubr.bf16.mxu0 0
        %928 = vmatmul.mubr.bf16.gmra.mrb[0].mxu0 %v654
        %v929 = vpop.f32.mrb[0].mxu0
        %v930 = vadd.f32 %v388, %v929
        %v931 = vpop.f32.mrb[0].mxu0
        %v932 = vpop.f32.mrb[0].mxu0
        %v933 = vadd.f32 %v388, %v932
        %v934 = vpop.f32.mrb[0].mxu0
        %935 = vmatprep.mubr.bf16.mxu0 0
        %936 = vmatmul.mubr.bf16.gmra.mrb[0].mxu0 %v657
        %v937 = vpop.f32.mrb[0].mxu0
        %v938 = vadd.f32 %v388, %v937
        %v939 = vpop.f32.mrb[0].mxu0
        %v940 = vpop.f32.mrb[0].mxu0
        %v941 = vadd.f32 %v388, %v940
        %v942 = vpop.f32.mrb[0].mxu0
        %943 = vmatprep.mubr.bf16.mxu0 0
        %944 = vmatmul.mubr.bf16.gmra.mrb[0].mxu0 %v660
        %v945 = vpop.f32.mrb[0].mxu0
        %v946 = vadd.f32 %v388, %v945
        %v947 = vpop.f32.mrb[0].mxu0
        %v948 = vpop.f32.mrb[0].mxu0
        %v949 = vadd.f32 %v388, %v948
        %v950 = vpop.f32.mrb[0].mxu0
        %951 = vmatprep.mubr.bf16.mxu0 0
        %952 = vmatmul.mubr.bf16.gmra.mrb[0].mxu0 %v663
        %v953 = vpop.f32.mrb[0].mxu0
        %v954 = vadd.f32 %v388, %v953
        %v955 = vpop.f32.mrb[0].mxu0
        %v956 = vpop.f32.mrb[0].mxu0
        %v957 = vadd.f32 %v388, %v956
        %v958 = vpop.f32.mrb[0].mxu0
        %959 = vmatprep.mubr.bf16.mxu0 0
        %960 = vmatmul.mubr.bf16.gmra.mrb[0].mxu0 %v666
        %v961 = vpop.f32.mrb[0].mxu0
        %v962 = vadd.f32 %v388, %v961
        %v963 = vpop.f32.mrb[0].mxu0
        %v964 = vpop.f32.mrb[0].mxu0
        %v965 = vadd.f32 %v388, %v964
        %v966 = vpop.f32.mrb[0].mxu0
        %967 = vmatprep.mubr.bf16.mxu0 0
        %968 = vmatmul.mubr.bf16.gmra.mrb[0].mxu0 %v669
        %v969 = vpop.f32.mrb[0].mxu0
        %v970 = vadd.f32 %v388, %v969
        %v971 = vpop.f32.mrb[0].mxu0
        %v972 = vpop.f32.mrb[0].mxu0
        %v973 = vadd.f32 %v388, %v972
        %v974 = vpop.f32.mrb[0].mxu0
        %975 = vmatprep.mubr.bf16.mxu0 0
        %976 = vmatmul.mubr.bf16.gmra.mrb[0].mxu0 %v672
        %v977 = vpop.f32.mrb[0].mxu0
        %v978 = vadd.f32 %v388, %v977
        %v979 = vpop.f32.mrb[0].mxu0
        %v980 = vpop.f32.mrb[0].mxu0
        %v981 = vadd.f32 %v388, %v980
        %v982 = vpop.f32.mrb[0].mxu0
        %983 = vmatprep.mubr.bf16.mxu0 0
        %984 = vmatmul.mubr.bf16.gmra.mrb[0].mxu0 %v675
        %v985 = vpop.f32.mrb[0].mxu0
        %v986 = vadd.f32 %v388, %v985
        %v987 = vpop.f32.mrb[0].mxu0
        %v988 = vpop.f32.mrb[0].mxu0
        %v989 = vadd.f32 %v388, %v988
        %v990 = vpop.f32.mrb[0].mxu0
        %991 = vmatprep.mubr.bf16.mxu0 0
        %992 = vmatmul.mubr.bf16.gmra.mrb[0].mxu0 %v678
        %v993 = vpop.f32.mrb[0].mxu0
        %v994 = vpop.f32.mrb[0].mxu0
        %v995 = vpop.f32.mrb[0].mxu0
        %v996 = vpop.f32.mrb[0].mxu0
        %997 = vdwg.mxu0
        %v998 = vmax.f32 %v722, 0.0
        %v999 = vmax.f32 %v725, 0.0
        %v1000 = vmax.f32 %v730, 0.0
        %v1001 = vmax.f32 %v733, 0.0
        %v1002 = vmax.f32 %v738, 0.0
        %v1003 = vmax.f32 %v741, 0.0
        %v1004 = vmax.f32 %v746, 0.0
        %v1005 = vmax.f32 %v749, 0.0
        %v1006 = vmax.f32 %v754, 0.0
        %v1007 = vmax.f32 %v757, 0.0
        %v1008 = vmax.f32 %v762, 0.0
        %v1009 = vmax.f32 %v765, 0.0
        %v1010 = vmax.f32 %v770, 0.0
        %v1011 = vmax.f32 %v773, 0.0
        %v1012 = vmax.f32 %v778, 0.0
        %v1013 = vmax.f32 %v781, 0.0
        %v1014 = vmax.f32 %v786, 0.0
        %v1015 = vmax.f32 %v789, 0.0
        %v1016 = vmax.f32 %v794, 0.0
        %v1017 = vmax.f32 %v797, 0.0
        %v1018 = vmax.f32 %v802, 0.0
        %v1019 = vmax.f32 %v805, 0.0
        %v1020 = vmax.f32 %v810, 0.0
        %v1021 = vmax.f32 %v813, 0.0
        %v1022 = vmax.f32 %v818, 0.0
        %v1023 = vmax.f32 %v821, 0.0
        %v1024 = vmax.f32 %v826, 0.0
        %v1025 = vmax.f32 %v829, 0.0
        %v1026 = vmax.f32 %v834, 0.0
        %v1027 = vmax.f32 %v837, 0.0
        %v1028 = vmax.f32 %v842, 0.0
        %v1029 = vmax.f32 %v845, 0.0
        %v1030 = vmax.f32 %v850, 0.0
        %v1031 = vmax.f32 %v853, 0.0
        %v1032 = vmax.f32 %v858, 0.0
        %v1033 = vmax.f32 %v861, 0.0
        %v1034 = vmax.f32 %v866, 0.0
        %v1035 = vmax.f32 %v869, 0.0
        %v1036 = vmax.f32 %v874, 0.0
        %v1037 = vmax.f32 %v877, 0.0
        %v1038 = vmax.f32 %v882, 0.0
        %v1039 = vmax.f32 %v885, 0.0
        %v1040 = vmax.f32 %v890, 0.0
        %v1041 = vmax.f32 %v893, 0.0
        %v1042 = vmax.f32 %v898, 0.0
        %v1043 = vmax.f32 %v901, 0.0
        %v1044 = vmax.f32 %v906, 0.0
        %v1045 = vmax.f32 %v909, 0.0
        %v1046 = vmax.f32 %v914, 0.0
        %v1047 = vmax.f32 %v917, 0.0
        %v1048 = vmax.f32 %v922, 0.0
        %v1049 = vmax.f32 %v925, 0.0
        %v1050 = vmax.f32 %v930, 0.0
        %v1051 = vmax.f32 %v933, 0.0
        %v1052 = vmax.f32 %v938, 0.0
        %v1053 = vmax.f32 %v941, 0.0
        %v1054 = vmax.f32 %v946, 0.0
        %v1055 = vmax.f32 %v949, 0.0
        %v1056 = vmax.f32 %v954, 0.0
        %v1057 = vmax.f32 %v957, 0.0
        %v1058 = vmax.f32 %v962, 0.0
        %v1059 = vmax.f32 %v965, 0.0
        %v1060 = vmax.f32 %v970, 0.0
        %v1061 = vmax.f32 %v973, 0.0
        %v1062 = vmax.f32 %v978, 0.0
        %v1063 = vmax.f32 %v981, 0.0
        %v1064 = vmax.f32 %v986, 0.0
        %v1065 = vmax.f32 %v989, 0.0
        %v1066 = vstv %s309
        %v1067 = vadd.s32 %v1066, 1
        %v1068 = vadd.s32 %v1066, 2
        %v1069 = vadd.s32 %v1066, 3
        %v1070 = vadd.s32 %v1066, 4
        %v1071 = vadd.s32 %v1066, 5
        %v1072 = vadd.s32 %v1066, 6
        %v1073 = vadd.s32 %v1066, 7
        %v1074 = vadd.s32 %v1066, 8
        %v1075 = vadd.s32 %v1066, 9
        %v1076 = vadd.s32 %v1066, 10
        %v1077 = vadd.s32 %v1066, 11
        %v1078 = vadd.s32 %v1066, 12
        %v1079 = vadd.s32 %v1066, 13
        %v1080 = vadd.s32 %v1066, 14
        %v1081 = vadd.s32 %v1066, 15
        %v1082 = vadd.s32 %v1066, 16
        %v1083 = vadd.s32 %v1066, 17
        %v1084 = vadd.s32 %v1066, 18
        %v1085 = vadd.s32 %v1066, 19
        %v1086 = vadd.s32 %v1066, 20
        %v1087 = vadd.s32 %v1066, 21
        %v1088 = vadd.s32 %v1066, 22
        %v1089 = vlaneseq
        %v1090 = vshrl.u32 %v1089, 7
        %v1091 = vadd.s32 %v1090, 8
        %v1092 = vadd.s32 %v1090, 16
        %vm1093 = vcmp.ge.s32.totalorder %v1066, 0
        %vm1094 = vcmp.ge.s32.totalorder %v1067, 0
        %vm1095 = vcmp.ge.s32.totalorder %v1068, 0
        %vm1096 = vcmp.ge.s32.totalorder %v1069, 0
        %vm1097 = vcmp.ge.s32.totalorder %v1070, 0
        %vm1098 = vcmp.ge.s32.totalorder %v1071, 0
        %vm1099 = vcmp.ge.s32.totalorder %v1072, 0
        %vm1100 = vcmp.ge.s32.totalorder %v1073, 0
        %vm1101 = vcmp.ge.s32.totalorder %v1074, 0
        %vm1102 = vcmp.ge.s32.totalorder %v1075, 0
        %vm1103 = vcmp.ge.s32.totalorder %v1076, 0
        %vm1104 = vcmp.ge.s32.totalorder %v1077, 0
        %vm1105 = vcmp.ge.s32.totalorder %v1078, 0
        %vm1106 = vcmp.ge.s32.totalorder %v1079, 0
        %vm1107 = vcmp.ge.s32.totalorder %v1080, 0
        %vm1108 = vcmp.ge.s32.totalorder %v1081, 0
        %vm1109 = vcmp.ge.s32.totalorder %v1082, 0
        %vm1110 = vcmp.ge.s32.totalorder %v1083, 0
        %vm1111 = vcmp.ge.s32.totalorder %v1084, 0
        %vm1112 = vcmp.ge.s32.totalorder %v1085, 0
        %vm1113 = vcmp.ge.s32.totalorder %v1086, 0
        %vm1114 = vcmp.ge.s32.totalorder %v1087, 0
        %vm1115 = vcmp.ge.s32.totalorder %v1088, 0
        %vm1116 = vcmp.lt.s32.totalorder %v1066, 16
        %vm1117 = vcmp.lt.s32.totalorder %v1067, 16
        %vm1118 = vcmp.lt.s32.totalorder %v1068, 16
        %vm1119 = vcmp.lt.s32.totalorder %v1069, 16
        %vm1120 = vcmp.lt.s32.totalorder %v1070, 16
        %vm1121 = vcmp.lt.s32.totalorder %v1071, 16
        %vm1122 = vcmp.lt.s32.totalorder %v1072, 16
        %vm1123 = vcmp.lt.s32.totalorder %v1073, 16
        %vm1124 = vcmp.lt.s32.totalorder %v1074, 16
        %vm1125 = vcmp.lt.s32.totalorder %v1075, 16
        %vm1126 = vcmp.lt.s32.totalorder %v1076, 16
        %vm1127 = vcmp.lt.s32.totalorder %v1077, 16
        %vm1128 = vcmp.lt.s32.totalorder %v1078, 16
        %vm1129 = vcmp.lt.s32.totalorder %v1079, 16
        %vm1130 = vcmp.lt.s32.totalorder %v1080, 16
        %vm1131 = vcmp.lt.s32.totalorder %v1081, 16
        %vm1132 = vcmp.lt.s32.totalorder %v1082, 16
        %vm1133 = vcmp.lt.s32.totalorder %v1083, 16
        %vm1134 = vcmp.lt.s32.totalorder %v1084, 16
        %vm1135 = vcmp.lt.s32.totalorder %v1085, 16
        %vm1136 = vcmp.lt.s32.totalorder %v1086, 16
        %vm1137 = vcmp.lt.s32.totalorder %v1087, 16
        %vm1138 = vcmp.lt.s32.totalorder %v1088, 16
        %vm1139 = vmand %vm1093, %vm1116
        %vm1140 = vmand %vm1094, %vm1117
        %vm1141 = vmand %vm1095, %vm1118
        %vm1142 = vmand %vm1096, %vm1119
        %vm1143 = vmand %vm1097, %vm1120
        %vm1144 = vmand %vm1098, %vm1121
        %vm1145 = vmand %vm1099, %vm1122
        %vm1146 = vmand %vm1100, %vm1123
        %vm1147 = vmand %vm1101, %vm1124
        %vm1148 = vmand %vm1102, %vm1125
        %vm1149 = vmand %vm1103, %vm1126
        %vm1150 = vmand %vm1104, %vm1127
        %vm1151 = vmand %vm1105, %vm1128
        %vm1152 = vmand %vm1106, %vm1129
        %vm1153 = vmand %vm1107, %vm1130
        %vm1154 = vmand %vm1108, %vm1131
        %vm1155 = vmand %vm1109, %vm1132
        %vm1156 = vmand %vm1110, %vm1133
        %vm1157 = vmand %vm1111, %vm1134
        %vm1158 = vmand %vm1112, %vm1135
        %vm1159 = vmand %vm1113, %vm1136
        %vm1160 = vmand %vm1114, %vm1137
        %vm1161 = vmand %vm1115, %vm1138
        %vm1162 = vcmp.ge.s32.totalorder %v1090, 1
        %vm1163 = vcmp.ge.s32.totalorder %v1091, 1
        %vm1164 = vcmp.ge.s32.totalorder %v1092, 1
        %vm1165 = vmand %vm1139, %vm1162
        %vm1166 = vmand %vm1139, %vm1163
        %vm1167 = vmand %vm1139, %vm1164
        %vm1168 = vmand %vm1140, %vm1162
        %vm1169 = vmand %vm1140, %vm1163
        %vm1170 = vmand %vm1140, %vm1164
        %vm1171 = vmand %vm1141, %vm1162
        %vm1172 = vmand %vm1141, %vm1163
        %vm1173 = vmand %vm1141, %vm1164
        %vm1174 = vmand %vm1142, %vm1162
        %vm1175 = vmand %vm1142, %vm1163
        %vm1176 = vmand %vm1142, %vm1164
        %vm1177 = vmand %vm1143, %vm1162
        %vm1178 = vmand %vm1143, %vm1163
        %vm1179 = vmand %vm1143, %vm1164
        %vm1180 = vmand %vm1144, %vm1162
        %vm1181 = vmand %vm1144, %vm1163
        %vm1182 = vmand %vm1144, %vm1164
        %vm1183 = vmand %vm1145, %vm1162
        %vm1184 = vmand %vm1145, %vm1163
        %vm1185 = vmand %vm1145, %vm1164
        %vm1186 = vmand %vm1146, %vm1162
        %vm1187 = vmand %vm1146, %vm1163
        %vm1188 = vmand %vm1146, %vm1164
        %vm1189 = vmand %vm1147, %vm1162
        %vm1190 = vmand %vm1147, %vm1163
        %vm1191 = vmand %vm1147, %vm1164
        %vm1192 = vmand %vm1148, %vm1162
        %vm1193 = vmand %vm1148, %vm1163
        %vm1194 = vmand %vm1148, %vm1164
        %vm1195 = vmand %vm1149, %vm1162
        %vm1196 = vmand %vm1149, %vm1163
        %vm1197 = vmand %vm1149, %vm1164
        %vm1198 = vmand %vm1150, %vm1162
        %vm1199 = vmand %vm1150, %vm1163
        %vm1200 = vmand %vm1150, %vm1164
        %vm1201 = vmand %vm1151, %vm1162
        %vm1202 = vmand %vm1151, %vm1163
        %vm1203 = vmand %vm1151, %vm1164
        %vm1204 = vmand %vm1152, %vm1162
        %vm1205 = vmand %vm1152, %vm1163
        %vm1206 = vmand %vm1152, %vm1164
        %vm1207 = vmand %vm1153, %vm1162
        %vm1208 = vmand %vm1153, %vm1163
        %vm1209 = vmand %vm1153, %vm1164
        %vm1210 = vmand %vm1154, %vm1162
        %vm1211 = vmand %vm1154, %vm1163
        %vm1212 = vmand %vm1154, %vm1164
        %vm1213 = vmand %vm1155, %vm1162
        %vm1214 = vmand %vm1155, %vm1163
        %vm1215 = vmand %vm1155, %vm1164
        %vm1216 = vmand %vm1156, %vm1162
        %vm1217 = vmand %vm1156, %vm1163
        %vm1218 = vmand %vm1156, %vm1164
        %vm1219 = vmand %vm1157, %vm1162
        %vm1220 = vmand %vm1157, %vm1163
        %vm1221 = vmand %vm1157, %vm1164
        %vm1222 = vmand %vm1158, %vm1162
        %vm1223 = vmand %vm1158, %vm1163
        %vm1224 = vmand %vm1158, %vm1164
        %vm1225 = vmand %vm1159, %vm1162
        %vm1226 = vmand %vm1159, %vm1163
        %vm1227 = vmand %vm1159, %vm1164
        %vm1228 = vmand %vm1160, %vm1162
        %vm1229 = vmand %vm1160, %vm1163
        %vm1230 = vmand %vm1160, %vm1164
        %vm1231 = vmand %vm1161, %vm1162
        %vm1232 = vmand %vm1161, %vm1163
        %vm1233 = vcmp.le.s32.totalorder %v1090, 16
        %vm1234 = vcmp.le.s32.totalorder %v1091, 16
        %vm1235 = vcmp.le.s32.totalorder %v1092, 16
        %vm1236 = vmand %vm1165, %vm1233
        %vm1237 = vmand %vm1166, %vm1234
        %vm1238 = vmand %vm1167, %vm1235
        %vm1239 = vmand %vm1168, %vm1233
        %vm1240 = vmand %vm1169, %vm1234
        %vm1241 = vmand %vm1170, %vm1235
        %vm1242 = vmand %vm1171, %vm1233
        %vm1243 = vmand %vm1172, %vm1234
        %vm1244 = vmand %vm1173, %vm1235
        %vm1245 = vmand %vm1174, %vm1233
        %vm1246 = vmand %vm1175, %vm1234
        %vm1247 = vmand %vm1176, %vm1235
        %vm1248 = vmand %vm1177, %vm1233
        %vm1249 = vmand %vm1178, %vm1234
        %vm1250 = vmand %vm1179, %vm1235
        %vm1251 = vmand %vm1180, %vm1233
        %vm1252 = vmand %vm1181, %vm1234
        %vm1253 = vmand %vm1182, %vm1235
        %vm1254 = vmand %vm1183, %vm1233
        %vm1255 = vmand %vm1184, %vm1234
        %vm1256 = vmand %vm1185, %vm1235
        %vm1257 = vmand %vm1186, %vm1233
        %vm1258 = vmand %vm1187, %vm1234
        %vm1259 = vmand %vm1188, %vm1235
        %vm1260 = vmand %vm1189, %vm1233
        %vm1261 = vmand %vm1190, %vm1234
        %vm1262 = vmand %vm1191, %vm1235
        %vm1263 = vmand %vm1192, %vm1233
        %vm1264 = vmand %vm1193, %vm1234
        %vm1265 = vmand %vm1194, %vm1235
        %vm1266 = vmand %vm1195, %vm1233
        %vm1267 = vmand %vm1196, %vm1234
        %vm1268 = vmand %vm1197, %vm1235
        %vm1269 = vmand %vm1198, %vm1233
        %vm1270 = vmand %vm1199, %vm1234
        %vm1271 = vmand %vm1200, %vm1235
        %vm1272 = vmand %vm1201, %vm1233
        %vm1273 = vmand %vm1202, %vm1234
        %vm1274 = vmand %vm1203, %vm1235
        %vm1275 = vmand %vm1204, %vm1233
        %vm1276 = vmand %vm1205, %vm1234
        %vm1277 = vmand %vm1206, %vm1235
        %vm1278 = vmand %vm1207, %vm1233
        %vm1279 = vmand %vm1208, %vm1234
        %vm1280 = vmand %vm1209, %vm1235
        %vm1281 = vmand %vm1210, %vm1233
        %vm1282 = vmand %vm1211, %vm1234
        %vm1283 = vmand %vm1212, %vm1235
        %vm1284 = vmand %vm1213, %vm1233
        %vm1285 = vmand %vm1214, %vm1234
        %vm1286 = vmand %vm1215, %vm1235
        %vm1287 = vmand %vm1216, %vm1233
        %vm1288 = vmand %vm1217, %vm1234
        %vm1289 = vmand %vm1218, %vm1235
        %vm1290 = vmand %vm1219, %vm1233
        %vm1291 = vmand %vm1220, %vm1234
        %vm1292 = vmand %vm1221, %vm1235
        %vm1293 = vmand %vm1222, %vm1233
        %vm1294 = vmand %vm1223, %vm1234
        %vm1295 = vmand %vm1224, %vm1235
        %vm1296 = vmand %vm1225, %vm1233
        %vm1297 = vmand %vm1226, %vm1234
        %vm1298 = vmand %vm1227, %vm1235
        %vm1299 = vmand %vm1228, %vm1233
        %vm1300 = vmand %vm1229, %vm1234
        %vm1301 = vmand %vm1230, %vm1235
        %vm1302 = vmand %vm1231, %vm1233
        %vm1303 = vmand %vm1232, %vm1234
        %v1304 = vsel %vm1236, 1, 0
        %v1305 = vsel %vm1237, 1, 0
        %v1306 = vsel %vm1238, 1, 0
        %v1307 = vsel %vm1239, 1, 0
        %v1308 = vsel %vm1240, 1, 0
        %v1309 = vsel %vm1241, 1, 0
        %v1310 = vsel %vm1242, 1, 0
        %v1311 = vsel %vm1243, 1, 0
        %v1312 = vsel %vm1244, 1, 0
        %v1313 = vsel %vm1245, 1, 0
        %v1314 = vsel %vm1246, 1, 0
        %v1315 = vsel %vm1247, 1, 0
        %v1316 = vsel %vm1248, 1, 0
        %v1317 = vsel %vm1249, 1, 0
        %v1318 = vsel %vm1250, 1, 0
        %v1319 = vsel %vm1251, 1, 0
        %v1320 = vsel %vm1252, 1, 0
        %v1321 = vsel %vm1253, 1, 0
        %v1322 = vsel %vm1254, 1, 0
        %v1323 = vsel %vm1255, 1, 0
        %v1324 = vsel %vm1256, 1, 0
        %v1325 = vsel %vm1257, 1, 0
        %v1326 = vsel %vm1258, 1, 0
        %v1327 = vsel %vm1259, 1, 0
        %v1328 = vsel %vm1260, 1, 0
        %v1329 = vsel %vm1261, 1, 0
        %v1330 = vsel %vm1262, 1, 0
        %v1331 = vsel %vm1263, 1, 0
        %v1332 = vsel %vm1264, 1, 0
        %v1333 = vsel %vm1265, 1, 0
        %v1334 = vsel %vm1266, 1, 0
        %v1335 = vsel %vm1267, 1, 0
        %v1336 = vsel %vm1268, 1, 0
        %v1337 = vsel %vm1269, 1, 0
        %v1338 = vsel %vm1270, 1, 0
        %v1339 = vsel %vm1271, 1, 0
        %v1340 = vsel %vm1272, 1, 0
        %v1341 = vsel %vm1273, 1, 0
        %v1342 = vsel %vm1274, 1, 0
        %v1343 = vsel %vm1275, 1, 0
        %v1344 = vsel %vm1276, 1, 0
        %v1345 = vsel %vm1277, 1, 0
        %v1346 = vsel %vm1278, 1, 0
        %v1347 = vsel %vm1279, 1, 0
        %v1348 = vsel %vm1280, 1, 0
        %v1349 = vsel %vm1281, 1, 0
        %v1350 = vsel %vm1282, 1, 0
        %v1351 = vsel %vm1283, 1, 0
        %v1352 = vsel %vm1284, 1, 0
        %v1353 = vsel %vm1285, 1, 0
        %v1354 = vsel %vm1286, 1, 0
        %v1355 = vsel %vm1287, 1, 0
        %v1356 = vsel %vm1288, 1, 0
        %v1357 = vsel %vm1289, 1, 0
        %v1358 = vsel %vm1290, 1, 0
        %v1359 = vsel %vm1291, 1, 0
        %v1360 = vsel %vm1292, 1, 0
        %v1361 = vsel %vm1293, 1, 0
        %v1362 = vsel %vm1294, 1, 0
        %v1363 = vsel %vm1295, 1, 0
        %v1364 = vsel %vm1296, 1, 0
        %v1365 = vsel %vm1297, 1, 0
        %v1366 = vsel %vm1298, 1, 0
        %v1367 = vsel %vm1299, 1, 0
        %v1368 = vsel %vm1300, 1, 0
        %v1369 = vsel %vm1301, 1, 0
        %v1370 = vsel %vm1302, 1, 0
        %v1371 = vsel %vm1303, 1, 0
        %vm1372 = vcmp.eq.s32.totalorder %v1304, 1
        %vm1373 = vcmp.eq.s32.totalorder %v1305, 1
        %vm1374 = vcmp.eq.s32.totalorder %v1306, 1
        %vm1375 = vcmp.eq.s32.totalorder %v1307, 1
        %vm1376 = vcmp.eq.s32.totalorder %v1308, 1
        %vm1377 = vcmp.eq.s32.totalorder %v1309, 1
        %vm1378 = vcmp.eq.s32.totalorder %v1310, 1
        %vm1379 = vcmp.eq.s32.totalorder %v1311, 1
        %vm1380 = vcmp.eq.s32.totalorder %v1312, 1
        %vm1381 = vcmp.eq.s32.totalorder %v1313, 1
        %vm1382 = vcmp.eq.s32.totalorder %v1314, 1
        %vm1383 = vcmp.eq.s32.totalorder %v1315, 1
        %vm1384 = vcmp.eq.s32.totalorder %v1316, 1
        %vm1385 = vcmp.eq.s32.totalorder %v1317, 1
        %vm1386 = vcmp.eq.s32.totalorder %v1318, 1
        %vm1387 = vcmp.eq.s32.totalorder %v1319, 1
        %vm1388 = vcmp.eq.s32.totalorder %v1320, 1
        %vm1389 = vcmp.eq.s32.totalorder %v1321, 1
        %vm1390 = vcmp.eq.s32.totalorder %v1322, 1
        %vm1391 = vcmp.eq.s32.totalorder %v1323, 1
        %vm1392 = vcmp.eq.s32.totalorder %v1324, 1
        %vm1393 = vcmp.eq.s32.totalorder %v1325, 1
        %vm1394 = vcmp.eq.s32.totalorder %v1326, 1
        %vm1395 = vcmp.eq.s32.totalorder %v1327, 1
        %vm1396 = vcmp.eq.s32.totalorder %v1328, 1
        %vm1397 = vcmp.eq.s32.totalorder %v1329, 1
        %vm1398 = vcmp.eq.s32.totalorder %v1330, 1
        %vm1399 = vcmp.eq.s32.totalorder %v1331, 1
        %vm1400 = vcmp.eq.s32.totalorder %v1332, 1
        %vm1401 = vcmp.eq.s32.totalorder %v1333, 1
        %vm1402 = vcmp.eq.s32.totalorder %v1334, 1
        %vm1403 = vcmp.eq.s32.totalorder %v1335, 1
        %vm1404 = vcmp.eq.s32.totalorder %v1336, 1
        %vm1405 = vcmp.eq.s32.totalorder %v1337, 1
        %vm1406 = vcmp.eq.s32.totalorder %v1338, 1
        %vm1407 = vcmp.eq.s32.totalorder %v1339, 1
        %vm1408 = vcmp.eq.s32.totalorder %v1340, 1
        %vm1409 = vcmp.eq.s32.totalorder %v1341, 1
        %vm1410 = vcmp.eq.s32.totalorder %v1342, 1
        %vm1411 = vcmp.eq.s32.totalorder %v1343, 1
        %vm1412 = vcmp.eq.s32.totalorder %v1344, 1
        %vm1413 = vcmp.eq.s32.totalorder %v1345, 1
        %vm1414 = vcmp.eq.s32.totalorder %v1346, 1
        %vm1415 = vcmp.eq.s32.totalorder %v1347, 1
        %vm1416 = vcmp.eq.s32.totalorder %v1348, 1
        %vm1417 = vcmp.eq.s32.totalorder %v1349, 1
        %vm1418 = vcmp.eq.s32.totalorder %v1350, 1
        %vm1419 = vcmp.eq.s32.totalorder %v1351, 1
        %vm1420 = vcmp.eq.s32.totalorder %v1352, 1
        %vm1421 = vcmp.eq.s32.totalorder %v1353, 1
        %vm1422 = vcmp.eq.s32.totalorder %v1354, 1
        %vm1423 = vcmp.eq.s32.totalorder %v1355, 1
        %vm1424 = vcmp.eq.s32.totalorder %v1356, 1
        %vm1425 = vcmp.eq.s32.totalorder %v1357, 1
        %vm1426 = vcmp.eq.s32.totalorder %v1358, 1
        %vm1427 = vcmp.eq.s32.totalorder %v1359, 1
        %vm1428 = vcmp.eq.s32.totalorder %v1360, 1
        %vm1429 = vcmp.eq.s32.totalorder %v1361, 1
        %vm1430 = vcmp.eq.s32.totalorder %v1362, 1
        %vm1431 = vcmp.eq.s32.totalorder %v1363, 1
        %vm1432 = vcmp.eq.s32.totalorder %v1364, 1
        %vm1433 = vcmp.eq.s32.totalorder %v1365, 1
        %vm1434 = vcmp.eq.s32.totalorder %v1366, 1
        %vm1435 = vcmp.eq.s32.totalorder %v1367, 1
        %vm1436 = vcmp.eq.s32.totalorder %v1368, 1
        %vm1437 = vcmp.eq.s32.totalorder %v1369, 1
        %vm1438 = vcmp.eq.s32.totalorder %v1370, 1
        %vm1439 = vcmp.eq.s32.totalorder %v1371, 1
        %v1440 = vsel %vm1372, %v998, 0.0
        %v1441 = vsel %vm1373, %v999, 0.0
        %v1442 = vsel %vm1374, %v1000, 0.0
        %v1443 = vsel %vm1375, %v1001, 0.0
        %v1444 = vsel %vm1376, %v1002, 0.0
        %v1445 = vsel %vm1377, %v1003, 0.0
        %v1446 = vsel %vm1378, %v1004, 0.0
        %v1447 = vsel %vm1379, %v1005, 0.0
        %v1448 = vsel %vm1380, %v1006, 0.0
        %v1449 = vsel %vm1381, %v1007, 0.0
        %v1450 = vsel %vm1382, %v1008, 0.0
        %v1451 = vsel %vm1383, %v1009, 0.0
        %v1452 = vsel %vm1384, %v1010, 0.0
        %v1453 = vsel %vm1385, %v1011, 0.0
        %v1454 = vsel %vm1386, %v1012, 0.0
        %v1455 = vsel %vm1387, %v1013, 0.0
        %v1456 = vsel %vm1388, %v1014, 0.0
        %v1457 = vsel %vm1389, %v1015, 0.0
        %v1458 = vsel %vm1390, %v1016, 0.0
        %v1459 = vsel %vm1391, %v1017, 0.0
        %v1460 = vsel %vm1392, %v1018, 0.0
        %v1461 = vsel %vm1393, %v1019, 0.0
        %v1462 = vsel %vm1394, %v1020, 0.0
        %v1463 = vsel %vm1395, %v1021, 0.0
        %v1464 = vsel %vm1396, %v1022, 0.0
        %v1465 = vsel %vm1397, %v1023, 0.0
        %v1466 = vsel %vm1398, %v1024, 0.0
        %v1467 = vsel %vm1399, %v1025, 0.0
        %v1468 = vsel %vm1400, %v1026, 0.0
        %v1469 = vsel %vm1401, %v1027, 0.0
        %v1470 = vsel %vm1402, %v1028, 0.0
        %v1471 = vsel %vm1403, %v1029, 0.0
        %v1472 = vsel %vm1404, %v1030, 0.0
        %v1473 = vsel %vm1405, %v1031, 0.0
        %v1474 = vsel %vm1406, %v1032, 0.0
        %v1475 = vsel %vm1407, %v1033, 0.0
        %v1476 = vsel %vm1408, %v1034, 0.0
        %v1477 = vsel %vm1409, %v1035, 0.0
        %v1478 = vsel %vm1410, %v1036, 0.0
        %v1479 = vsel %vm1411, %v1037, 0.0
        %v1480 = vsel %vm1412, %v1038, 0.0
        %v1481 = vsel %vm1413, %v1039, 0.0
        %v1482 = vsel %vm1414, %v1040, 0.0
        %v1483 = vsel %vm1415, %v1041, 0.0
        %v1484 = vsel %vm1416, %v1042, 0.0
        %v1485 = vsel %vm1417, %v1043, 0.0
        %v1486 = vsel %vm1418, %v1044, 0.0
        %v1487 = vsel %vm1419, %v1045, 0.0
        %v1488 = vsel %vm1420, %v1046, 0.0
        %v1489 = vsel %vm1421, %v1047, 0.0
        %v1490 = vsel %vm1422, %v1048, 0.0
        %v1491 = vsel %vm1423, %v1049, 0.0
        %v1492 = vsel %vm1424, %v1050, 0.0
        %v1493 = vsel %vm1425, %v1051, 0.0
        %v1494 = vsel %vm1426, %v1052, 0.0
        %v1495 = vsel %vm1427, %v1053, 0.0
        %v1496 = vsel %vm1428, %v1054, 0.0
        %v1497 = vsel %vm1429, %v1055, 0.0
        %v1498 = vsel %vm1430, %v1056, 0.0
        %v1499 = vsel %vm1431, %v1057, 0.0
        %v1500 = vsel %vm1432, %v1058, 0.0
        %v1501 = vsel %vm1433, %v1059, 0.0
        %v1502 = vsel %vm1434, %v1060, 0.0
        %v1503 = vsel %vm1435, %v1061, 0.0
        %v1504 = vsel %vm1436, %v1062, 0.0
        %v1505 = vsel %vm1437, %v1063, 0.0
        %v1506 = vsel %vm1438, %v1064, 0.0
        %v1507 = vsel %vm1439, %v1065, 0.0
        %v1508 = vpack.c.bf16 %v1441, %v1440
        %v1509 = vpack.c.bf16 %v1443, %v1442
        %v1510 = vpack.c.bf16 %v1445, %v1444
        %v1511 = vpack.c.bf16 %v1447, %v1446
        %v1512 = vpack.c.bf16 %v1449, %v1448
        %v1513 = vpack.c.bf16 %v1451, %v1450
        %v1514 = vpack.c.bf16 %v1453, %v1452
        %v1515 = vpack.c.bf16 %v1455, %v1454
        %v1516 = vpack.c.bf16 %v1457, %v1456
        %v1517 = vpack.c.bf16 %v1459, %v1458
        %v1518 = vpack.c.bf16 %v1461, %v1460
        %v1519 = vpack.c.bf16 %v1463, %v1462
        %v1520 = vpack.c.bf16 %v1465, %v1464
        %v1521 = vpack.c.bf16 %v1467, %v1466
        %v1522 = vpack.c.bf16 %v1469, %v1468
        %v1523 = vpack.c.bf16 %v1471, %v1470
        %v1524 = vpack.c.bf16 %v1473, %v1472
        %v1525 = vpack.c.bf16 %v1475, %v1474
        %v1526 = vpack.c.bf16 %v1477, %v1476
        %v1527 = vpack.c.bf16 %v1479, %v1478
        %v1528 = vpack.c.bf16 %v1481, %v1480
        %v1529 = vpack.c.bf16 %v1483, %v1482
        %v1530 = vpack.c.bf16 %v1485, %v1484
        %v1531 = vpack.c.bf16 %v1487, %v1486
        %v1532 = vpack.c.bf16 %v1489, %v1488
        %v1533 = vpack.c.bf16 %v1491, %v1490
        %v1534 = vpack.c.bf16 %v1493, %v1492
        %v1535 = vpack.c.bf16 %v1495, %v1494
        %v1536 = vpack.c.bf16 %v1497, %v1496
        %v1537 = vpack.c.bf16 %v1499, %v1498
        %v1538 = vpack.c.bf16 %v1501, %v1500
        %v1539 = vpack.c.bf16 %v1503, %v1502
        %v1540 = vpack.c.bf16 %v1505, %v1504
        %v1541 = vpack.c.bf16 %v1507, %v1506
        %vm1542 = vsmask.f32 7424
        %v1544 = vshrl.u32 %v1508, 16
        %v1546 = vshll.u32 %v1508, 16
        %v1548 = vrot.slane %v1546, 1
        %v1549 = vor.u32 %v1544, %v1548
        %v1551 = vshll.u32 %v1509, 16
        %v1553 = vrot.slane %v1551, 1
        %v1554 = vsel %vm1542, %v1549, %v1553
        %v1555 = vshrl.u32 %v1509, 16
        %v1557 = vor.u32 %v1555, %v1553
        %v1559 = vshll.u32 %v1510, 16
        %v1561 = vrot.slane %v1559, 1
        %v1562 = vsel %vm1542, %v1557, %v1561
        %v1563 = vshrl.u32 %v1510, 16
        %v1565 = vor.u32 %v1563, %v1561
        %v1567 = vshll.u32 %v1511, 16
        %v1569 = vrot.slane %v1567, 1
        %v1570 = vsel %vm1542, %v1565, %v1569
        %v1571 = vshrl.u32 %v1511, 16
        %v1573 = vor.u32 %v1571, %v1569
        %v1575 = vshll.u32 %v1512, 16
        %v1577 = vrot.slane %v1575, 1
        %v1578 = vsel %vm1542, %v1573, %v1577
        %v1579 = vshrl.u32 %v1512, 16
        %v1581 = vor.u32 %v1579, %v1577
        %v1583 = vshll.u32 %v1513, 16
        %v1585 = vrot.slane %v1583, 1
        %v1586 = vsel %vm1542, %v1581, %v1585
        %v1587 = vshrl.u32 %v1513, 16
        %v1589 = vor.u32 %v1587, %v1585
        %v1591 = vshll.u32 %v1514, 16
        %v1593 = vrot.slane %v1591, 1
        %v1594 = vsel %vm1542, %v1589, %v1593
        %v1595 = vshrl.u32 %v1514, 16
        %v1597 = vor.u32 %v1595, %v1593
        %v1599 = vshll.u32 %v1515, 16
        %v1601 = vrot.slane %v1599, 1
        %v1602 = vsel %vm1542, %v1597, %v1601
        %v1603 = vshrl.u32 %v1515, 16
        %v1605 = vor.u32 %v1603, %v1601
        %v1607 = vshll.u32 %v1516, 16
        %v1609 = vrot.slane %v1607, 1
        %v1610 = vsel %vm1542, %v1605, %v1609
        %v1611 = vshrl.u32 %v1516, 16
        %v1613 = vor.u32 %v1611, %v1609
        %v1615 = vshll.u32 %v1517, 16
        %v1617 = vrot.slane %v1615, 1
        %v1618 = vsel %vm1542, %v1613, %v1617
        %v1619 = vshrl.u32 %v1517, 16
        %v1621 = vor.u32 %v1619, %v1617
        %v1623 = vshll.u32 %v1518, 16
        %v1625 = vrot.slane %v1623, 1
        %v1626 = vsel %vm1542, %v1621, %v1625
        %v1627 = vshrl.u32 %v1518, 16
        %v1629 = vor.u32 %v1627, %v1625
        %v1631 = vshll.u32 %v1519, 16
        %v1633 = vrot.slane %v1631, 1
        %v1634 = vsel %vm1542, %v1629, %v1633
        %v1635 = vshrl.u32 %v1519, 16
        %v1637 = vor.u32 %v1635, %v1633
        %v1639 = vshll.u32 %v1520, 16
        %v1641 = vrot.slane %v1639, 1
        %v1642 = vsel %vm1542, %v1637, %v1641
        %v1643 = vshrl.u32 %v1520, 16
        %v1645 = vor.u32 %v1643, %v1641
        %v1647 = vshll.u32 %v1521, 16
        %v1649 = vrot.slane %v1647, 1
        %v1650 = vsel %vm1542, %v1645, %v1649
        %v1651 = vshrl.u32 %v1521, 16
        %v1653 = vor.u32 %v1651, %v1649
        %v1655 = vshll.u32 %v1522, 16
        %v1657 = vrot.slane %v1655, 1
        %v1658 = vsel %vm1542, %v1653, %v1657
        %v1659 = vshrl.u32 %v1522, 16
        %v1661 = vor.u32 %v1659, %v1657
        %v1663 = vshll.u32 %v1523, 16
        %v1665 = vrot.slane %v1663, 1
        %v1666 = vsel %vm1542, %v1661, %v1665
        %v1667 = vshrl.u32 %v1523, 16
        %v1669 = vor.u32 %v1667, %v1665
        %v1671 = vshll.u32 %v1524, 16
        %v1673 = vrot.slane %v1671, 1
        %v1674 = vsel %vm1542, %v1669, %v1673
        %v1675 = vshrl.u32 %v1524, 16
        %v1677 = vor.u32 %v1675, %v1673
        %v1679 = vshll.u32 %v1525, 16
        %v1681 = vrot.slane %v1679, 1
        %v1682 = vsel %vm1542, %v1677, %v1681
        %v1683 = vshrl.u32 %v1525, 16
        %v1685 = vor.u32 %v1683, %v1681
        %v1687 = vshll.u32 %v1526, 16
        %v1689 = vrot.slane %v1687, 1
        %v1690 = vsel %vm1542, %v1685, %v1689
        %v1691 = vshrl.u32 %v1526, 16
        %v1693 = vor.u32 %v1691, %v1689
        %v1695 = vshll.u32 %v1527, 16
        %v1697 = vrot.slane %v1695, 1
        %v1698 = vsel %vm1542, %v1693, %v1697
        %v1699 = vshrl.u32 %v1527, 16
        %v1701 = vor.u32 %v1699, %v1697
        %v1703 = vshll.u32 %v1528, 16
        %v1705 = vrot.slane %v1703, 1
        %v1706 = vsel %vm1542, %v1701, %v1705
        %v1707 = vshrl.u32 %v1528, 16
        %v1709 = vor.u32 %v1707, %v1705
        %v1711 = vshll.u32 %v1529, 16
        %v1713 = vrot.slane %v1711, 1
        %v1714 = vsel %vm1542, %v1709, %v1713
        %v1715 = vshrl.u32 %v1529, 16
        %v1717 = vor.u32 %v1715, %v1713
        %v1719 = vshll.u32 %v1530, 16
        %v1721 = vrot.slane %v1719, 1
        %v1722 = vsel %vm1542, %v1717, %v1721
        %v1723 = vshrl.u32 %v1530, 16
        %v1725 = vor.u32 %v1723, %v1721
        %v1727 = vshll.u32 %v1531, 16
        %v1729 = vrot.slane %v1727, 1
        %v1730 = vsel %vm1542, %v1725, %v1729
        %v1731 = vshrl.u32 %v1531, 16
        %v1733 = vor.u32 %v1731, %v1729
        %v1735 = vshll.u32 %v1532, 16
        %v1737 = vrot.slane %v1735, 1
        %v1738 = vsel %vm1542, %v1733, %v1737
        %v1739 = vshrl.u32 %v1532, 16
        %v1741 = vor.u32 %v1739, %v1737
        %v1743 = vshll.u32 %v1533, 16
        %v1745 = vrot.slane %v1743, 1
        %v1746 = vsel %vm1542, %v1741, %v1745
        %v1747 = vshrl.u32 %v1533, 16
        %v1749 = vor.u32 %v1747, %v1745
        %v1751 = vshll.u32 %v1534, 16
        %v1753 = vrot.slane %v1751, 1
        %v1754 = vsel %vm1542, %v1749, %v1753
        %v1755 = vshrl.u32 %v1534, 16
        %v1757 = vor.u32 %v1755, %v1753
        %v1759 = vshll.u32 %v1535, 16
        %v1761 = vrot.slane %v1759, 1
        %v1762 = vsel %vm1542, %v1757, %v1761
        %v1763 = vshrl.u32 %v1535, 16
        %v1765 = vor.u32 %v1763, %v1761
        %v1767 = vshll.u32 %v1536, 16
        %v1769 = vrot.slane %v1767, 1
        %v1770 = vsel %vm1542, %v1765, %v1769
        %v1771 = vshrl.u32 %v1536, 16
        %v1773 = vor.u32 %v1771, %v1769
        %v1775 = vshll.u32 %v1537, 16
        %v1777 = vrot.slane %v1775, 1
        %v1778 = vsel %vm1542, %v1773, %v1777
        %v1779 = vshrl.u32 %v1537, 16
        %v1781 = vor.u32 %v1779, %v1777
        %v1783 = vshll.u32 %v1538, 16
        %v1785 = vrot.slane %v1783, 1
        %v1786 = vsel %vm1542, %v1781, %v1785
        %1787 = vrot.lane.b32.xlu0 %v1554, 64
        %v1788 = vpop.permute.xlu0 %1787
        %1789 = vrot.lane.b32.xlu0 %v1562, 64
        %v1790 = vpop.permute.xlu0 %1789
        %1791 = vrot.lane.b32.xlu0 %v1570, 64
        %v1792 = vpop.permute.xlu0 %1791
        %1793 = vrot.lane.b32.xlu0 %v1578, 64
        %v1794 = vpop.permute.xlu0 %1793
        %1795 = vrot.lane.b32.xlu0 %v1586, 64
        %v1796 = vpop.permute.xlu0 %1795
        %1797 = vrot.lane.b32.xlu0 %v1594, 64
        %v1798 = vpop.permute.xlu0 %1797
        %1799 = vrot.lane.b32.xlu0 %v1602, 64
        %v1800 = vpop.permute.xlu0 %1799
        %1801 = vrot.lane.b32.xlu0 %v1610, 64
        %v1802 = vpop.permute.xlu0 %1801
        %1803 = vrot.lane.b32.xlu0 %v1618, 64
        %v1804 = vpop.permute.xlu0 %1803
        %1805 = vrot.lane.b32.xlu0 %v1626, 64
        %v1806 = vpop.permute.xlu0 %1805
        %1807 = vrot.lane.b32.xlu0 %v1634, 64
        %v1808 = vpop.permute.xlu0 %1807
        %1809 = vrot.lane.b32.xlu0 %v1642, 64
        %v1810 = vpop.permute.xlu0 %1809
        %1811 = vrot.lane.b32.xlu0 %v1650, 64
        %v1812 = vpop.permute.xlu0 %1811
        %1813 = vrot.lane.b32.xlu0 %v1658, 64
        %v1814 = vpop.permute.xlu0 %1813
        %1815 = vrot.lane.b32.xlu0 %v1666, 64
        %v1816 = vpop.permute.xlu0 %1815
        %1817 = vrot.lane.b32.xlu0 %v1674, 64
        %v1818 = vpop.permute.xlu0 %1817
        %1819 = vrot.lane.b32.xlu0 %v1682, 64
        %v1820 = vpop.permute.xlu0 %1819
        %1821 = vrot.lane.b32.xlu0 %v1690, 64
        %v1822 = vpop.permute.xlu0 %1821
        %1823 = vrot.lane.b32.xlu0 %v1698, 64
        %v1824 = vpop.permute.xlu0 %1823
        %1825 = vrot.lane.b32.xlu0 %v1706, 64
        %v1826 = vpop.permute.xlu0 %1825
        %1827 = vrot.lane.b32.xlu0 %v1714, 64
        %v1828 = vpop.permute.xlu0 %1827
        %1829 = vrot.lane.b32.xlu0 %v1722, 64
        %v1830 = vpop.permute.xlu0 %1829
        %1831 = vrot.lane.b32.xlu0 %v1730, 64
        %v1832 = vpop.permute.xlu0 %1831
        %1833 = vrot.lane.b32.xlu0 %v1738, 64
        %v1834 = vpop.permute.xlu0 %1833
        %1835 = vrot.lane.b32.xlu0 %v1746, 64
        %v1836 = vpop.permute.xlu0 %1835
        %1837 = vrot.lane.b32.xlu0 %v1754, 64
        %v1838 = vpop.permute.xlu0 %1837
        %1839 = vrot.lane.b32.xlu0 %v1762, 64
        %v1840 = vpop.permute.xlu0 %1839
        %1841 = vrot.lane.b32.xlu0 %v1770, 64
        %v1842 = vpop.permute.xlu0 %1841
        %1843 = vrot.lane.b32.xlu0 %v1778, 64
        %v1844 = vpop.permute.xlu0 %1843
        %1845 = vrot.lane.b32.xlu0 %v1786, 64
        %v1846 = vpop.permute.xlu0 %1845
        %vm1878 = vcmask 1046528
        %v1879 = vrot.slane %v1508, 1
        %v1880 = vrot.slane %v1509, 1
        %v1881 = vsel %vm1878, %v1879, %v1880
        %v1882 = vrot.slane %v1510, 1
        %v1883 = vsel %vm1878, %v1880, %v1882
        %v1884 = vrot.slane %v1511, 1
        %v1885 = vsel %vm1878, %v1882, %v1884
        %v1886 = vrot.slane %v1512, 1
        %v1887 = vsel %vm1878, %v1884, %v1886
        %v1888 = vrot.slane %v1513, 1
        %v1889 = vsel %vm1878, %v1886, %v1888
        %v1890 = vrot.slane %v1514, 1
        %v1891 = vsel %vm1878, %v1888, %v1890
        %v1892 = vrot.slane %v1515, 1
        %v1893 = vsel %vm1878, %v1890, %v1892
        %v1894 = vrot.slane %v1516, 1
        %v1895 = vsel %vm1878, %v1892, %v1894
        %v1896 = vrot.slane %v1517, 1
        %v1897 = vsel %vm1878, %v1894, %v1896
        %v1898 = vrot.slane %v1518, 1
        %v1899 = vsel %vm1878, %v1896, %v1898
        %v1900 = vrot.slane %v1519, 1
        %v1901 = vsel %vm1878, %v1898, %v1900
        %v1902 = vrot.slane %v1520, 1
        %v1903 = vsel %vm1878, %v1900, %v1902
        %v1904 = vrot.slane %v1521, 1
        %v1905 = vsel %vm1878, %v1902, %v1904
        %v1906 = vrot.slane %v1522, 1
        %v1907 = vsel %vm1878, %v1904, %v1906
        %v1908 = vrot.slane %v1523, 1
        %v1909 = vsel %vm1878, %v1906, %v1908
        %v1910 = vrot.slane %v1524, 1
        %v1911 = vsel %vm1878, %v1908, %v1910
        %v1912 = vrot.slane %v1525, 1
        %v1913 = vsel %vm1878, %v1910, %v1912
        %v1914 = vrot.slane %v1526, 1
        %v1915 = vsel %vm1878, %v1912, %v1914
        %v1916 = vrot.slane %v1527, 1
        %v1917 = vsel %vm1878, %v1914, %v1916
        %v1918 = vrot.slane %v1528, 1
        %v1919 = vsel %vm1878, %v1916, %v1918
        %v1920 = vrot.slane %v1529, 1
        %v1921 = vsel %vm1878, %v1918, %v1920
        %v1922 = vrot.slane %v1530, 1
        %v1923 = vsel %vm1878, %v1920, %v1922
        %v1924 = vrot.slane %v1531, 1
        %v1925 = vsel %vm1878, %v1922, %v1924
        %v1926 = vrot.slane %v1532, 1
        %v1927 = vsel %vm1878, %v1924, %v1926
        %v1928 = vrot.slane %v1533, 1
        %v1929 = vsel %vm1878, %v1926, %v1928
        %v1930 = vrot.slane %v1534, 1
        %v1931 = vsel %vm1878, %v1928, %v1930
        %v1932 = vrot.slane %v1535, 1
        %v1933 = vsel %vm1878, %v1930, %v1932
        %v1934 = vrot.slane %v1536, 1
        %v1935 = vsel %vm1878, %v1932, %v1934
        %v1936 = vrot.slane %v1537, 1
        %v1937 = vsel %vm1878, %v1934, %v1936
        %v1938 = vrot.slane %v1538, 1
        %v1939 = vsel %vm1878, %v1936, %v1938
        %vm1941 = vcmask 1043456
        %v1942 = vrot.slane %v1509, 4
        %v1943 = vrot.slane %v1510, 4
        %v1944 = vsel %vm1941, %v1942, %v1943
        %v1945 = vrot.slane %v1511, 4
        %v1946 = vsel %vm1941, %v1943, %v1945
        %v1947 = vrot.slane %v1512, 4
        %v1948 = vsel %vm1941, %v1945, %v1947
        %v1949 = vrot.slane %v1513, 4
        %v1950 = vsel %vm1941, %v1947, %v1949
        %v1951 = vrot.slane %v1514, 4
        %v1952 = vsel %vm1941, %v1949, %v1951
        %v1953 = vrot.slane %v1515, 4
        %v1954 = vsel %vm1941, %v1951, %v1953
        %v1955 = vrot.slane %v1516, 4
        %v1956 = vsel %vm1941, %v1953, %v1955
        %v1957 = vrot.slane %v1517, 4
        %v1958 = vsel %vm1941, %v1955, %v1957
        %v1959 = vrot.slane %v1518, 4
        %v1960 = vsel %vm1941, %v1957, %v1959
        %v1961 = vrot.slane %v1519, 4
        %v1962 = vsel %vm1941, %v1959, %v1961
        %v1963 = vrot.slane %v1520, 4
        %v1964 = vsel %vm1941, %v1961, %v1963
        %v1965 = vrot.slane %v1521, 4
        %v1966 = vsel %vm1941, %v1963, %v1965
        %v1967 = vrot.slane %v1522, 4
        %v1968 = vsel %vm1941, %v1965, %v1967
        %v1969 = vrot.slane %v1523, 4
        %v1970 = vsel %vm1941, %v1967, %v1969
        %v1971 = vrot.slane %v1524, 4
        %v1972 = vsel %vm1941, %v1969, %v1971
        %v1973 = vrot.slane %v1525, 4
        %v1974 = vsel %vm1941, %v1971, %v1973
        %v1975 = vrot.slane %v1526, 4
        %v1976 = vsel %vm1941, %v1973, %v1975
        %v1977 = vrot.slane %v1527, 4
        %v1978 = vsel %vm1941, %v1975, %v1977
        %v1979 = vrot.slane %v1528, 4
        %v1980 = vsel %vm1941, %v1977, %v1979
        %v1981 = vrot.slane %v1529, 4
        %v1982 = vsel %vm1941, %v1979, %v1981
        %v1983 = vrot.slane %v1530, 4
        %v1984 = vsel %vm1941, %v1981, %v1983
        %v1985 = vrot.slane %v1531, 4
        %v1986 = vsel %vm1941, %v1983, %v1985
        %v1987 = vrot.slane %v1532, 4
        %v1988 = vsel %vm1941, %v1985, %v1987
        %v1989 = vrot.slane %v1533, 4
        %v1990 = vsel %vm1941, %v1987, %v1989
        %v1991 = vrot.slane %v1534, 4
        %v1992 = vsel %vm1941, %v1989, %v1991
        %v1993 = vrot.slane %v1535, 4
        %v1994 = vsel %vm1941, %v1991, %v1993
        %v1995 = vrot.slane %v1536, 4
        %v1996 = vsel %vm1941, %v1993, %v1995
        %v1997 = vrot.slane %v1537, 4
        %v1998 = vsel %vm1941, %v1995, %v1997
        %v1999 = vrot.slane %v1538, 4
        %v2000 = vsel %vm1941, %v1997, %v1999
        %v2001 = vrot.slane %v1539, 4
        %v2002 = vsel %vm1941, %v1999, %v2001
        %2003 = vrot.lane.b32.xlu0 %v1944, 64
        %v2004 = vpop.permute.xlu0 %2003
        %2005 = vrot.lane.b32.xlu0 %v1946, 64
        %v2006 = vpop.permute.xlu0 %2005
        %2007 = vrot.lane.b32.xlu0 %v1948, 64
        %v2008 = vpop.permute.xlu0 %2007
        %2009 = vrot.lane.b32.xlu0 %v1950, 64
        %v2010 = vpop.permute.xlu0 %2009
        %2011 = vrot.lane.b32.xlu0 %v1952, 64
        %v2012 = vpop.permute.xlu0 %2011
        %2013 = vrot.lane.b32.xlu0 %v1954, 64
        %v2014 = vpop.permute.xlu0 %2013
        %2015 = vrot.lane.b32.xlu0 %v1956, 64
        %v2016 = vpop.permute.xlu0 %2015
        %2017 = vrot.lane.b32.xlu0 %v1958, 64
        %v2018 = vpop.permute.xlu0 %2017
        %2019 = vrot.lane.b32.xlu0 %v1960, 64
        %v2020 = vpop.permute.xlu0 %2019
        %2021 = vrot.lane.b32.xlu0 %v1962, 64
        %v2022 = vpop.permute.xlu0 %2021
        %2023 = vrot.lane.b32.xlu0 %v1964, 64
        %v2024 = vpop.permute.xlu0 %2023
        %2025 = vrot.lane.b32.xlu0 %v1966, 64
        %v2026 = vpop.permute.xlu0 %2025
        %2027 = vrot.lane.b32.xlu0 %v1968, 64
        %v2028 = vpop.permute.xlu0 %2027
        %2029 = vrot.lane.b32.xlu0 %v1970, 64
        %v2030 = vpop.permute.xlu0 %2029
        %2031 = vrot.lane.b32.xlu0 %v1972, 64
        %v2032 = vpop.permute.xlu0 %2031
        %2033 = vrot.lane.b32.xlu0 %v1974, 64
        %v2034 = vpop.permute.xlu0 %2033
        %2035 = vrot.lane.b32.xlu0 %v1976, 64
        %v2036 = vpop.permute.xlu0 %2035
        %2037 = vrot.lane.b32.xlu0 %v1978, 64
        %v2038 = vpop.permute.xlu0 %2037
        %2039 = vrot.lane.b32.xlu0 %v1980, 64
        %v2040 = vpop.permute.xlu0 %2039
        %2041 = vrot.lane.b32.xlu0 %v1982, 64
        %v2042 = vpop.permute.xlu0 %2041
        %2043 = vrot.lane.b32.xlu0 %v1984, 64
        %v2044 = vpop.permute.xlu0 %2043
        %2045 = vrot.lane.b32.xlu0 %v1986, 64
        %v2046 = vpop.permute.xlu0 %2045
        %2047 = vrot.lane.b32.xlu0 %v1988, 64
        %v2048 = vpop.permute.xlu0 %2047
        %2049 = vrot.lane.b32.xlu0 %v1990, 64
        %v2050 = vpop.permute.xlu0 %2049
        %2051 = vrot.lane.b32.xlu0 %v1992, 64
        %v2052 = vpop.permute.xlu0 %2051
        %2053 = vrot.lane.b32.xlu0 %v1994, 64
        %v2054 = vpop.permute.xlu0 %2053
        %2055 = vrot.lane.b32.xlu0 %v1996, 64
        %v2056 = vpop.permute.xlu0 %2055
        %2057 = vrot.lane.b32.xlu0 %v1998, 64
        %v2058 = vpop.permute.xlu0 %2057
        %2059 = vrot.lane.b32.xlu0 %v2000, 64
        %v2060 = vpop.permute.xlu0 %2059
        %2061 = vrot.lane.b32.xlu0 %v2002, 64
        %v2062 = vpop.permute.xlu0 %2061
        %vm2063 = vsmask.f32 3328
        %v2064 = vrot.slane %v1555, 4
        %v2065 = vrot.slane %v1551, 5
        %v2066 = vor.u32 %v2064, %v2065
        %v2067 = vrot.slane %v1563, 4
        %v2068 = vrot.slane %v1559, 5
        %v2069 = vor.u32 %v2067, %v2068
        %v2070 = vsel %vm2063, %v2066, %v2069
        %v2071 = vrot.slane %v1571, 4
        %v2072 = vrot.slane %v1567, 5
        %v2073 = vor.u32 %v2071, %v2072
        %v2074 = vsel %vm2063, %v2069, %v2073
        %v2075 = vrot.slane %v1579, 4
        %v2076 = vrot.slane %v1575, 5
        %v2077 = vor.u32 %v2075, %v2076
        %v2078 = vsel %vm2063, %v2073, %v2077
        %v2079 = vrot.slane %v1587, 4
        %v2080 = vrot.slane %v1583, 5
        %v2081 = vor.u32 %v2079, %v2080
        %v2082 = vsel %vm2063, %v2077, %v2081
        %v2083 = vrot.slane %v1595, 4
        %v2084 = vrot.slane %v1591, 5
        %v2085 = vor.u32 %v2083, %v2084
        %v2086 = vsel %vm2063, %v2081, %v2085
        %v2087 = vrot.slane %v1603, 4
        %v2088 = vrot.slane %v1599, 5
        %v2089 = vor.u32 %v2087, %v2088
        %v2090 = vsel %vm2063, %v2085, %v2089
        %v2091 = vrot.slane %v1611, 4
        %v2092 = vrot.slane %v1607, 5
        %v2093 = vor.u32 %v2091, %v2092
        %v2094 = vsel %vm2063, %v2089, %v2093
        %v2095 = vrot.slane %v1619, 4
        %v2096 = vrot.slane %v1615, 5
        %v2097 = vor.u32 %v2095, %v2096
        %v2098 = vsel %vm2063, %v2093, %v2097
        %v2099 = vrot.slane %v1627, 4
        %v2100 = vrot.slane %v1623, 5
        %v2101 = vor.u32 %v2099, %v2100
        %v2102 = vsel %vm2063, %v2097, %v2101
        %v2103 = vrot.slane %v1635, 4
        %v2104 = vrot.slane %v1631, 5
        %v2105 = vor.u32 %v2103, %v2104
        %v2106 = vsel %vm2063, %v2101, %v2105
        %v2107 = vrot.slane %v1643, 4
        %v2108 = vrot.slane %v1639, 5
        %v2109 = vor.u32 %v2107, %v2108
        %v2110 = vsel %vm2063, %v2105, %v2109
        %v2111 = vrot.slane %v1651, 4
        %v2112 = vrot.slane %v1647, 5
        %v2113 = vor.u32 %v2111, %v2112
        %v2114 = vsel %vm2063, %v2109, %v2113
        %v2115 = vrot.slane %v1659, 4
        %v2116 = vrot.slane %v1655, 5
        %v2117 = vor.u32 %v2115, %v2116
        %v2118 = vsel %vm2063, %v2113, %v2117
        %v2119 = vrot.slane %v1667, 4
        %v2120 = vrot.slane %v1663, 5
        %v2121 = vor.u32 %v2119, %v2120
        %v2122 = vsel %vm2063, %v2117, %v2121
        %v2123 = vrot.slane %v1675, 4
        %v2124 = vrot.slane %v1671, 5
        %v2125 = vor.u32 %v2123, %v2124
        %v2126 = vsel %vm2063, %v2121, %v2125
        %v2127 = vrot.slane %v1683, 4
        %v2128 = vrot.slane %v1679, 5
        %v2129 = vor.u32 %v2127, %v2128
        %v2130 = vsel %vm2063, %v2125, %v2129
        %v2131 = vrot.slane %v1691, 4
        %v2132 = vrot.slane %v1687, 5
        %v2133 = vor.u32 %v2131, %v2132
        %v2134 = vsel %vm2063, %v2129, %v2133
        %v2135 = vrot.slane %v1699, 4
        %v2136 = vrot.slane %v1695, 5
        %v2137 = vor.u32 %v2135, %v2136
        %v2138 = vsel %vm2063, %v2133, %v2137
        %v2139 = vrot.slane %v1707, 4
        %v2140 = vrot.slane %v1703, 5
        %v2141 = vor.u32 %v2139, %v2140
        %v2142 = vsel %vm2063, %v2137, %v2141
        %v2143 = vrot.slane %v1715, 4
        %v2144 = vrot.slane %v1711, 5
        %v2145 = vor.u32 %v2143, %v2144
        %v2146 = vsel %vm2063, %v2141, %v2145
        %v2147 = vrot.slane %v1723, 4
        %v2148 = vrot.slane %v1719, 5
        %v2149 = vor.u32 %v2147, %v2148
        %v2150 = vsel %vm2063, %v2145, %v2149
        %v2151 = vrot.slane %v1731, 4
        %v2152 = vrot.slane %v1727, 5
        %v2153 = vor.u32 %v2151, %v2152
        %v2154 = vsel %vm2063, %v2149, %v2153
        %v2155 = vrot.slane %v1739, 4
        %v2156 = vrot.slane %v1735, 5
        %v2157 = vor.u32 %v2155, %v2156
        %v2158 = vsel %vm2063, %v2153, %v2157
        %v2159 = vrot.slane %v1747, 4
        %v2160 = vrot.slane %v1743, 5
        %v2161 = vor.u32 %v2159, %v2160
        %v2162 = vsel %vm2063, %v2157, %v2161
        %v2163 = vrot.slane %v1755, 4
        %v2164 = vrot.slane %v1751, 5
        %v2165 = vor.u32 %v2163, %v2164
        %v2166 = vsel %vm2063, %v2161, %v2165
        %v2167 = vrot.slane %v1763, 4
        %v2168 = vrot.slane %v1759, 5
        %v2169 = vor.u32 %v2167, %v2168
        %v2170 = vsel %vm2063, %v2165, %v2169
        %v2171 = vrot.slane %v1771, 4
        %v2172 = vrot.slane %v1767, 5
        %v2173 = vor.u32 %v2171, %v2172
        %v2174 = vsel %vm2063, %v2169, %v2173
        %v2175 = vrot.slane %v1779, 4
        %v2176 = vrot.slane %v1775, 5
        %v2177 = vor.u32 %v2175, %v2176
        %v2178 = vsel %vm2063, %v2173, %v2177
        %v2179 = vshrl.u32 %v1538, 16
        %v2181 = vrot.slane %v2179, 4
        %v2182 = vrot.slane %v1783, 5
        %v2183 = vor.u32 %v2181, %v2182
        %v2184 = vsel %vm2063, %v2177, %v2183
        %v2186 = vshrl.u32 %v1539, 16
        %v2188 = vrot.slane %v2186, 4
        %v2189 = vshll.u32 %v1539, 16
        %v2191 = vrot.slane %v2189, 5
        %v2192 = vor.u32 %v2188, %v2191
        %v2193 = vsel %vm2063, %v2183, %v2192
        %vm2194 = vcmask 1042432
        %v2195 = vrot.slane %v1509, 5
        %v2196 = vrot.slane %v1510, 5
        %v2197 = vsel %vm2194, %v2195, %v2196
        %v2198 = vrot.slane %v1511, 5
        %v2199 = vsel %vm2194, %v2196, %v2198
        %v2200 = vrot.slane %v1512, 5
        %v2201 = vsel %vm2194, %v2198, %v2200
        %v2202 = vrot.slane %v1513, 5
        %v2203 = vsel %vm2194, %v2200, %v2202
        %v2204 = vrot.slane %v1514, 5
        %v2205 = vsel %vm2194, %v2202, %v2204
        %v2206 = vrot.slane %v1515, 5
        %v2207 = vsel %vm2194, %v2204, %v2206
        %v2208 = vrot.slane %v1516, 5
        %v2209 = vsel %vm2194, %v2206, %v2208
        %v2210 = vrot.slane %v1517, 5
        %v2211 = vsel %vm2194, %v2208, %v2210
        %v2212 = vrot.slane %v1518, 5
        %v2213 = vsel %vm2194, %v2210, %v2212
        %v2214 = vrot.slane %v1519, 5
        %v2215 = vsel %vm2194, %v2212, %v2214
        %v2216 = vrot.slane %v1520, 5
        %v2217 = vsel %vm2194, %v2214, %v2216
        %v2218 = vrot.slane %v1521, 5
        %v2219 = vsel %vm2194, %v2216, %v2218
        %v2220 = vrot.slane %v1522, 5
        %v2221 = vsel %vm2194, %v2218, %v2220
        %v2222 = vrot.slane %v1523, 5
        %v2223 = vsel %vm2194, %v2220, %v2222
        %v2224 = vrot.slane %v1524, 5
        %v2225 = vsel %vm2194, %v2222, %v2224
        %v2226 = vrot.slane %v1525, 5
        %v2227 = vsel %vm2194, %v2224, %v2226
        %v2228 = vrot.slane %v1526, 5
        %v2229 = vsel %vm2194, %v2226, %v2228
        %v2230 = vrot.slane %v1527, 5
        %v2231 = vsel %vm2194, %v2228, %v2230
        %v2232 = vrot.slane %v1528, 5
        %v2233 = vsel %vm2194, %v2230, %v2232
        %v2234 = vrot.slane %v1529, 5
        %v2235 = vsel %vm2194, %v2232, %v2234
        %v2236 = vrot.slane %v1530, 5
        %v2237 = vsel %vm2194, %v2234, %v2236
        %v2238 = vrot.slane %v1531, 5
        %v2239 = vsel %vm2194, %v2236, %v2238
        %v2240 = vrot.slane %v1532, 5
        %v2241 = vsel %vm2194, %v2238, %v2240
        %v2242 = vrot.slane %v1533, 5
        %v2243 = vsel %vm2194, %v2240, %v2242
        %v2244 = vrot.slane %v1534, 5
        %v2245 = vsel %vm2194, %v2242, %v2244
        %v2246 = vrot.slane %v1535, 5
        %v2247 = vsel %vm2194, %v2244, %v2246
        %v2248 = vrot.slane %v1536, 5
        %v2249 = vsel %vm2194, %v2246, %v2248
        %v2250 = vrot.slane %v1537, 5
        %v2251 = vsel %vm2194, %v2248, %v2250
        %v2252 = vrot.slane %v1538, 5
        %v2253 = vsel %vm2194, %v2250, %v2252
        %v2254 = vrot.slane %v1539, 5
        %v2255 = vsel %vm2194, %v2252, %v2254
        %2256 = vrot.lane.b32.xlu0 %v2197, 64
        %v2257 = vpop.permute.xlu0 %2256
        %2258 = vrot.lane.b32.xlu0 %v2199, 64
        %v2259 = vpop.permute.xlu0 %2258
        %2260 = vrot.lane.b32.xlu0 %v2201, 64
        %v2261 = vpop.permute.xlu0 %2260
        %2262 = vrot.lane.b32.xlu0 %v2203, 64
        %v2263 = vpop.permute.xlu0 %2262
        %2264 = vrot.lane.b32.xlu0 %v2205, 64
        %v2265 = vpop.permute.xlu0 %2264
        %2266 = vrot.lane.b32.xlu0 %v2207, 64
        %v2267 = vpop.permute.xlu0 %2266
        %2268 = vrot.lane.b32.xlu0 %v2209, 64
        %v2269 = vpop.permute.xlu0 %2268
        %2270 = vrot.lane.b32.xlu0 %v2211, 64
        %v2271 = vpop.permute.xlu0 %2270
        %2272 = vrot.lane.b32.xlu0 %v2213, 64
        %v2273 = vpop.permute.xlu0 %2272
        %2274 = vrot.lane.b32.xlu0 %v2215, 64
        %v2275 = vpop.permute.xlu0 %2274
        %2276 = vrot.lane.b32.xlu0 %v2217, 64
        %v2277 = vpop.permute.xlu0 %2276
        %2278 = vrot.lane.b32.xlu0 %v2219, 64
        %v2279 = vpop.permute.xlu0 %2278
        %2280 = vrot.lane.b32.xlu0 %v2221, 64
        %v2281 = vpop.permute.xlu0 %2280
        %2282 = vrot.lane.b32.xlu0 %v2223, 64
        %v2283 = vpop.permute.xlu0 %2282
        %2284 = vrot.lane.b32.xlu0 %v2225, 64
        %v2285 = vpop.permute.xlu0 %2284
        %2286 = vrot.lane.b32.xlu0 %v2227, 64
        %v2287 = vpop.permute.xlu0 %2286
        %2288 = vrot.lane.b32.xlu0 %v2229, 64
        %v2289 = vpop.permute.xlu0 %2288
        %2290 = vrot.lane.b32.xlu0 %v2231, 64
        %v2291 = vpop.permute.xlu0 %2290
        %2292 = vrot.lane.b32.xlu0 %v2233, 64
        %v2293 = vpop.permute.xlu0 %2292
        %2294 = vrot.lane.b32.xlu0 %v2235, 64
        %v2295 = vpop.permute.xlu0 %2294
        %2296 = vrot.lane.b32.xlu0 %v2237, 64
        %v2297 = vpop.permute.xlu0 %2296
        %2298 = vrot.lane.b32.xlu0 %v2239, 64
        %v2299 = vpop.permute.xlu0 %2298
        %2300 = vrot.lane.b32.xlu0 %v2241, 64
        %v2301 = vpop.permute.xlu0 %2300
        %2302 = vrot.lane.b32.xlu0 %v2243, 64
        %v2303 = vpop.permute.xlu0 %2302
        %2304 = vrot.lane.b32.xlu0 %v2245, 64
        %v2305 = vpop.permute.xlu0 %2304
        %2306 = vrot.lane.b32.xlu0 %v2247, 64
        %v2307 = vpop.permute.xlu0 %2306
        %2308 = vrot.lane.b32.xlu0 %v2249, 64
        %v2309 = vpop.permute.xlu0 %2308
        %2310 = vrot.lane.b32.xlu0 %v2251, 64
        %v2311 = vpop.permute.xlu0 %2310
        %2312 = vrot.lane.b32.xlu0 %v2253, 64
        %v2313 = vpop.permute.xlu0 %2312
        %2314 = vrot.lane.b32.xlu0 %v2255, 64
        %v2315 = vpop.permute.xlu0 %2314
        %v2316 = vor.u32 %v2179, %v1785
        %v2317 = vrot.slane %v2189, 1
        %v2318 = vsel %vm1542, %v2316, %v2317
        %v2319 = vor.u32 %v2186, %v2317
        %v2321 = vshll.u32 %v1540, 16
        %v2323 = vrot.slane %v2321, 1
        %v2324 = vsel %vm1542, %v2319, %v2323
        %v2325 = vshrl.u32 %v1540, 16
        %v2327 = vor.u32 %v2325, %v2323
        %v2329 = vshll.u32 %v1541, 16
        %v2331 = vrot.slane %v2329, 1
        %v2332 = vsel %vm1542, %v2327, %v2331
        %2333 = vrot.lane.b32.xlu0 %v2318, 64
        %v2334 = vpop.permute.xlu0 %2333
        %2335 = vrot.lane.b32.xlu0 %v2324, 64
        %v2336 = vpop.permute.xlu0 %2335
        %2337 = vrot.lane.b32.xlu0 %v2332, 64
        %v2338 = vpop.permute.xlu0 %2337
        %v2341 = vrot.slane %v1539, 1
        %v2342 = vsel %vm1878, %v1938, %v2341
        %v2343 = vrot.slane %v1540, 1
        %v2344 = vsel %vm1878, %v2341, %v2343
        %v2345 = vrot.slane %v1541, 1
        %v2346 = vsel %vm1878, %v2343, %v2345
        %vm2347 = vcmask 523264
        %v2349 = vsel %vm2347, %v1508, %v1788
        %v2352 = vsel %vm2347, %v1509, %v1790
        %v2355 = vsel %vm2347, %v1510, %v1792
        %v2358 = vsel %vm2347, %v1511, %v1794
        %v2361 = vsel %vm2347, %v1512, %v1796
        %v2364 = vsel %vm2347, %v1513, %v1798
        %v2367 = vsel %vm2347, %v1514, %v1800
        %v2370 = vsel %vm2347, %v1515, %v1802
        %v2373 = vsel %vm2347, %v1516, %v1804
        %v2376 = vsel %vm2347, %v1517, %v1806
        %v2379 = vsel %vm2347, %v1518, %v1808
        %v2382 = vsel %vm2347, %v1519, %v1810
        %v2385 = vsel %vm2347, %v1520, %v1812
        %v2388 = vsel %vm2347, %v1521, %v1814
        %v2391 = vsel %vm2347, %v1522, %v1816
        %v2394 = vsel %vm2347, %v1523, %v1818
        %v2397 = vsel %vm2347, %v1524, %v1820
        %v2400 = vsel %vm2347, %v1525, %v1822
        %v2403 = vsel %vm2347, %v1526, %v1824
        %v2406 = vsel %vm2347, %v1527, %v1826
        %v2409 = vsel %vm2347, %v1528, %v1828
        %v2412 = vsel %vm2347, %v1529, %v1830
        %v2415 = vsel %vm2347, %v1530, %v1832
        %v2418 = vsel %vm2347, %v1531, %v1834
        %v2421 = vsel %vm2347, %v1532, %v1836
        %v2424 = vsel %vm2347, %v1533, %v1838
        %v2427 = vsel %vm2347, %v1534, %v1840
        %v2430 = vsel %vm2347, %v1535, %v1842
        %v2433 = vsel %vm2347, %v1536, %v1844
        %v2436 = vsel %vm2347, %v1537, %v1846
        %v2440 = vsel %vm2347, %v1881, %v2004
        %v2444 = vsel %vm2347, %v1883, %v2006
        %v2448 = vsel %vm2347, %v1885, %v2008
        %v2452 = vsel %vm2347, %v1887, %v2010
        %v2456 = vsel %vm2347, %v1889, %v2012
        %v2460 = vsel %vm2347, %v1891, %v2014
        %v2464 = vsel %vm2347, %v1893, %v2016
        %v2468 = vsel %vm2347, %v1895, %v2018
        %v2472 = vsel %vm2347, %v1897, %v2020
        %v2476 = vsel %vm2347, %v1899, %v2022
        %v2480 = vsel %vm2347, %v1901, %v2024
        %v2484 = vsel %vm2347, %v1903, %v2026
        %v2488 = vsel %vm2347, %v1905, %v2028
        %v2492 = vsel %vm2347, %v1907, %v2030
        %v2496 = vsel %vm2347, %v1909, %v2032
        %v2500 = vsel %vm2347, %v1911, %v2034
        %v2504 = vsel %vm2347, %v1913, %v2036
        %v2508 = vsel %vm2347, %v1915, %v2038
        %v2512 = vsel %vm2347, %v1917, %v2040
        %v2516 = vsel %vm2347, %v1919, %v2042
        %v2520 = vsel %vm2347, %v1921, %v2044
        %v2524 = vsel %vm2347, %v1923, %v2046
        %v2528 = vsel %vm2347, %v1925, %v2048
        %v2532 = vsel %vm2347, %v1927, %v2050
        %v2536 = vsel %vm2347, %v1929, %v2052
        %v2540 = vsel %vm2347, %v1931, %v2054
        %v2544 = vsel %vm2347, %v1933, %v2056
        %v2548 = vsel %vm2347, %v1935, %v2058
        %v2552 = vsel %vm2347, %v1937, %v2060
        %v2556 = vsel %vm2347, %v1939, %v2062
        %v2560 = vsel %vm2347, %v2070, %v2257
        %v2564 = vsel %vm2347, %v2074, %v2259
        %v2568 = vsel %vm2347, %v2078, %v2261
        %v2572 = vsel %vm2347, %v2082, %v2263
        %v2576 = vsel %vm2347, %v2086, %v2265
        %v2580 = vsel %vm2347, %v2090, %v2267
        %v2584 = vsel %vm2347, %v2094, %v2269
        %v2588 = vsel %vm2347, %v2098, %v2271
        %v2592 = vsel %vm2347, %v2102, %v2273
        %v2596 = vsel %vm2347, %v2106, %v2275
        %v2600 = vsel %vm2347, %v2110, %v2277
        %v2604 = vsel %vm2347, %v2114, %v2279
        %v2608 = vsel %vm2347, %v2118, %v2281
        %v2612 = vsel %vm2347, %v2122, %v2283
        %v2616 = vsel %vm2347, %v2126, %v2285
        %v2620 = vsel %vm2347, %v2130, %v2287
        %v2624 = vsel %vm2347, %v2134, %v2289
        %v2628 = vsel %vm2347, %v2138, %v2291
        %v2632 = vsel %vm2347, %v2142, %v2293
        %v2636 = vsel %vm2347, %v2146, %v2295
        %v2640 = vsel %vm2347, %v2150, %v2297
        %v2644 = vsel %vm2347, %v2154, %v2299
        %v2648 = vsel %vm2347, %v2158, %v2301
        %v2652 = vsel %vm2347, %v2162, %v2303
        %v2656 = vsel %vm2347, %v2166, %v2305
        %v2660 = vsel %vm2347, %v2170, %v2307
        %v2664 = vsel %vm2347, %v2174, %v2309
        %v2668 = vsel %vm2347, %v2178, %v2311
        %v2672 = vsel %vm2347, %v2184, %v2313
        %v2676 = vsel %vm2347, %v2193, %v2315
        %v2679 = vsel %vm2347, %v1538, %v2334
        %v2682 = vsel %vm2347, %v1539, %v2336
        %v2685 = vsel %vm2347, %v1540, %v2338
        %v2687 = vld [vmem:[%s3] sm:$0xf]
        %v2688 = vld [vmem:[%s3 + $0x4] sm:$0xf]
        %v2689 = vld [vmem:[%s3 + $0x8] sm:$0xf]
        %v2690 = vld [vmem:[%s3 + $0xc] sm:$0xf]
        %v2691 = vld [vmem:[%s3 + $0x10] sm:$0xf]
        %v2692 = vld [vmem:[%s3 + $0x14] sm:$0xf]
        %v2693 = vld [vmem:[%s3 + $0x18] sm:$0xf]
        %v2694 = vld [vmem:[%s3 + $0x1c] sm:$0xf]
        %v2695 = vld [vmem:[%s3 + $0x20] sm:$0xf]
        %v2696 = vld [vmem:[%s3 + $0x24] sm:$0xf]
        %v2697 = vld [vmem:[%s3 + $0x28] sm:$0xf]
        %v2698 = vld [vmem:[%s3 + $0x2c] sm:$0xf]
        %v2699 = vld [vmem:[%s3 + $0x30] sm:$0xf]
        %v2700 = vld [vmem:[%s3 + $0x34] sm:$0xf]
        %v2701 = vld [vmem:[%s3 + $0x38] sm:$0xf]
        %v2702 = vld [vmem:[%s3 + $0x3c] sm:$0xf]
        %v2703 = vld [vmem:[%s3 + $0x40] sm:$0xf]
        %v2704 = vld [vmem:[%s3 + $0x44] sm:$0xf]
        %v2705 = vld [vmem:[%s3 + $0x48] sm:$0xf]
        %v2706 = vld [vmem:[%s3 + $0x4c] sm:$0xf]
        %v2707 = vld [vmem:[%s3 + $0x50] sm:$0xf]
        %v2708 = vld [vmem:[%s3 + $0x54] sm:$0xf]
        %v2709 = vld [vmem:[%s3 + $0x58] sm:$0xf]
        %v2710 = vld [vmem:[%s3 + $0x5c] sm:$0xf]
        %v2711 = vld [vmem:[%s3 + $0x60] sm:$0xf]
        %v2712 = vld [vmem:[%s3 + $0x64] sm:$0xf]
        %v2713 = vld [vmem:[%s3 + $0x68] sm:$0xf]
        %v2714 = vld [vmem:[%s3 + $0x6c] sm:$0xf]
        %v2715 = vld [vmem:[%s3 + $0x70] sm:$0xf]
        %v2716 = vld [vmem:[%s3 + $0x74] sm:$0xf]
        %v2717 = vld [vmem:[%s3 + $0x78] sm:$0xf]
        %v2718 = vld [vmem:[%s3 + $0x7c] sm:$0xf]
        %v2719 = vld [vmem:[%s3 + $0x80] sm:$0xf]
        %v2720 = vld [vmem:[%s3 + $0x84] sm:$0xf]
        %v2721 = vld [vmem:[%s3 + $0x88] sm:$0xf]
        %v2722 = vld [vmem:[%s3 + $0x8c] sm:$0xf]
        %v2723 = vld [vmem:[%s3 + $0x90] sm:$0xf]
        %v2724 = vld [vmem:[%s3 + $0x94] sm:$0xf]
        %v2725 = vld [vmem:[%s3 + $0x98] sm:$0xf]
        %v2726 = vld [vmem:[%s3 + $0x9c] sm:$0xf]
        %v2727 = vld [vmem:[%s3 + $0xa0] sm:$0xf]
        %v2728 = vld [vmem:[%s3 + $0xa4] sm:$0xf]
        %v2729 = vld [vmem:[%s3 + $0xa8] sm:$0xf]
        %v2730 = vld [vmem:[%s3 + $0xac] sm:$0xf]
        %v2731 = vld [vmem:[%s3 + $0xb0] sm:$0xf]
        %v2732 = vld [vmem:[%s3 + $0xb4] sm:$0xf]
        %v2733 = vld [vmem:[%s3 + $0xb8] sm:$0xf]
        %v2734 = vld [vmem:[%s3 + $0xbc] sm:$0xf]
        %v2735 = vld [vmem:[%s3 + $0xc0] sm:$0xf]
        %v2736 = vld [vmem:[%s3 + $0xc4] sm:$0xf]
        %v2737 = vld [vmem:[%s3 + $0xc8] sm:$0xf]
        %v2738 = vld [vmem:[%s3 + $0xcc] sm:$0xf]
        %v2739 = vld [vmem:[%s3 + $0xd0] sm:$0xf]
        %v2740 = vld [vmem:[%s3 + $0xd4] sm:$0xf]
        %v2741 = vld [vmem:[%s3 + $0xd8] sm:$0xf]
        %v2742 = vld [vmem:[%s3 + $0xdc] sm:$0xf]
        %v2743 = vld [vmem:[%s3 + $0xe0] sm:$0xf]
        %v2744 = vld [vmem:[%s3 + $0xe4] sm:$0xf]
        %v2745 = vld [vmem:[%s3 + $0xe8] sm:$0xf]
        %v2746 = vld [vmem:[%s3 + $0xec] sm:$0xf]
        %v2747 = vld [vmem:[%s3 + $0xf0] sm:$0xf]
        %v2748 = vld [vmem:[%s3 + $0xf4] sm:$0xf]
        %v2749 = vld [vmem:[%s3 + $0xf8] sm:$0xf]
        %v2750 = vld [vmem:[%s3 + $0xfc] sm:$0xf]
        %v2751 = vld [vmem:[%s3 + $0x100] sm:$0xf]
        %v2752 = vld [vmem:[%s3 + $0x104] sm:$0xf]
        %v2753 = vld [vmem:[%s3 + $0x108] sm:$0xf]
        %v2754 = vld [vmem:[%s3 + $0x10c] sm:$0xf]
        %v2755 = vld [vmem:[%s3 + $0x110] sm:$0xf]
        %v2756 = vld [vmem:[%s3 + $0x114] sm:$0xf]
        %v2757 = vld [vmem:[%s3 + $0x118] sm:$0xf]
        %v2758 = vld [vmem:[%s3 + $0x11c] sm:$0xf]
        %v2759 = vld [vmem:[%s4] sm:$0x1]
        %v2761 = vlaneseq
        %v2762 = vshrl.u32 %v2761, 7
        %v2763 = vsub.s32 0, %v2762
        %v2764 = vrot.slane %v2759, %v2763
        %v2838 = vunpack.c.l.b16 %v2687
        %v2839 = vunpack.c.l.b16 %v2688
        %v2840 = vunpack.c.l.b16 %v2689
        %v2841 = vunpack.c.l.b16 %v2690
        %v2842 = vunpack.c.l.b16 %v2691
        %v2843 = vunpack.c.l.b16 %v2692
        %v2844 = vunpack.c.l.b16 %v2693
        %v2845 = vunpack.c.l.b16 %v2694
        %v2846 = vunpack.c.l.b16 %v2695
        %v2847 = vunpack.c.l.b16 %v2696
        %v2848 = vunpack.c.l.b16 %v2697
        %v2849 = vunpack.c.l.b16 %v2698
        %v2850 = vunpack.c.l.b16 %v2699
        %v2851 = vunpack.c.l.b16 %v2700
        %v2852 = vunpack.c.l.b16 %v2701
        %v2853 = vunpack.c.l.b16 %v2702
        %v2854 = vunpack.c.l.b16 %v2703
        %v2855 = vunpack.c.l.b16 %v2704
        %v2856 = vunpack.c.l.b16 %v2705
        %v2857 = vunpack.c.l.b16 %v2706
        %v2858 = vunpack.c.l.b16 %v2707
        %v2859 = vunpack.c.l.b16 %v2708
        %v2860 = vunpack.c.l.b16 %v2709
        %v2861 = vunpack.c.l.b16 %v2710
        %v2862 = vunpack.c.l.b16 %v2711
        %v2863 = vunpack.c.l.b16 %v2712
        %v2864 = vunpack.c.l.b16 %v2713
        %v2865 = vunpack.c.l.b16 %v2714
        %v2866 = vunpack.c.l.b16 %v2715
        %v2867 = vunpack.c.l.b16 %v2716
        %v2868 = vunpack.c.l.b16 %v2717
        %v2869 = vunpack.c.l.b16 %v2718
        %v2870 = vunpack.c.l.b16 %v2719
        %v2871 = vunpack.c.l.b16 %v2720
        %v2872 = vunpack.c.l.b16 %v2721
        %v2873 = vunpack.c.l.b16 %v2722
        %v2874 = vunpack.c.l.b16 %v2723
        %v2875 = vunpack.c.l.b16 %v2724
        %v2876 = vunpack.c.l.b16 %v2725
        %v2877 = vunpack.c.l.b16 %v2726
        %v2878 = vunpack.c.l.b16 %v2727
        %v2879 = vunpack.c.l.b16 %v2728
        %v2880 = vunpack.c.l.b16 %v2729
        %v2881 = vunpack.c.l.b16 %v2730
        %v2882 = vunpack.c.l.b16 %v2731
        %v2883 = vunpack.c.l.b16 %v2732
        %v2884 = vunpack.c.l.b16 %v2733
        %v2885 = vunpack.c.l.b16 %v2734
        %v2886 = vunpack.c.l.b16 %v2735
        %v2887 = vunpack.c.l.b16 %v2736
        %v2888 = vunpack.c.l.b16 %v2737
        %v2889 = vunpack.c.l.b16 %v2738
        %v2890 = vunpack.c.l.b16 %v2739
        %v2891 = vunpack.c.l.b16 %v2740
        %v2892 = vunpack.c.l.b16 %v2741
        %v2893 = vunpack.c.l.b16 %v2742
        %v2894 = vunpack.c.l.b16 %v2743
        %v2895 = vunpack.c.l.b16 %v2744
        %v2896 = vunpack.c.l.b16 %v2745
        %v2897 = vunpack.c.l.b16 %v2746
        %v2898 = vunpack.c.l.b16 %v2747
        %v2899 = vunpack.c.l.b16 %v2748
        %v2900 = vunpack.c.l.b16 %v2749
        %v2901 = vunpack.c.l.b16 %v2750
        %v2902 = vunpack.c.l.b16 %v2751
        %v2903 = vunpack.c.l.b16 %v2752
        %v2904 = vunpack.c.l.b16 %v2753
        %v2905 = vunpack.c.l.b16 %v2754
        %v2906 = vunpack.c.l.b16 %v2755
        %v2907 = vunpack.c.l.b16 %v2756
        %v2908 = vunpack.c.l.b16 %v2757
        %v2909 = vunpack.c.l.b16 %v2758
        %v2910 = vpack.c.b16 %v2839, %v2838
        %v2911 = vpack.c.b16 %v2841, %v2840
        %v2912 = vpack.c.b16 %v2843, %v2842
        %v2913 = vpack.c.b16 %v2845, %v2844
        %v2914 = vpack.c.b16 %v2847, %v2846
        %v2915 = vpack.c.b16 %v2849, %v2848
        %v2916 = vpack.c.b16 %v2851, %v2850
        %v2917 = vpack.c.b16 %v2853, %v2852
        %v2918 = vpack.c.b16 %v2855, %v2854
        %v2919 = vpack.c.b16 %v2857, %v2856
        %v2920 = vpack.c.b16 %v2859, %v2858
        %v2921 = vpack.c.b16 %v2861, %v2860
        %v2922 = vpack.c.b16 %v2863, %v2862
        %v2923 = vpack.c.b16 %v2865, %v2864
        %v2924 = vpack.c.b16 %v2867, %v2866
        %v2925 = vpack.c.b16 %v2869, %v2868
        %v2926 = vpack.c.b16 %v2871, %v2870
        %v2927 = vpack.c.b16 %v2873, %v2872
        %v2928 = vpack.c.b16 %v2875, %v2874
        %v2929 = vpack.c.b16 %v2877, %v2876
        %v2930 = vpack.c.b16 %v2879, %v2878
        %v2931 = vpack.c.b16 %v2881, %v2880
        %v2932 = vpack.c.b16 %v2883, %v2882
        %v2933 = vpack.c.b16 %v2885, %v2884
        %v2934 = vpack.c.b16 %v2887, %v2886
        %v2935 = vpack.c.b16 %v2889, %v2888
        %v2936 = vpack.c.b16 %v2891, %v2890
        %v2937 = vpack.c.b16 %v2893, %v2892
        %v2938 = vpack.c.b16 %v2895, %v2894
        %v2939 = vpack.c.b16 %v2897, %v2896
        %v2940 = vpack.c.b16 %v2899, %v2898
        %v2941 = vpack.c.b16 %v2901, %v2900
        %v2942 = vpack.c.b16 %v2903, %v2902
        %v2943 = vpack.c.b16 %v2905, %v2904
        %v2944 = vpack.c.b16 %v2907, %v2906
        %v2945 = vpack.c.b16 %v2909, %v2908
        %v2982 = vsel %vm2347, %v1887, 0
        %v2984 = vsel %vm2347, %v1889, 0
        %v2986 = vsel %vm2347, %v1891, 0
        %v2988 = vsel %vm2347, %v1893, 0
        %v2990 = vsel %vm2347, %v1895, 0
        %v2992 = vsel %vm2347, %v1897, 0
        %v2994 = vsel %vm2347, %v1899, 0
        %v2996 = vsel %vm2347, %v1901, 0
        %v2998 = vsel %vm2347, %v1903, 0
        %v3000 = vsel %vm2347, %v1905, 0
        %v3002 = vsel %vm2347, %v1907, 0
        %v3004 = vsel %vm2347, %v1909, 0
        %v3006 = vsel %vm2347, %v1911, 0
        %v3008 = vsel %vm2347, %v1913, 0
        %v3010 = vsel %vm2347, %v1915, 0
        %v3012 = vsel %vm2347, %v1917, 0
        %v3014 = vsel %vm2347, %v1919, 0
        %v3016 = vsel %vm2347, %v1921, 0
        %v3018 = vsel %vm2347, %v1923, 0
        %v3020 = vsel %vm2347, %v1925, 0
        %v3022 = vsel %vm2347, %v1927, 0
        %v3024 = vsel %vm2347, %v1929, 0
        %v3026 = vsel %vm2347, %v1931, 0
        %v3028 = vsel %vm2347, %v1933, 0
        %v3030 = vsel %vm2347, %v1935, 0
        %v3032 = vsel %vm2347, %v1937, 0
        %v3034 = vsel %vm2347, %v1939, 0
        %v3037 = vsel %vm2347, %v2342, 0
        %v3040 = vsel %vm2347, %v2344, 0
        %v3043 = vsel %vm2347, %v2346, 0
        %3045 = vmatprep.subr.bf16.mxu0 0
        %3046 = vmatpush1.bf16.msra.mxu0 %v2910
        %3047 = vmatprep.subr.bf16.mxu0 0
        %3048 = vmatpush1.bf16.msra.mxu0 %v2911
        %3049 = vmatprep.subr.bf16.mxu0 0
        %3050 = vmatpush1.bf16.msra.mxu0 %v2912
        %3051 = vmatprep.subr.bf16.mxu0 0
        %3052 = vmatpush1.bf16.msra.mxu0 %v2913
        %3053 = vmatprep.subr.bf16.mxu0 0
        %3054 = vmatpush1.bf16.msra.mxu0 %v2914
        %3055 = vmatprep.subr.bf16.mxu0 0
        %3056 = vmatpush1.bf16.msra.mxu0 %v2915
        %3057 = vmatprep.subr.bf16.mxu0 0
        %3058 = vmatpush1.bf16.msra.mxu0 %v2916
        %3059 = vmatprep.subr.bf16.mxu0 0
        %3060 = vmatpush1.bf16.msra.mxu0 %v2917
        %3061 = vmatprep.subr.bf16.mxu0 0
        %3062 = vmatpush1.bf16.msra.mxu0 %v2918
        %3063 = vmatprep.subr.bf16.mxu0 0
        %3064 = vmatpush1.bf16.msra.mxu0 %v2919
        %3065 = vmatprep.subr.bf16.mxu0 0
        %3066 = vmatpush1.bf16.msra.mxu0 %v2920
        %3067 = vmatprep.subr.bf16.mxu0 0
        %3068 = vmatpush1.bf16.msra.mxu0 %v2921
        %3069 = vmatprep.subr.bf16.mxu0 0
        %3070 = vmatpush1.bf16.msra.mxu0 %v2922
        %3071 = vmatprep.subr.bf16.mxu0 0
        %3072 = vmatpush1.bf16.msra.mxu0 %v2923
        %3073 = vmatprep.subr.bf16.mxu0 0
        %3074 = vmatpush1.bf16.msra.mxu0 %v2924
        %3075 = vmatprep.subr.bf16.mxu0 0
        %3076 = vmatpush1.bf16.msra.mxu0 %v2925
        %3077 = vmatprep.mubr.bf16.mxu0 %v2440
        %3078 = vmatmul.mubr.bf16.gmra.mrb[0].mxu0 %v2349
        %v3079 = vpop.f32.mrb[0].mxu0
        %v3080 = vadd.f32 %v2764, %v3079
        %v3081 = vpop.f32.mrb[0].mxu0
        %v3082 = vpop.f32.mrb[0].mxu0
        %v3083 = vadd.f32 %v2764, %v3082
        %v3084 = vpop.f32.mrb[0].mxu0
        %3085 = vmatprep.mubr.bf16.mxu0 %v2444
        %3086 = vmatmul.mubr.bf16.gmra.mrb[0].mxu0 %v2352
        %v3087 = vpop.f32.mrb[0].mxu0
        %v3088 = vadd.f32 %v2764, %v3087
        %v3089 = vpop.f32.mrb[0].mxu0
        %v3090 = vpop.f32.mrb[0].mxu0
        %v3091 = vadd.f32 %v2764, %v3090
        %v3092 = vpop.f32.mrb[0].mxu0
        %3093 = vmatprep.mubr.bf16.mxu0 %v2448
        %3094 = vmatmul.mubr.bf16.gmra.mrb[0].mxu0 %v2355
        %v3095 = vpop.f32.mrb[0].mxu0
        %v3096 = vadd.f32 %v2764, %v3095
        %v3097 = vpop.f32.mrb[0].mxu0
        %v3098 = vpop.f32.mrb[0].mxu0
        %v3099 = vadd.f32 %v2764, %v3098
        %v3100 = vpop.f32.mrb[0].mxu0
        %3101 = vmatprep.mubr.bf16.mxu0 %v2452
        %3102 = vmatmul.mubr.bf16.gmra.mrb[0].mxu0 %v2358
        %v3103 = vpop.f32.mrb[0].mxu0
        %v3104 = vadd.f32 %v2764, %v3103
        %v3105 = vpop.f32.mrb[0].mxu0
        %v3106 = vpop.f32.mrb[0].mxu0
        %v3107 = vadd.f32 %v2764, %v3106
        %v3108 = vpop.f32.mrb[0].mxu0
        %3109 = vmatprep.mubr.bf16.mxu0 %v2456
        %3110 = vmatmul.mubr.bf16.gmra.mrb[0].mxu0 %v2361
        %v3111 = vpop.f32.mrb[0].mxu0
        %v3112 = vadd.f32 %v2764, %v3111
        %v3113 = vpop.f32.mrb[0].mxu0
        %v3114 = vpop.f32.mrb[0].mxu0
        %v3115 = vadd.f32 %v2764, %v3114
        %v3116 = vpop.f32.mrb[0].mxu0
        %3117 = vmatprep.mubr.bf16.mxu0 %v2460
        %3118 = vmatmul.mubr.bf16.gmra.mrb[0].mxu0 %v2364
        %v3119 = vpop.f32.mrb[0].mxu0
        %v3120 = vadd.f32 %v2764, %v3119
        %v3121 = vpop.f32.mrb[0].mxu0
        %v3122 = vpop.f32.mrb[0].mxu0
        %v3123 = vadd.f32 %v2764, %v3122
        %v3124 = vpop.f32.mrb[0].mxu0
        %3125 = vmatprep.mubr.bf16.mxu0 %v2464
        %3126 = vmatmul.mubr.bf16.gmra.mrb[0].mxu0 %v2367
        %v3127 = vpop.f32.mrb[0].mxu0
        %v3128 = vadd.f32 %v2764, %v3127
        %v3129 = vpop.f32.mrb[0].mxu0
        %v3130 = vpop.f32.mrb[0].mxu0
        %v3131 = vadd.f32 %v2764, %v3130
        %v3132 = vpop.f32.mrb[0].mxu0
        %3133 = vmatprep.mubr.bf16.mxu0 %v2468
        %3134 = vmatmul.mubr.bf16.gmra.mrb[0].mxu0 %v2370
        %v3135 = vpop.f32.mrb[0].mxu0
        %v3136 = vadd.f32 %v2764, %v3135
        %v3137 = vpop.f32.mrb[0].mxu0
        %v3138 = vpop.f32.mrb[0].mxu0
        %v3139 = vadd.f32 %v2764, %v3138
        %v3140 = vpop.f32.mrb[0].mxu0
        %3141 = vmatprep.mubr.bf16.mxu0 %v2472
        %3142 = vmatmul.mubr.bf16.gmra.mrb[0].mxu0 %v2373
        %v3143 = vpop.f32.mrb[0].mxu0
        %v3144 = vadd.f32 %v2764, %v3143
        %v3145 = vpop.f32.mrb[0].mxu0
        %v3146 = vpop.f32.mrb[0].mxu0
        %v3147 = vadd.f32 %v2764, %v3146
        %v3148 = vpop.f32.mrb[0].mxu0
        %3149 = vmatprep.mubr.bf16.mxu0 %v2476
        %3150 = vmatmul.mubr.bf16.gmra.mrb[0].mxu0 %v2376
        %v3151 = vpop.f32.mrb[0].mxu0
        %v3152 = vadd.f32 %v2764, %v3151
        %v3153 = vpop.f32.mrb[0].mxu0
        %v3154 = vpop.f32.mrb[0].mxu0
        %v3155 = vadd.f32 %v2764, %v3154
        %v3156 = vpop.f32.mrb[0].mxu0
        %3157 = vmatprep.mubr.bf16.mxu0 %v2480
        %3158 = vmatmul.mubr.bf16.gmra.mrb[0].mxu0 %v2379
        %v3159 = vpop.f32.mrb[0].mxu0
        %v3160 = vadd.f32 %v2764, %v3159
        %v3161 = vpop.f32.mrb[0].mxu0
        %v3162 = vpop.f32.mrb[0].mxu0
        %v3163 = vadd.f32 %v2764, %v3162
        %v3164 = vpop.f32.mrb[0].mxu0
        %3165 = vmatprep.mubr.bf16.mxu0 %v2484
        %3166 = vmatmul.mubr.bf16.gmra.mrb[0].mxu0 %v2382
        %v3167 = vpop.f32.mrb[0].mxu0
        %v3168 = vadd.f32 %v2764, %v3167
        %v3169 = vpop.f32.mrb[0].mxu0
        %v3170 = vpop.f32.mrb[0].mxu0
        %v3171 = vadd.f32 %v2764, %v3170
        %v3172 = vpop.f32.mrb[0].mxu0
        %3173 = vmatprep.mubr.bf16.mxu0 %v2488
        %3174 = vmatmul.mubr.bf16.gmra.mrb[0].mxu0 %v2385
        %v3175 = vpop.f32.mrb[0].mxu0
        %v3176 = vadd.f32 %v2764, %v3175
        %v3177 = vpop.f32.mrb[0].mxu0
        %v3178 = vpop.f32.mrb[0].mxu0
        %v3179 = vadd.f32 %v2764, %v3178
        %v3180 = vpop.f32.mrb[0].mxu0
        %3181 = vmatprep.mubr.bf16.mxu0 %v2492
        %3182 = vmatmul.mubr.bf16.gmra.mrb[0].mxu0 %v2388
        %v3183 = vpop.f32.mrb[0].mxu0
        %v3184 = vadd.f32 %v2764, %v3183
        %v3185 = vpop.f32.mrb[0].mxu0
        %v3186 = vpop.f32.mrb[0].mxu0
        %v3187 = vadd.f32 %v2764, %v3186
        %v3188 = vpop.f32.mrb[0].mxu0
        %3189 = vmatprep.mubr.bf16.mxu0 %v2496
        %3190 = vmatmul.mubr.bf16.gmra.mrb[0].mxu0 %v2391
        %v3191 = vpop.f32.mrb[0].mxu0
        %v3192 = vadd.f32 %v2764, %v3191
        %v3193 = vpop.f32.mrb[0].mxu0
        %v3194 = vpop.f32.mrb[0].mxu0
        %v3195 = vadd.f32 %v2764, %v3194
        %v3196 = vpop.f32.mrb[0].mxu0
        %3197 = vmatprep.mubr.bf16.mxu0 %v2500
        %3198 = vmatmul.mubr.bf16.gmra.mrb[0].mxu0 %v2394
        %v3199 = vpop.f32.mrb[0].mxu0
        %v3200 = vadd.f32 %v2764, %v3199
        %v3201 = vpop.f32.mrb[0].mxu0
        %v3202 = vpop.f32.mrb[0].mxu0
        %v3203 = vadd.f32 %v2764, %v3202
        %v3204 = vpop.f32.mrb[0].mxu0
        %3205 = vmatprep.mubr.bf16.mxu0 %v2504
        %3206 = vmatmul.mubr.bf16.gmra.mrb[0].mxu0 %v2397
        %v3207 = vpop.f32.mrb[0].mxu0
        %v3208 = vadd.f32 %v2764, %v3207
        %v3209 = vpop.f32.mrb[0].mxu0
        %v3210 = vpop.f32.mrb[0].mxu0
        %v3211 = vadd.f32 %v2764, %v3210
        %v3212 = vpop.f32.mrb[0].mxu0
        %3213 = vmatprep.mubr.bf16.mxu0 %v2508
        %3214 = vmatmul.mubr.bf16.gmra.mrb[0].mxu0 %v2400
        %v3215 = vpop.f32.mrb[0].mxu0
        %v3216 = vadd.f32 %v2764, %v3215
        %v3217 = vpop.f32.mrb[0].mxu0
        %v3218 = vpop.f32.mrb[0].mxu0
        %v3219 = vadd.f32 %v2764, %v3218
        %v3220 = vpop.f32.mrb[0].mxu0
        %3221 = vmatprep.mubr.bf16.mxu0 %v2512
        %3222 = vmatmul.mubr.bf16.gmra.mrb[0].mxu0 %v2403
        %v3223 = vpop.f32.mrb[0].mxu0
        %v3224 = vadd.f32 %v2764, %v3223
        %v3225 = vpop.f32.mrb[0].mxu0
        %v3226 = vpop.f32.mrb[0].mxu0
        %v3227 = vadd.f32 %v2764, %v3226
        %v3228 = vpop.f32.mrb[0].mxu0
        %3229 = vmatprep.mubr.bf16.mxu0 %v2516
        %3230 = vmatmul.mubr.bf16.gmra.mrb[0].mxu0 %v2406
        %v3231 = vpop.f32.mrb[0].mxu0
        %v3232 = vadd.f32 %v2764, %v3231
        %v3233 = vpop.f32.mrb[0].mxu0
        %v3234 = vpop.f32.mrb[0].mxu0
        %v3235 = vadd.f32 %v2764, %v3234
        %v3236 = vpop.f32.mrb[0].mxu0
        %3237 = vmatprep.mubr.bf16.mxu0 %v2520
        %3238 = vmatmul.mubr.bf16.gmra.mrb[0].mxu0 %v2409
        %v3239 = vpop.f32.mrb[0].mxu0
        %v3240 = vadd.f32 %v2764, %v3239
        %v3241 = vpop.f32.mrb[0].mxu0
        %v3242 = vpop.f32.mrb[0].mxu0
        %v3243 = vadd.f32 %v2764, %v3242
        %v3244 = vpop.f32.mrb[0].mxu0
        %3245 = vmatprep.mubr.bf16.mxu0 %v2524
        %3246 = vmatmul.mubr.bf16.gmra.mrb[0].mxu0 %v2412
        %v3247 = vpop.f32.mrb[0].mxu0
        %v3248 = vadd.f32 %v2764, %v3247
        %v3249 = vpop.f32.mrb[0].mxu0
        %v3250 = vpop.f32.mrb[0].mxu0
        %v3251 = vadd.f32 %v2764, %v3250
        %v3252 = vpop.f32.mrb[0].mxu0
        %3253 = vmatprep.mubr.bf16.mxu0 %v2528
        %3254 = vmatmul.mubr.bf16.gmra.mrb[0].mxu0 %v2415
        %v3255 = vpop.f32.mrb[0].mxu0
        %v3256 = vadd.f32 %v2764, %v3255
        %v3257 = vpop.f32.mrb[0].mxu0
        %v3258 = vpop.f32.mrb[0].mxu0
        %v3259 = vadd.f32 %v2764, %v3258
        %v3260 = vpop.f32.mrb[0].mxu0
        %3261 = vmatprep.mubr.bf16.mxu0 %v2532
        %3262 = vmatmul.mubr.bf16.gmra.mrb[0].mxu0 %v2418
        %v3263 = vpop.f32.mrb[0].mxu0
        %v3264 = vadd.f32 %v2764, %v3263
        %v3265 = vpop.f32.mrb[0].mxu0
        %v3266 = vpop.f32.mrb[0].mxu0
        %v3267 = vadd.f32 %v2764, %v3266
        %v3268 = vpop.f32.mrb[0].mxu0
        %3269 = vmatprep.mubr.bf16.mxu0 %v2536
        %3270 = vmatmul.mubr.bf16.gmra.mrb[0].mxu0 %v2421
        %v3271 = vpop.f32.mrb[0].mxu0
        %v3272 = vadd.f32 %v2764, %v3271
        %v3273 = vpop.f32.mrb[0].mxu0
        %v3274 = vpop.f32.mrb[0].mxu0
        %v3275 = vadd.f32 %v2764, %v3274
        %v3276 = vpop.f32.mrb[0].mxu0
        %3277 = vmatprep.mubr.bf16.mxu0 %v2540
        %3278 = vmatmul.mubr.bf16.gmra.mrb[0].mxu0 %v2424
        %v3279 = vpop.f32.mrb[0].mxu0
        %v3280 = vadd.f32 %v2764, %v3279
        %v3281 = vpop.f32.mrb[0].mxu0
        %v3282 = vpop.f32.mrb[0].mxu0
        %v3283 = vadd.f32 %v2764, %v3282
        %v3284 = vpop.f32.mrb[0].mxu0
        %3285 = vmatprep.mubr.bf16.mxu0 %v2544
        %3286 = vmatmul.mubr.bf16.gmra.mrb[0].mxu0 %v2427
        %v3287 = vpop.f32.mrb[0].mxu0
        %v3288 = vadd.f32 %v2764, %v3287
        %v3289 = vpop.f32.mrb[0].mxu0
        %v3290 = vpop.f32.mrb[0].mxu0
        %v3291 = vadd.f32 %v2764, %v3290
        %v3292 = vpop.f32.mrb[0].mxu0
        %3293 = vmatprep.mubr.bf16.mxu0 %v2548
        %3294 = vmatmul.mubr.bf16.gmra.mrb[0].mxu0 %v2430
        %v3295 = vpop.f32.mrb[0].mxu0
        %v3296 = vadd.f32 %v2764, %v3295
        %v3297 = vpop.f32.mrb[0].mxu0
        %v3298 = vpop.f32.mrb[0].mxu0
        %v3299 = vadd.f32 %v2764, %v3298
        %v3300 = vpop.f32.mrb[0].mxu0
        %3301 = vmatprep.mubr.bf16.mxu0 %v2552
        %3302 = vmatmul.mubr.bf16.gmra.mrb[0].mxu0 %v2433
        %v3303 = vpop.f32.mrb[0].mxu0
        %v3304 = vadd.f32 %v2764, %v3303
        %v3305 = vpop.f32.mrb[0].mxu0
        %v3306 = vpop.f32.mrb[0].mxu0
        %v3307 = vadd.f32 %v2764, %v3306
        %v3308 = vpop.f32.mrb[0].mxu0
        %3309 = vmatprep.mubr.bf16.mxu0 %v2556
        %3310 = vmatmul.mubr.bf16.gmra.mrb[0].mxu0 %v2436
        %v3311 = vpop.f32.mrb[0].mxu0
        %v3312 = vadd.f32 %v2764, %v3311
        %v3313 = vpop.f32.mrb[0].mxu0
        %v3314 = vpop.f32.mrb[0].mxu0
        %v3315 = vadd.f32 %v2764, %v3314
        %v3316 = vpop.f32.mrb[0].mxu0
        %3317 = vdwg.mxu0
        %3318 = vmatprep.subr.bf16.mxu0 0
        %3319 = vmatpush1.bf16.msra.mxu0 %v2926
        %3320 = vmatprep.subr.bf16.mxu0 0
        %3321 = vmatpush1.bf16.msra.mxu0 %v2927
        %3322 = vmatprep.subr.bf16.mxu0 0
        %3323 = vmatpush1.bf16.msra.mxu0 %v2928
        %3324 = vmatprep.subr.bf16.mxu0 0
        %3325 = vmatpush1.bf16.msra.mxu0 %v2929
        %3326 = vmatprep.subr.bf16.mxu0 0
        %3327 = vmatpush1.bf16.msra.mxu0 %v2930
        %3328 = vmatprep.subr.bf16.mxu0 0
        %3329 = vmatpush1.bf16.msra.mxu0 %v2931
        %3330 = vmatprep.subr.bf16.mxu0 0
        %3331 = vmatpush1.bf16.msra.mxu0 %v2932
        %3332 = vmatprep.subr.bf16.mxu0 0
        %3333 = vmatpush1.bf16.msra.mxu0 %v2933
        %3334 = vmatprep.subr.bf16.mxu0 0
        %3335 = vmatpush1.bf16.msra.mxu0 %v2934
        %3336 = vmatprep.subr.bf16.mxu0 0
        %3337 = vmatpush1.bf16.msra.mxu0 %v2935
        %3338 = vmatprep.subr.bf16.mxu0 0
        %3339 = vmatpush1.bf16.msra.mxu0 %v2936
        %3340 = vmatprep.subr.bf16.mxu0 0
        %3341 = vmatpush1.bf16.msra.mxu0 %v2937
        %3342 = vmatprep.subr.bf16.mxu0 0
        %3343 = vmatpush1.bf16.msra.mxu0 %v2938
        %3344 = vmatprep.subr.bf16.mxu0 0
        %3345 = vmatpush1.bf16.msra.mxu0 %v2939
        %3346 = vmatprep.subr.bf16.mxu0 0
        %3347 = vmatpush1.bf16.msra.mxu0 %v2940
        %3348 = vmatprep.subr.bf16.mxu0 0
        %3349 = vmatpush1.bf16.msra.mxu0 %v2941
        %3350 = vmatprep.mubr.bf16.mxu0 %v2358
        %3351 = vmatmul.mubr.bf16.gmra.mrb[0].mxu0 %v2560
        %v3352 = vpop.f32.mrb[0].mxu0
        %v3353 = vadd.f32 %v3080, %v3352
        %v3354 = vpop.f32.mrb[0].mxu0
        %v3355 = vpop.f32.mrb[0].mxu0
        %v3356 = vadd.f32 %v3083, %v3355
        %v3357 = vpop.f32.mrb[0].mxu0
        %3358 = vmatprep.mubr.bf16.mxu0 %v2361
        %3359 = vmatmul.mubr.bf16.gmra.mrb[0].mxu0 %v2564
        %v3360 = vpop.f32.mrb[0].mxu0
        %v3361 = vadd.f32 %v3088, %v3360
        %v3362 = vpop.f32.mrb[0].mxu0
        %v3363 = vpop.f32.mrb[0].mxu0
        %v3364 = vadd.f32 %v3091, %v3363
        %v3365 = vpop.f32.mrb[0].mxu0
        %3366 = vmatprep.mubr.bf16.mxu0 %v2364
        %3367 = vmatmul.mubr.bf16.gmra.mrb[0].mxu0 %v2568
        %v3368 = vpop.f32.mrb[0].mxu0
        %v3369 = vadd.f32 %v3096, %v3368
        %v3370 = vpop.f32.mrb[0].mxu0
        %v3371 = vpop.f32.mrb[0].mxu0
        %v3372 = vadd.f32 %v3099, %v3371
        %v3373 = vpop.f32.mrb[0].mxu0
        %3374 = vmatprep.mubr.bf16.mxu0 %v2367
        %3375 = vmatmul.mubr.bf16.gmra.mrb[0].mxu0 %v2572
        %v3376 = vpop.f32.mrb[0].mxu0
        %v3377 = vadd.f32 %v3104, %v3376
        %v3378 = vpop.f32.mrb[0].mxu0
        %v3379 = vpop.f32.mrb[0].mxu0
        %v3380 = vadd.f32 %v3107, %v3379
        %v3381 = vpop.f32.mrb[0].mxu0
        %3382 = vmatprep.mubr.bf16.mxu0 %v2370
        %3383 = vmatmul.mubr.bf16.gmra.mrb[0].mxu0 %v2576
        %v3384 = vpop.f32.mrb[0].mxu0
        %v3385 = vadd.f32 %v3112, %v3384
        %v3386 = vpop.f32.mrb[0].mxu0
        %v3387 = vpop.f32.mrb[0].mxu0
        %v3388 = vadd.f32 %v3115, %v3387
        %v3389 = vpop.f32.mrb[0].mxu0
        %3390 = vmatprep.mubr.bf16.mxu0 %v2373
        %3391 = vmatmul.mubr.bf16.gmra.mrb[0].mxu0 %v2580
        %v3392 = vpop.f32.mrb[0].mxu0
        %v3393 = vadd.f32 %v3120, %v3392
        %v3394 = vpop.f32.mrb[0].mxu0
        %v3395 = vpop.f32.mrb[0].mxu0
        %v3396 = vadd.f32 %v3123, %v3395
        %v3397 = vpop.f32.mrb[0].mxu0
        %3398 = vmatprep.mubr.bf16.mxu0 %v2376
        %3399 = vmatmul.mubr.bf16.gmra.mrb[0].mxu0 %v2584
        %v3400 = vpop.f32.mrb[0].mxu0
        %v3401 = vadd.f32 %v3128, %v3400
        %v3402 = vpop.f32.mrb[0].mxu0
        %v3403 = vpop.f32.mrb[0].mxu0
        %v3404 = vadd.f32 %v3131, %v3403
        %v3405 = vpop.f32.mrb[0].mxu0
        %3406 = vmatprep.mubr.bf16.mxu0 %v2379
        %3407 = vmatmul.mubr.bf16.gmra.mrb[0].mxu0 %v2588
        %v3408 = vpop.f32.mrb[0].mxu0
        %v3409 = vadd.f32 %v3136, %v3408
        %v3410 = vpop.f32.mrb[0].mxu0
        %v3411 = vpop.f32.mrb[0].mxu0
        %v3412 = vadd.f32 %v3139, %v3411
        %v3413 = vpop.f32.mrb[0].mxu0
        %3414 = vmatprep.mubr.bf16.mxu0 %v2382
        %3415 = vmatmul.mubr.bf16.gmra.mrb[0].mxu0 %v2592
        %v3416 = vpop.f32.mrb[0].mxu0
        %v3417 = vadd.f32 %v3144, %v3416
        %v3418 = vpop.f32.mrb[0].mxu0
        %v3419 = vpop.f32.mrb[0].mxu0
        %v3420 = vadd.f32 %v3147, %v3419
        %v3421 = vpop.f32.mrb[0].mxu0
        %3422 = vmatprep.mubr.bf16.mxu0 %v2385
        %3423 = vmatmul.mubr.bf16.gmra.mrb[0].mxu0 %v2596
        %v3424 = vpop.f32.mrb[0].mxu0
        %v3425 = vadd.f32 %v3152, %v3424
        %v3426 = vpop.f32.mrb[0].mxu0
        %v3427 = vpop.f32.mrb[0].mxu0
        %v3428 = vadd.f32 %v3155, %v3427
        %v3429 = vpop.f32.mrb[0].mxu0
        %3430 = vmatprep.mubr.bf16.mxu0 %v2388
        %3431 = vmatmul.mubr.bf16.gmra.mrb[0].mxu0 %v2600
        %v3432 = vpop.f32.mrb[0].mxu0
        %v3433 = vadd.f32 %v3160, %v3432
        %v3434 = vpop.f32.mrb[0].mxu0
        %v3435 = vpop.f32.mrb[0].mxu0
        %v3436 = vadd.f32 %v3163, %v3435
        %v3437 = vpop.f32.mrb[0].mxu0
        %3438 = vmatprep.mubr.bf16.mxu0 %v2391
        %3439 = vmatmul.mubr.bf16.gmra.mrb[0].mxu0 %v2604
        %v3440 = vpop.f32.mrb[0].mxu0
        %v3441 = vadd.f32 %v3168, %v3440
        %v3442 = vpop.f32.mrb[0].mxu0
        %v3443 = vpop.f32.mrb[0].mxu0
        %v3444 = vadd.f32 %v3171, %v3443
        %v3445 = vpop.f32.mrb[0].mxu0
        %3446 = vmatprep.mubr.bf16.mxu0 %v2394
        %3447 = vmatmul.mubr.bf16.gmra.mrb[0].mxu0 %v2608
        %v3448 = vpop.f32.mrb[0].mxu0
        %v3449 = vadd.f32 %v3176, %v3448
        %v3450 = vpop.f32.mrb[0].mxu0
        %v3451 = vpop.f32.mrb[0].mxu0
        %v3452 = vadd.f32 %v3179, %v3451
        %v3453 = vpop.f32.mrb[0].mxu0
        %3454 = vmatprep.mubr.bf16.mxu0 %v2397
        %3455 = vmatmul.mubr.bf16.gmra.mrb[0].mxu0 %v2612
        %v3456 = vpop.f32.mrb[0].mxu0
        %v3457 = vadd.f32 %v3184, %v3456
        %v3458 = vpop.f32.mrb[0].mxu0
        %v3459 = vpop.f32.mrb[0].mxu0
        %v3460 = vadd.f32 %v3187, %v3459
        %v3461 = vpop.f32.mrb[0].mxu0
        %3462 = vmatprep.mubr.bf16.mxu0 %v2400
        %3463 = vmatmul.mubr.bf16.gmra.mrb[0].mxu0 %v2616
        %v3464 = vpop.f32.mrb[0].mxu0
        %v3465 = vadd.f32 %v3192, %v3464
        %v3466 = vpop.f32.mrb[0].mxu0
        %v3467 = vpop.f32.mrb[0].mxu0
        %v3468 = vadd.f32 %v3195, %v3467
        %v3469 = vpop.f32.mrb[0].mxu0
        %3470 = vmatprep.mubr.bf16.mxu0 %v2403
        %3471 = vmatmul.mubr.bf16.gmra.mrb[0].mxu0 %v2620
        %v3472 = vpop.f32.mrb[0].mxu0
        %v3473 = vadd.f32 %v3200, %v3472
        %v3474 = vpop.f32.mrb[0].mxu0
        %v3475 = vpop.f32.mrb[0].mxu0
        %v3476 = vadd.f32 %v3203, %v3475
        %v3477 = vpop.f32.mrb[0].mxu0
        %3478 = vmatprep.mubr.bf16.mxu0 %v2406
        %3479 = vmatmul.mubr.bf16.gmra.mrb[0].mxu0 %v2624
        %v3480 = vpop.f32.mrb[0].mxu0
        %v3481 = vadd.f32 %v3208, %v3480
        %v3482 = vpop.f32.mrb[0].mxu0
        %v3483 = vpop.f32.mrb[0].mxu0
        %v3484 = vadd.f32 %v3211, %v3483
        %v3485 = vpop.f32.mrb[0].mxu0
        %3486 = vmatprep.mubr.bf16.mxu0 %v2409
        %3487 = vmatmul.mubr.bf16.gmra.mrb[0].mxu0 %v2628
        %v3488 = vpop.f32.mrb[0].mxu0
        %v3489 = vadd.f32 %v3216, %v3488
        %v3490 = vpop.f32.mrb[0].mxu0
        %v3491 = vpop.f32.mrb[0].mxu0
        %v3492 = vadd.f32 %v3219, %v3491
        %v3493 = vpop.f32.mrb[0].mxu0
        %3494 = vmatprep.mubr.bf16.mxu0 %v2412
        %3495 = vmatmul.mubr.bf16.gmra.mrb[0].mxu0 %v2632
        %v3496 = vpop.f32.mrb[0].mxu0
        %v3497 = vadd.f32 %v3224, %v3496
        %v3498 = vpop.f32.mrb[0].mxu0
        %v3499 = vpop.f32.mrb[0].mxu0
        %v3500 = vadd.f32 %v3227, %v3499
        %v3501 = vpop.f32.mrb[0].mxu0
        %3502 = vmatprep.mubr.bf16.mxu0 %v2415
        %3503 = vmatmul.mubr.bf16.gmra.mrb[0].mxu0 %v2636
        %v3504 = vpop.f32.mrb[0].mxu0
        %v3505 = vadd.f32 %v3232, %v3504
        %v3506 = vpop.f32.mrb[0].mxu0
        %v3507 = vpop.f32.mrb[0].mxu0
        %v3508 = vadd.f32 %v3235, %v3507
        %v3509 = vpop.f32.mrb[0].mxu0
        %3510 = vmatprep.mubr.bf16.mxu0 %v2418
        %3511 = vmatmul.mubr.bf16.gmra.mrb[0].mxu0 %v2640
        %v3512 = vpop.f32.mrb[0].mxu0
        %v3513 = vadd.f32 %v3240, %v3512
        %v3514 = vpop.f32.mrb[0].mxu0
        %v3515 = vpop.f32.mrb[0].mxu0
        %v3516 = vadd.f32 %v3243, %v3515
        %v3517 = vpop.f32.mrb[0].mxu0
        %3518 = vmatprep.mubr.bf16.mxu0 %v2421
        %3519 = vmatmul.mubr.bf16.gmra.mrb[0].mxu0 %v2644
        %v3520 = vpop.f32.mrb[0].mxu0
        %v3521 = vadd.f32 %v3248, %v3520
        %v3522 = vpop.f32.mrb[0].mxu0
        %v3523 = vpop.f32.mrb[0].mxu0
        %v3524 = vadd.f32 %v3251, %v3523
        %v3525 = vpop.f32.mrb[0].mxu0
        %3526 = vmatprep.mubr.bf16.mxu0 %v2424
        %3527 = vmatmul.mubr.bf16.gmra.mrb[0].mxu0 %v2648
        %v3528 = vpop.f32.mrb[0].mxu0
        %v3529 = vadd.f32 %v3256, %v3528
        %v3530 = vpop.f32.mrb[0].mxu0
        %v3531 = vpop.f32.mrb[0].mxu0
        %v3532 = vadd.f32 %v3259, %v3531
        %v3533 = vpop.f32.mrb[0].mxu0
        %3534 = vmatprep.mubr.bf16.mxu0 %v2427
        %3535 = vmatmul.mubr.bf16.gmra.mrb[0].mxu0 %v2652
        %v3536 = vpop.f32.mrb[0].mxu0
        %v3537 = vadd.f32 %v3264, %v3536
        %v3538 = vpop.f32.mrb[0].mxu0
        %v3539 = vpop.f32.mrb[0].mxu0
        %v3540 = vadd.f32 %v3267, %v3539
        %v3541 = vpop.f32.mrb[0].mxu0
        %3542 = vmatprep.mubr.bf16.mxu0 %v2430
        %3543 = vmatmul.mubr.bf16.gmra.mrb[0].mxu0 %v2656
        %v3544 = vpop.f32.mrb[0].mxu0
        %v3545 = vadd.f32 %v3272, %v3544
        %v3546 = vpop.f32.mrb[0].mxu0
        %v3547 = vpop.f32.mrb[0].mxu0
        %v3548 = vadd.f32 %v3275, %v3547
        %v3549 = vpop.f32.mrb[0].mxu0
        %3550 = vmatprep.mubr.bf16.mxu0 %v2433
        %3551 = vmatmul.mubr.bf16.gmra.mrb[0].mxu0 %v2660
        %v3552 = vpop.f32.mrb[0].mxu0
        %v3553 = vadd.f32 %v3280, %v3552
        %v3554 = vpop.f32.mrb[0].mxu0
        %v3555 = vpop.f32.mrb[0].mxu0
        %v3556 = vadd.f32 %v3283, %v3555
        %v3557 = vpop.f32.mrb[0].mxu0
        %3558 = vmatprep.mubr.bf16.mxu0 %v2436
        %3559 = vmatmul.mubr.bf16.gmra.mrb[0].mxu0 %v2664
        %v3560 = vpop.f32.mrb[0].mxu0
        %v3561 = vadd.f32 %v3288, %v3560
        %v3562 = vpop.f32.mrb[0].mxu0
        %v3563 = vpop.f32.mrb[0].mxu0
        %v3564 = vadd.f32 %v3291, %v3563
        %v3565 = vpop.f32.mrb[0].mxu0
        %3566 = vmatprep.mubr.bf16.mxu0 %v2679
        %3567 = vmatmul.mubr.bf16.gmra.mrb[0].mxu0 %v2668
        %v3568 = vpop.f32.mrb[0].mxu0
        %v3569 = vadd.f32 %v3296, %v3568
        %v3570 = vpop.f32.mrb[0].mxu0
        %v3571 = vpop.f32.mrb[0].mxu0
        %v3572 = vadd.f32 %v3299, %v3571
        %v3573 = vpop.f32.mrb[0].mxu0
        %3574 = vmatprep.mubr.bf16.mxu0 %v2682
        %3575 = vmatmul.mubr.bf16.gmra.mrb[0].mxu0 %v2672
        %v3576 = vpop.f32.mrb[0].mxu0
        %v3577 = vadd.f32 %v3304, %v3576
        %v3578 = vpop.f32.mrb[0].mxu0
        %v3579 = vpop.f32.mrb[0].mxu0
        %v3580 = vadd.f32 %v3307, %v3579
        %v3581 = vpop.f32.mrb[0].mxu0
        %3582 = vmatprep.mubr.bf16.mxu0 %v2685
        %3583 = vmatmul.mubr.bf16.gmra.mrb[0].mxu0 %v2676
        %v3584 = vpop.f32.mrb[0].mxu0
        %v3585 = vadd.f32 %v3312, %v3584
        %v3586 = vpop.f32.mrb[0].mxu0
        %v3587 = vpop.f32.mrb[0].mxu0
        %v3588 = vadd.f32 %v3315, %v3587
        %v3589 = vpop.f32.mrb[0].mxu0
        %3590 = vdwg.mxu0
        %3591 = vmatprep.subr.bf16.mxu0 0
        %3592 = vmatpush1.bf16.msra.mxu0 %v2942
        %3593 = vmatprep.subr.bf16.mxu0 0
        %3594 = vmatpush1.bf16.msra.mxu0 %v2943
        %3595 = vmatprep.subr.bf16.mxu0 0
        %3596 = vmatpush1.bf16.msra.mxu0 %v2944
        %3597 = vmatprep.subr.bf16.mxu0 0
        %3598 = vmatpush1.bf16.msra.mxu0 %v2945
        %3599 = vmatprep.subr.bf16.mxu0 0
        %3600 = vmatpush1.bf16.msra.mxu0 0
        %3601 = vmatprep.subr.bf16.mxu0 0
        %3602 = vmatpush1.bf16.msra.mxu0 0
        %3603 = vmatprep.subr.bf16.mxu0 0
        %3604 = vmatpush1.bf16.msra.mxu0 0
        %3605 = vmatprep.subr.bf16.mxu0 0
        %3606 = vmatpush1.bf16.msra.mxu0 0
        %3607 = vmatprep.subr.bf16.mxu0 0
        %3608 = vmatpush1.bf16.msra.mxu0 0
        %3609 = vmatprep.subr.bf16.mxu0 0
        %3610 = vmatpush1.bf16.msra.mxu0 0
        %3611 = vmatprep.subr.bf16.mxu0 0
        %3612 = vmatpush1.bf16.msra.mxu0 0
        %3613 = vmatprep.subr.bf16.mxu0 0
        %3614 = vmatpush1.bf16.msra.mxu0 0
        %3615 = vmatprep.subr.bf16.mxu0 0
        %3616 = vmatpush1.bf16.msra.mxu0 0
        %3617 = vmatprep.subr.bf16.mxu0 0
        %3618 = vmatpush1.bf16.msra.mxu0 0
        %3619 = vmatprep.subr.bf16.mxu0 0
        %3620 = vmatpush1.bf16.msra.mxu0 0
        %3621 = vmatprep.subr.bf16.mxu0 0
        %3622 = vmatpush1.bf16.msra.mxu0 0
        %3623 = vmatprep.mubr.bf16.mxu0 0
        %3624 = vmatmul.mubr.bf16.gmra.mrb[0].mxu0 %v2982
        %v3625 = vpop.f32.mrb[0].mxu0
        %v3626 = vadd.f32 %v3353, %v3625
        %v3627 = vpop.f32.mrb[0].mxu0
        %v3628 = vpop.f32.mrb[0].mxu0
        %v3629 = vadd.f32 %v3356, %v3628
        %v3630 = vpop.f32.mrb[0].mxu0
        %3631 = vmatprep.mubr.bf16.mxu0 0
        %3632 = vmatmul.mubr.bf16.gmra.mrb[0].mxu0 %v2984
        %v3633 = vpop.f32.mrb[0].mxu0
        %v3634 = vadd.f32 %v3361, %v3633
        %v3635 = vpop.f32.mrb[0].mxu0
        %v3636 = vpop.f32.mrb[0].mxu0
        %v3637 = vadd.f32 %v3364, %v3636
        %v3638 = vpop.f32.mrb[0].mxu0
        %3639 = vmatprep.mubr.bf16.mxu0 0
        %3640 = vmatmul.mubr.bf16.gmra.mrb[0].mxu0 %v2986
        %v3641 = vpop.f32.mrb[0].mxu0
        %v3642 = vadd.f32 %v3369, %v3641
        %v3643 = vpop.f32.mrb[0].mxu0
        %v3644 = vpop.f32.mrb[0].mxu0
        %v3645 = vadd.f32 %v3372, %v3644
        %v3646 = vpop.f32.mrb[0].mxu0
        %3647 = vmatprep.mubr.bf16.mxu0 0
        %3648 = vmatmul.mubr.bf16.gmra.mrb[0].mxu0 %v2988
        %v3649 = vpop.f32.mrb[0].mxu0
        %v3650 = vadd.f32 %v3377, %v3649
        %v3651 = vpop.f32.mrb[0].mxu0
        %v3652 = vpop.f32.mrb[0].mxu0
        %v3653 = vadd.f32 %v3380, %v3652
        %v3654 = vpop.f32.mrb[0].mxu0
        %3655 = vmatprep.mubr.bf16.mxu0 0
        %3656 = vmatmul.mubr.bf16.gmra.mrb[0].mxu0 %v2990
        %v3657 = vpop.f32.mrb[0].mxu0
        %v3658 = vadd.f32 %v3385, %v3657
        %v3659 = vpop.f32.mrb[0].mxu0
        %v3660 = vpop.f32.mrb[0].mxu0
        %v3661 = vadd.f32 %v3388, %v3660
        %v3662 = vpop.f32.mrb[0].mxu0
        %3663 = vmatprep.mubr.bf16.mxu0 0
        %3664 = vmatmul.mubr.bf16.gmra.mrb[0].mxu0 %v2992
        %v3665 = vpop.f32.mrb[0].mxu0
        %v3666 = vadd.f32 %v3393, %v3665
        %v3667 = vpop.f32.mrb[0].mxu0
        %v3668 = vpop.f32.mrb[0].mxu0
        %v3669 = vadd.f32 %v3396, %v3668
        %v3670 = vpop.f32.mrb[0].mxu0
        %3671 = vmatprep.mubr.bf16.mxu0 0
        %3672 = vmatmul.mubr.bf16.gmra.mrb[0].mxu0 %v2994
        %v3673 = vpop.f32.mrb[0].mxu0
        %v3674 = vadd.f32 %v3401, %v3673
        %v3675 = vpop.f32.mrb[0].mxu0
        %v3676 = vpop.f32.mrb[0].mxu0
        %v3677 = vadd.f32 %v3404, %v3676
        %v3678 = vpop.f32.mrb[0].mxu0
        %3679 = vmatprep.mubr.bf16.mxu0 0
        %3680 = vmatmul.mubr.bf16.gmra.mrb[0].mxu0 %v2996
        %v3681 = vpop.f32.mrb[0].mxu0
        %v3682 = vadd.f32 %v3409, %v3681
        %v3683 = vpop.f32.mrb[0].mxu0
        %v3684 = vpop.f32.mrb[0].mxu0
        %v3685 = vadd.f32 %v3412, %v3684
        %v3686 = vpop.f32.mrb[0].mxu0
        %3687 = vmatprep.mubr.bf16.mxu0 0
        %3688 = vmatmul.mubr.bf16.gmra.mrb[0].mxu0 %v2998
        %v3689 = vpop.f32.mrb[0].mxu0
        %v3690 = vadd.f32 %v3417, %v3689
        %v3691 = vpop.f32.mrb[0].mxu0
        %v3692 = vpop.f32.mrb[0].mxu0
        %v3693 = vadd.f32 %v3420, %v3692
        %v3694 = vpop.f32.mrb[0].mxu0
        %3695 = vmatprep.mubr.bf16.mxu0 0
        %3696 = vmatmul.mubr.bf16.gmra.mrb[0].mxu0 %v3000
        %v3697 = vpop.f32.mrb[0].mxu0
        %v3698 = vadd.f32 %v3425, %v3697
        %v3699 = vpop.f32.mrb[0].mxu0
        %v3700 = vpop.f32.mrb[0].mxu0
        %v3701 = vadd.f32 %v3428, %v3700
        %v3702 = vpop.f32.mrb[0].mxu0
        %3703 = vmatprep.mubr.bf16.mxu0 0
        %3704 = vmatmul.mubr.bf16.gmra.mrb[0].mxu0 %v3002
        %v3705 = vpop.f32.mrb[0].mxu0
        %v3706 = vadd.f32 %v3433, %v3705
        %v3707 = vpop.f32.mrb[0].mxu0
        %v3708 = vpop.f32.mrb[0].mxu0
        %v3709 = vadd.f32 %v3436, %v3708
        %v3710 = vpop.f32.mrb[0].mxu0
        %3711 = vmatprep.mubr.bf16.mxu0 0
        %3712 = vmatmul.mubr.bf16.gmra.mrb[0].mxu0 %v3004
        %v3713 = vpop.f32.mrb[0].mxu0
        %v3714 = vadd.f32 %v3441, %v3713
        %v3715 = vpop.f32.mrb[0].mxu0
        %v3716 = vpop.f32.mrb[0].mxu0
        %v3717 = vadd.f32 %v3444, %v3716
        %v3718 = vpop.f32.mrb[0].mxu0
        %3719 = vmatprep.mubr.bf16.mxu0 0
        %3720 = vmatmul.mubr.bf16.gmra.mrb[0].mxu0 %v3006
        %v3721 = vpop.f32.mrb[0].mxu0
        %v3722 = vadd.f32 %v3449, %v3721
        %v3723 = vpop.f32.mrb[0].mxu0
        %v3724 = vpop.f32.mrb[0].mxu0
        %v3725 = vadd.f32 %v3452, %v3724
        %v3726 = vpop.f32.mrb[0].mxu0
        %3727 = vmatprep.mubr.bf16.mxu0 0
        %3728 = vmatmul.mubr.bf16.gmra.mrb[0].mxu0 %v3008
        %v3729 = vpop.f32.mrb[0].mxu0
        %v3730 = vadd.f32 %v3457, %v3729
        %v3731 = vpop.f32.mrb[0].mxu0
        %v3732 = vpop.f32.mrb[0].mxu0
        %v3733 = vadd.f32 %v3460, %v3732
        %v3734 = vpop.f32.mrb[0].mxu0
        %3735 = vmatprep.mubr.bf16.mxu0 0
        %3736 = vmatmul.mubr.bf16.gmra.mrb[0].mxu0 %v3010
        %v3737 = vpop.f32.mrb[0].mxu0
        %v3738 = vadd.f32 %v3465, %v3737
        %v3739 = vpop.f32.mrb[0].mxu0
        %v3740 = vpop.f32.mrb[0].mxu0
        %v3741 = vadd.f32 %v3468, %v3740
        %v3742 = vpop.f32.mrb[0].mxu0
        %3743 = vmatprep.mubr.bf16.mxu0 0
        %3744 = vmatmul.mubr.bf16.gmra.mrb[0].mxu0 %v3012
        %v3745 = vpop.f32.mrb[0].mxu0
        %v3746 = vadd.f32 %v3473, %v3745
        %v3747 = vpop.f32.mrb[0].mxu0
        %v3748 = vpop.f32.mrb[0].mxu0
        %v3749 = vadd.f32 %v3476, %v3748
        %v3750 = vpop.f32.mrb[0].mxu0
        %3751 = vmatprep.mubr.bf16.mxu0 0
        %3752 = vmatmul.mubr.bf16.gmra.mrb[0].mxu0 %v3014
        %v3753 = vpop.f32.mrb[0].mxu0
        %v3754 = vadd.f32 %v3481, %v3753
        %v3755 = vpop.f32.mrb[0].mxu0
        %v3756 = vpop.f32.mrb[0].mxu0
        %v3757 = vadd.f32 %v3484, %v3756
        %v3758 = vpop.f32.mrb[0].mxu0
        %3759 = vmatprep.mubr.bf16.mxu0 0
        %3760 = vmatmul.mubr.bf16.gmra.mrb[0].mxu0 %v3016
        %v3761 = vpop.f32.mrb[0].mxu0
        %v3762 = vadd.f32 %v3489, %v3761
        %v3763 = vpop.f32.mrb[0].mxu0
        %v3764 = vpop.f32.mrb[0].mxu0
        %v3765 = vadd.f32 %v3492, %v3764
        %v3766 = vpop.f32.mrb[0].mxu0
        %3767 = vmatprep.mubr.bf16.mxu0 0
        %3768 = vmatmul.mubr.bf16.gmra.mrb[0].mxu0 %v3018
        %v3769 = vpop.f32.mrb[0].mxu0
        %v3770 = vadd.f32 %v3497, %v3769
        %v3771 = vpop.f32.mrb[0].mxu0
        %v3772 = vpop.f32.mrb[0].mxu0
        %v3773 = vadd.f32 %v3500, %v3772
        %v3774 = vpop.f32.mrb[0].mxu0
        %3775 = vmatprep.mubr.bf16.mxu0 0
        %3776 = vmatmul.mubr.bf16.gmra.mrb[0].mxu0 %v3020
        %v3777 = vpop.f32.mrb[0].mxu0
        %v3778 = vadd.f32 %v3505, %v3777
        %v3779 = vpop.f32.mrb[0].mxu0
        %v3780 = vpop.f32.mrb[0].mxu0
        %v3781 = vadd.f32 %v3508, %v3780
        %v3782 = vpop.f32.mrb[0].mxu0
        %3783 = vmatprep.mubr.bf16.mxu0 0
        %3784 = vmatmul.mubr.bf16.gmra.mrb[0].mxu0 %v3022
        %v3785 = vpop.f32.mrb[0].mxu0
        %v3786 = vadd.f32 %v3513, %v3785
        %v3787 = vpop.f32.mrb[0].mxu0
        %v3788 = vpop.f32.mrb[0].mxu0
        %v3789 = vadd.f32 %v3516, %v3788
        %v3790 = vpop.f32.mrb[0].mxu0
        %3791 = vmatprep.mubr.bf16.mxu0 0
        %3792 = vmatmul.mubr.bf16.gmra.mrb[0].mxu0 %v3024
        %v3793 = vpop.f32.mrb[0].mxu0
        %v3794 = vadd.f32 %v3521, %v3793
        %v3795 = vpop.f32.mrb[0].mxu0
        %v3796 = vpop.f32.mrb[0].mxu0
        %v3797 = vadd.f32 %v3524, %v3796
        %v3798 = vpop.f32.mrb[0].mxu0
        %3799 = vmatprep.mubr.bf16.mxu0 0
        %3800 = vmatmul.mubr.bf16.gmra.mrb[0].mxu0 %v3026
        %v3801 = vpop.f32.mrb[0].mxu0
        %v3802 = vadd.f32 %v3529, %v3801
        %v3803 = vpop.f32.mrb[0].mxu0
        %v3804 = vpop.f32.mrb[0].mxu0
        %v3805 = vadd.f32 %v3532, %v3804
        %v3806 = vpop.f32.mrb[0].mxu0
        %3807 = vmatprep.mubr.bf16.mxu0 0
        %3808 = vmatmul.mubr.bf16.gmra.mrb[0].mxu0 %v3028
        %v3809 = vpop.f32.mrb[0].mxu0
        %v3810 = vadd.f32 %v3537, %v3809
        %v3811 = vpop.f32.mrb[0].mxu0
        %v3812 = vpop.f32.mrb[0].mxu0
        %v3813 = vadd.f32 %v3540, %v3812
        %v3814 = vpop.f32.mrb[0].mxu0
        %3815 = vmatprep.mubr.bf16.mxu0 0
        %3816 = vmatmul.mubr.bf16.gmra.mrb[0].mxu0 %v3030
        %v3817 = vpop.f32.mrb[0].mxu0
        %v3818 = vadd.f32 %v3545, %v3817
        %v3819 = vpop.f32.mrb[0].mxu0
        %v3820 = vpop.f32.mrb[0].mxu0
        %v3821 = vadd.f32 %v3548, %v3820
        %v3822 = vpop.f32.mrb[0].mxu0
        %3823 = vmatprep.mubr.bf16.mxu0 0
        %3824 = vmatmul.mubr.bf16.gmra.mrb[0].mxu0 %v3032
        %v3825 = vpop.f32.mrb[0].mxu0
        %v3826 = vadd.f32 %v3553, %v3825
        %v3827 = vpop.f32.mrb[0].mxu0
        %v3828 = vpop.f32.mrb[0].mxu0
        %v3829 = vadd.f32 %v3556, %v3828
        %v3830 = vpop.f32.mrb[0].mxu0
        %3831 = vmatprep.mubr.bf16.mxu0 0
        %3832 = vmatmul.mubr.bf16.gmra.mrb[0].mxu0 %v3034
        %v3833 = vpop.f32.mrb[0].mxu0
        %v3834 = vadd.f32 %v3561, %v3833
        %v3835 = vpop.f32.mrb[0].mxu0
        %v3836 = vpop.f32.mrb[0].mxu0
        %v3837 = vadd.f32 %v3564, %v3836
        %v3838 = vpop.f32.mrb[0].mxu0
        %3839 = vmatprep.mubr.bf16.mxu0 0
        %3840 = vmatmul.mubr.bf16.gmra.mrb[0].mxu0 %v3037
        %v3841 = vpop.f32.mrb[0].mxu0
        %v3842 = vadd.f32 %v3569, %v3841
        %v3843 = vpop.f32.mrb[0].mxu0
        %v3844 = vpop.f32.mrb[0].mxu0
        %v3845 = vadd.f32 %v3572, %v3844
        %v3846 = vpop.f32.mrb[0].mxu0
        %3847 = vmatprep.mubr.bf16.mxu0 0
        %3848 = vmatmul.mubr.bf16.gmra.mrb[0].mxu0 %v3040
        %v3849 = vpop.f32.mrb[0].mxu0
        %v3850 = vadd.f32 %v3577, %v3849
        %v3851 = vpop.f32.mrb[0].mxu0
        %v3852 = vpop.f32.mrb[0].mxu0
        %v3853 = vadd.f32 %v3580, %v3852
        %v3854 = vpop.f32.mrb[0].mxu0
        %3855 = vmatprep.mubr.bf16.mxu0 0
        %3856 = vmatmul.mubr.bf16.gmra.mrb[0].mxu0 %v3043
        %v3857 = vpop.f32.mrb[0].mxu0
        %v3858 = vadd.f32 %v3585, %v3857
        %v3859 = vpop.f32.mrb[0].mxu0
        %v3860 = vpop.f32.mrb[0].mxu0
        %v3861 = vadd.f32 %v3588, %v3860
        %v3862 = vpop.f32.mrb[0].mxu0
        %3863 = vdwg.mxu0
        %v3864 = vmax.f32 %v3626, 0.0
        %v3865 = vmax.f32 %v3629, 0.0
        %v3866 = vmax.f32 %v3634, 0.0
        %v3867 = vmax.f32 %v3637, 0.0
        %v3868 = vmax.f32 %v3642, 0.0
        %v3869 = vmax.f32 %v3645, 0.0
        %v3870 = vmax.f32 %v3650, 0.0
        %v3871 = vmax.f32 %v3653, 0.0
        %v3872 = vmax.f32 %v3658, 0.0
        %v3873 = vmax.f32 %v3661, 0.0
        %v3874 = vmax.f32 %v3666, 0.0
        %v3875 = vmax.f32 %v3669, 0.0
        %v3876 = vmax.f32 %v3674, 0.0
        %v3877 = vmax.f32 %v3677, 0.0
        %v3878 = vmax.f32 %v3682, 0.0
        %v3879 = vmax.f32 %v3685, 0.0
        %v3880 = vmax.f32 %v3690, 0.0
        %v3881 = vmax.f32 %v3693, 0.0
        %v3882 = vmax.f32 %v3698, 0.0
        %v3883 = vmax.f32 %v3701, 0.0
        %v3884 = vmax.f32 %v3706, 0.0
        %v3885 = vmax.f32 %v3709, 0.0
        %v3886 = vmax.f32 %v3714, 0.0
        %v3887 = vmax.f32 %v3717, 0.0
        %v3888 = vmax.f32 %v3722, 0.0
        %v3889 = vmax.f32 %v3725, 0.0
        %v3890 = vmax.f32 %v3730, 0.0
        %v3891 = vmax.f32 %v3733, 0.0
        %v3892 = vmax.f32 %v3738, 0.0
        %v3893 = vmax.f32 %v3741, 0.0
        %v3894 = vmax.f32 %v3746, 0.0
        %v3895 = vmax.f32 %v3749, 0.0
        %v3896 = vmax.f32 %v3754, 0.0
        %v3897 = vmax.f32 %v3757, 0.0
        %v3898 = vmax.f32 %v3762, 0.0
        %v3899 = vmax.f32 %v3765, 0.0
        %v3900 = vmax.f32 %v3770, 0.0
        %v3901 = vmax.f32 %v3773, 0.0
        %v3902 = vmax.f32 %v3778, 0.0
        %v3903 = vmax.f32 %v3781, 0.0
        %v3904 = vmax.f32 %v3786, 0.0
        %v3905 = vmax.f32 %v3789, 0.0
        %v3906 = vmax.f32 %v3794, 0.0
        %v3907 = vmax.f32 %v3797, 0.0
        %v3908 = vmax.f32 %v3802, 0.0
        %v3909 = vmax.f32 %v3805, 0.0
        %v3910 = vmax.f32 %v3810, 0.0
        %v3911 = vmax.f32 %v3813, 0.0
        %v3912 = vmax.f32 %v3818, 0.0
        %v3913 = vmax.f32 %v3821, 0.0
        %v3914 = vmax.f32 %v3826, 0.0
        %v3915 = vmax.f32 %v3829, 0.0
        %v3916 = vmax.f32 %v3834, 0.0
        %v3917 = vmax.f32 %v3837, 0.0
        %v3918 = vmax.f32 %v3842, 0.0
        %v3919 = vmax.f32 %v3845, 0.0
        %v3920 = vmax.f32 %v3850, 0.0
        %v3921 = vmax.f32 %v3853, 0.0
        %v3922 = vmax.f32 %v3858, 0.0
        %v3923 = vmax.f32 %v3861, 0.0
        %v3924 = vpack.c.bf16 %v3865, %v3864
        %v3925 = vpack.c.bf16 %v3867, %v3866
        %v3926 = vpack.c.bf16 %v3869, %v3868
        %v3927 = vpack.c.bf16 %v3871, %v3870
        %v3928 = vpack.c.bf16 %v3873, %v3872
        %v3929 = vpack.c.bf16 %v3875, %v3874
        %v3930 = vpack.c.bf16 %v3877, %v3876
        %v3931 = vpack.c.bf16 %v3879, %v3878
        %v3932 = vpack.c.bf16 %v3881, %v3880
        %v3933 = vpack.c.bf16 %v3883, %v3882
        %v3934 = vpack.c.bf16 %v3885, %v3884
        %v3935 = vpack.c.bf16 %v3887, %v3886
        %v3936 = vpack.c.bf16 %v3889, %v3888
        %v3937 = vpack.c.bf16 %v3891, %v3890
        %v3938 = vpack.c.bf16 %v3893, %v3892
        %v3939 = vpack.c.bf16 %v3895, %v3894
        %v3940 = vpack.c.bf16 %v3897, %v3896
        %v3941 = vpack.c.bf16 %v3899, %v3898
        %v3942 = vpack.c.bf16 %v3901, %v3900
        %v3943 = vpack.c.bf16 %v3903, %v3902
        %v3944 = vpack.c.bf16 %v3905, %v3904
        %v3945 = vpack.c.bf16 %v3907, %v3906
        %v3946 = vpack.c.bf16 %v3909, %v3908
        %v3947 = vpack.c.bf16 %v3911, %v3910
        %v3948 = vpack.c.bf16 %v3913, %v3912
        %v3949 = vpack.c.bf16 %v3915, %v3914
        %v3950 = vpack.c.bf16 %v3917, %v3916
        %v3951 = vpack.c.bf16 %v3919, %v3918
        %v3952 = vpack.c.bf16 %v3921, %v3920
        %v3953 = vpack.c.bf16 %v3923, %v3922
        %v3984 = vunpack.c.l.b16 %v3924
        %v3985 = vunpack.c.h.b16 %v3924
        %v3986 = vunpack.c.h.b16 %v3925
        %v3987 = vunpack.c.l.b16 %v3926
        %v3988 = vunpack.c.l.b16 %v3927
        %v3989 = vunpack.c.h.b16 %v3927
        %v3990 = vunpack.c.h.b16 %v3928
        %v3991 = vunpack.c.l.b16 %v3929
        %v3992 = vunpack.c.l.b16 %v3930
        %v3993 = vunpack.c.h.b16 %v3930
        %v3994 = vunpack.c.h.b16 %v3931
        %v3995 = vunpack.c.l.b16 %v3932
        %v3996 = vunpack.c.l.b16 %v3933
        %v3997 = vunpack.c.h.b16 %v3933
        %v3998 = vunpack.c.h.b16 %v3934
        %v3999 = vunpack.c.l.b16 %v3935
        %v4000 = vunpack.c.l.b16 %v3936
        %v4001 = vunpack.c.h.b16 %v3936
        %v4002 = vunpack.c.h.b16 %v3937
        %v4003 = vunpack.c.l.b16 %v3938
        %v4004 = vunpack.c.l.b16 %v3939
        %v4005 = vunpack.c.h.b16 %v3939
        %v4006 = vunpack.c.h.b16 %v3940
        %v4007 = vunpack.c.l.b16 %v3941
        %v4008 = vunpack.c.l.b16 %v3942
        %v4009 = vunpack.c.h.b16 %v3942
        %v4010 = vunpack.c.h.b16 %v3943
        %v4011 = vunpack.c.l.b16 %v3944
        %v4012 = vunpack.c.l.b16 %v3945
        %v4013 = vunpack.c.h.b16 %v3945
        %v4014 = vunpack.c.h.b16 %v3946
        %v4015 = vunpack.c.l.b16 %v3947
        %v4016 = vunpack.c.l.b16 %v3948
        %v4017 = vunpack.c.h.b16 %v3948
        %v4018 = vunpack.c.h.b16 %v3949
        %v4019 = vunpack.c.l.b16 %v3950
        %v4020 = vunpack.c.l.b16 %v3951
        %v4021 = vunpack.c.h.b16 %v3951
        %v4022 = vunpack.c.h.b16 %v3952
        %v4023 = vunpack.c.l.b16 %v3953
        %v4024 = vpack.c.b16 %v3984, %v3984
        %v4025 = vpack.c.b16 %v3985, %v3985
        %v4026 = vpack.c.b16 %v3986, %v3986
        %v4027 = vpack.c.b16 %v3987, %v3987
        %v4028 = vpack.c.b16 %v3988, %v3988
        %v4029 = vpack.c.b16 %v3989, %v3989
        %v4030 = vpack.c.b16 %v3990, %v3990
        %v4031 = vpack.c.b16 %v3991, %v3991
        %v4032 = vpack.c.b16 %v3992, %v3992
        %v4033 = vpack.c.b16 %v3993, %v3993
        %v4034 = vpack.c.b16 %v3994, %v3994
        %v4035 = vpack.c.b16 %v3995, %v3995
        %v4036 = vpack.c.b16 %v3996, %v3996
        %v4037 = vpack.c.b16 %v3997, %v3997
        %v4038 = vpack.c.b16 %v3998, %v3998
        %v4039 = vpack.c.b16 %v3999, %v3999
        %v4040 = vpack.c.b16 %v4000, %v4000
        %v4041 = vpack.c.b16 %v4001, %v4001
        %v4042 = vpack.c.b16 %v4002, %v4002
        %v4043 = vpack.c.b16 %v4003, %v4003
        %v4044 = vpack.c.b16 %v4004, %v4004
        %v4045 = vpack.c.b16 %v4005, %v4005
        %v4046 = vpack.c.b16 %v4006, %v4006
        %v4047 = vpack.c.b16 %v4007, %v4007
        %v4048 = vpack.c.b16 %v4008, %v4008
        %v4049 = vpack.c.b16 %v4009, %v4009
        %v4050 = vpack.c.b16 %v4010, %v4010
        %v4051 = vpack.c.b16 %v4011, %v4011
        %v4052 = vpack.c.b16 %v4012, %v4012
        %v4053 = vpack.c.b16 %v4013, %v4013
        %v4054 = vpack.c.b16 %v4014, %v4014
        %v4055 = vpack.c.b16 %v4015, %v4015
        %v4056 = vpack.c.b16 %v4016, %v4016
        %v4057 = vpack.c.b16 %v4017, %v4017
        %v4058 = vpack.c.b16 %v4018, %v4018
        %v4059 = vpack.c.b16 %v4019, %v4019
        %v4060 = vpack.c.b16 %v4020, %v4020
        %v4061 = vpack.c.b16 %v4021, %v4021
        %v4062 = vpack.c.b16 %v4022, %v4022
        %v4063 = vpack.c.b16 %v4023, %v4023
        %v4104 = vmax.bf16 %v4024, %v4026
        %v4105 = vmax.bf16 %v4025, %v4027
        %v4106 = vmax.bf16 %v4028, %v4030
        %v4107 = vmax.bf16 %v4029, %v4031
        %v4108 = vmax.bf16 %v4032, %v4034
        %v4109 = vmax.bf16 %v4033, %v4035
        %v4110 = vmax.bf16 %v4036, %v4038
        %v4111 = vmax.bf16 %v4037, %v4039
        %v4112 = vmax.bf16 %v4040, %v4042
        %v4113 = vmax.bf16 %v4041, %v4043
        %v4114 = vmax.bf16 %v4044, %v4046
        %v4115 = vmax.bf16 %v4045, %v4047
        %v4116 = vmax.bf16 %v4048, %v4050
        %v4117 = vmax.bf16 %v4049, %v4051
        %v4118 = vmax.bf16 %v4052, %v4054
        %v4119 = vmax.bf16 %v4053, %v4055
        %v4120 = vmax.bf16 %v4056, %v4058
        %v4121 = vmax.bf16 %v4057, %v4059
        %v4122 = vmax.bf16 %v4060, %v4062
        %v4123 = vmax.bf16 %v4061, %v4063
        %v4145 = vunpack.c.l.s4 1966171168
        %v4146 = vunpack.c.0.s8 %v4145
        %v4147 = vlaneseq
        %v4148 = vshrl.u32 %v4147, 7
        %v4149 = vsub.s32 %v4146, %v4148
        %v4150 = vrot.slane %v4104, %v4149
        %v4151 = vcombine.high %v4150, %v4150
        %v4153 = vunpack.c.l.s4 1966171168
        %v4154 = vunpack.c.0.s8 %v4153
        %v4155 = vlaneseq
        %v4156 = vshrl.u32 %v4155, 7
        %v4157 = vsub.s32 %v4154, %v4156
        %v4158 = vrot.slane %v4150, %v4157
        %v4160 = vunpack.c.l.s4 1966171168
        %v4161 = vunpack.c.0.s8 %v4160
        %v4162 = vlaneseq
        %v4163 = vshrl.u32 %v4162, 7
        %v4164 = vsub.s32 %v4161, %v4163
        %v4165 = vrot.slane %v4151, %v4164
        %v4166 = vcombine.high %v4158, %v4158
        %v4167 = vcombine.high %v4165, %v4165
        %v4169 = vunpack.c.l.s4 1966171168
        %v4170 = vunpack.c.0.s8 %v4169
        %v4171 = vlaneseq
        %v4172 = vshrl.u32 %v4171, 7
        %v4173 = vsub.s32 %v4170, %v4172
        %v4174 = vrot.slane %v4105, %v4173
        %v4175 = vcombine.high %v4174, %v4174
        %v4177 = vunpack.c.l.s4 1966171168
        %v4178 = vunpack.c.0.s8 %v4177
        %v4179 = vlaneseq
        %v4180 = vshrl.u32 %v4179, 7
        %v4181 = vsub.s32 %v4178, %v4180
        %v4182 = vrot.slane %v4174, %v4181
        %v4184 = vunpack.c.l.s4 1966171168
        %v4185 = vunpack.c.0.s8 %v4184
        %v4186 = vlaneseq
        %v4187 = vshrl.u32 %v4186, 7
        %v4188 = vsub.s32 %v4185, %v4187
        %v4189 = vrot.slane %v4175, %v4188
        %v4190 = vcombine.high %v4182, %v4182
        %v4191 = vcombine.high %v4189, %v4189
        %v4193 = vunpack.c.l.s4 1966171168
        %v4194 = vunpack.c.0.s8 %v4193
        %v4195 = vlaneseq
        %v4196 = vshrl.u32 %v4195, 7
        %v4197 = vsub.s32 %v4194, %v4196
        %v4198 = vrot.slane %v4106, %v4197
        %v4199 = vcombine.high %v4198, %v4198
        %v4201 = vunpack.c.l.s4 1966171168
        %v4202 = vunpack.c.0.s8 %v4201
        %v4203 = vlaneseq
        %v4204 = vshrl.u32 %v4203, 7
        %v4205 = vsub.s32 %v4202, %v4204
        %v4206 = vrot.slane %v4198, %v4205
        %v4208 = vunpack.c.l.s4 1966171168
        %v4209 = vunpack.c.0.s8 %v4208
        %v4210 = vlaneseq
        %v4211 = vshrl.u32 %v4210, 7
        %v4212 = vsub.s32 %v4209, %v4211
        %v4213 = vrot.slane %v4199, %v4212
        %v4214 = vcombine.high %v4206, %v4206
        %v4215 = vcombine.high %v4213, %v4213
        %v4217 = vunpack.c.l.s4 1966171168
        %v4218 = vunpack.c.0.s8 %v4217
        %v4219 = vlaneseq
        %v4220 = vshrl.u32 %v4219, 7
        %v4221 = vsub.s32 %v4218, %v4220
        %v4222 = vrot.slane %v4107, %v4221
        %v4223 = vcombine.high %v4222, %v4222
        %v4225 = vunpack.c.l.s4 1966171168
        %v4226 = vunpack.c.0.s8 %v4225
        %v4227 = vlaneseq
        %v4228 = vshrl.u32 %v4227, 7
        %v4229 = vsub.s32 %v4226, %v4228
        %v4230 = vrot.slane %v4222, %v4229
        %v4232 = vunpack.c.l.s4 1966171168
        %v4233 = vunpack.c.0.s8 %v4232
        %v4234 = vlaneseq
        %v4235 = vshrl.u32 %v4234, 7
        %v4236 = vsub.s32 %v4233, %v4235
        %v4237 = vrot.slane %v4223, %v4236
        %v4238 = vcombine.high %v4230, %v4230
        %v4239 = vcombine.high %v4237, %v4237
        %v4241 = vunpack.c.l.s4 1966171168
        %v4242 = vunpack.c.0.s8 %v4241
        %v4243 = vlaneseq
        %v4244 = vshrl.u32 %v4243, 7
        %v4245 = vsub.s32 %v4242, %v4244
        %v4246 = vrot.slane %v4108, %v4245
        %v4247 = vcombine.high %v4246, %v4246
        %v4249 = vunpack.c.l.s4 1966171168
        %v4250 = vunpack.c.0.s8 %v4249
        %v4251 = vlaneseq
        %v4252 = vshrl.u32 %v4251, 7
        %v4253 = vsub.s32 %v4250, %v4252
        %v4254 = vrot.slane %v4246, %v4253
        %v4256 = vunpack.c.l.s4 1966171168
        %v4257 = vunpack.c.0.s8 %v4256
        %v4258 = vlaneseq
        %v4259 = vshrl.u32 %v4258, 7
        %v4260 = vsub.s32 %v4257, %v4259
        %v4261 = vrot.slane %v4247, %v4260
        %v4262 = vcombine.high %v4254, %v4254
        %v4263 = vcombine.high %v4261, %v4261
        %v4265 = vunpack.c.l.s4 1966171168
        %v4266 = vunpack.c.0.s8 %v4265
        %v4267 = vlaneseq
        %v4268 = vshrl.u32 %v4267, 7
        %v4269 = vsub.s32 %v4266, %v4268
        %v4270 = vrot.slane %v4109, %v4269
        %v4271 = vcombine.high %v4270, %v4270
        %v4273 = vunpack.c.l.s4 1966171168
        %v4274 = vunpack.c.0.s8 %v4273
        %v4275 = vlaneseq
        %v4276 = vshrl.u32 %v4275, 7
        %v4277 = vsub.s32 %v4274, %v4276
        %v4278 = vrot.slane %v4270, %v4277
        %v4280 = vunpack.c.l.s4 1966171168
        %v4281 = vunpack.c.0.s8 %v4280
        %v4282 = vlaneseq
        %v4283 = vshrl.u32 %v4282, 7
        %v4284 = vsub.s32 %v4281, %v4283
        %v4285 = vrot.slane %v4271, %v4284
        %v4286 = vcombine.high %v4278, %v4278
        %v4287 = vcombine.high %v4285, %v4285
        %v4289 = vunpack.c.l.s4 1966171168
        %v4290 = vunpack.c.0.s8 %v4289
        %v4291 = vlaneseq
        %v4292 = vshrl.u32 %v4291, 7
        %v4293 = vsub.s32 %v4290, %v4292
        %v4294 = vrot.slane %v4110, %v4293
        %v4295 = vcombine.high %v4294, %v4294
        %v4297 = vunpack.c.l.s4 1966171168
        %v4298 = vunpack.c.0.s8 %v4297
        %v4299 = vlaneseq
        %v4300 = vshrl.u32 %v4299, 7
        %v4301 = vsub.s32 %v4298, %v4300
        %v4302 = vrot.slane %v4294, %v4301
        %v4304 = vunpack.c.l.s4 1966171168
        %v4305 = vunpack.c.0.s8 %v4304
        %v4306 = vlaneseq
        %v4307 = vshrl.u32 %v4306, 7
        %v4308 = vsub.s32 %v4305, %v4307
        %v4309 = vrot.slane %v4295, %v4308
        %v4310 = vcombine.high %v4302, %v4302
        %v4311 = vcombine.high %v4309, %v4309
        %v4313 = vunpack.c.l.s4 1966171168
        %v4314 = vunpack.c.0.s8 %v4313
        %v4315 = vlaneseq
        %v4316 = vshrl.u32 %v4315, 7
        %v4317 = vsub.s32 %v4314, %v4316
        %v4318 = vrot.slane %v4111, %v4317
        %v4319 = vcombine.high %v4318, %v4318
        %v4321 = vunpack.c.l.s4 1966171168
        %v4322 = vunpack.c.0.s8 %v4321
        %v4323 = vlaneseq
        %v4324 = vshrl.u32 %v4323, 7
        %v4325 = vsub.s32 %v4322, %v4324
        %v4326 = vrot.slane %v4318, %v4325
        %v4328 = vunpack.c.l.s4 1966171168
        %v4329 = vunpack.c.0.s8 %v4328
        %v4330 = vlaneseq
        %v4331 = vshrl.u32 %v4330, 7
        %v4332 = vsub.s32 %v4329, %v4331
        %v4333 = vrot.slane %v4319, %v4332
        %v4334 = vcombine.high %v4326, %v4326
        %v4335 = vcombine.high %v4333, %v4333
        %v4337 = vunpack.c.l.s4 1966171168
        %v4338 = vunpack.c.0.s8 %v4337
        %v4339 = vlaneseq
        %v4340 = vshrl.u32 %v4339, 7
        %v4341 = vsub.s32 %v4338, %v4340
        %v4342 = vrot.slane %v4112, %v4341
        %v4343 = vcombine.high %v4342, %v4342
        %v4345 = vunpack.c.l.s4 1966171168
        %v4346 = vunpack.c.0.s8 %v4345
        %v4347 = vlaneseq
        %v4348 = vshrl.u32 %v4347, 7
        %v4349 = vsub.s32 %v4346, %v4348
        %v4350 = vrot.slane %v4342, %v4349
        %v4352 = vunpack.c.l.s4 1966171168
        %v4353 = vunpack.c.0.s8 %v4352
        %v4354 = vlaneseq
        %v4355 = vshrl.u32 %v4354, 7
        %v4356 = vsub.s32 %v4353, %v4355
        %v4357 = vrot.slane %v4343, %v4356
        %v4358 = vcombine.high %v4350, %v4350
        %v4359 = vcombine.high %v4357, %v4357
        %v4361 = vunpack.c.l.s4 1966171168
        %v4362 = vunpack.c.0.s8 %v4361
        %v4363 = vlaneseq
        %v4364 = vshrl.u32 %v4363, 7
        %v4365 = vsub.s32 %v4362, %v4364
        %v4366 = vrot.slane %v4113, %v4365
        %v4367 = vcombine.high %v4366, %v4366
        %v4369 = vunpack.c.l.s4 1966171168
        %v4370 = vunpack.c.0.s8 %v4369
        %v4371 = vlaneseq
        %v4372 = vshrl.u32 %v4371, 7
        %v4373 = vsub.s32 %v4370, %v4372
        %v4374 = vrot.slane %v4366, %v4373
        %v4376 = vunpack.c.l.s4 1966171168
        %v4377 = vunpack.c.0.s8 %v4376
        %v4378 = vlaneseq
        %v4379 = vshrl.u32 %v4378, 7
        %v4380 = vsub.s32 %v4377, %v4379
        %v4381 = vrot.slane %v4367, %v4380
        %v4382 = vcombine.high %v4374, %v4374
        %v4383 = vcombine.high %v4381, %v4381
        %v4385 = vunpack.c.l.s4 1966171168
        %v4386 = vunpack.c.0.s8 %v4385
        %v4387 = vlaneseq
        %v4388 = vshrl.u32 %v4387, 7
        %v4389 = vsub.s32 %v4386, %v4388
        %v4390 = vrot.slane %v4114, %v4389
        %v4391 = vcombine.high %v4390, %v4390
        %v4393 = vunpack.c.l.s4 1966171168
        %v4394 = vunpack.c.0.s8 %v4393
        %v4395 = vlaneseq
        %v4396 = vshrl.u32 %v4395, 7
        %v4397 = vsub.s32 %v4394, %v4396
        %v4398 = vrot.slane %v4390, %v4397
        %v4400 = vunpack.c.l.s4 1966171168
        %v4401 = vunpack.c.0.s8 %v4400
        %v4402 = vlaneseq
        %v4403 = vshrl.u32 %v4402, 7
        %v4404 = vsub.s32 %v4401, %v4403
        %v4405 = vrot.slane %v4391, %v4404
        %v4406 = vcombine.high %v4398, %v4398
        %v4407 = vcombine.high %v4405, %v4405
        %v4409 = vunpack.c.l.s4 1966171168
        %v4410 = vunpack.c.0.s8 %v4409
        %v4411 = vlaneseq
        %v4412 = vshrl.u32 %v4411, 7
        %v4413 = vsub.s32 %v4410, %v4412
        %v4414 = vrot.slane %v4115, %v4413
        %v4415 = vcombine.high %v4414, %v4414
        %v4417 = vunpack.c.l.s4 1966171168
        %v4418 = vunpack.c.0.s8 %v4417
        %v4419 = vlaneseq
        %v4420 = vshrl.u32 %v4419, 7
        %v4421 = vsub.s32 %v4418, %v4420
        %v4422 = vrot.slane %v4414, %v4421
        %v4424 = vunpack.c.l.s4 1966171168
        %v4425 = vunpack.c.0.s8 %v4424
        %v4426 = vlaneseq
        %v4427 = vshrl.u32 %v4426, 7
        %v4428 = vsub.s32 %v4425, %v4427
        %v4429 = vrot.slane %v4415, %v4428
        %v4430 = vcombine.high %v4422, %v4422
        %v4431 = vcombine.high %v4429, %v4429
        %v4433 = vunpack.c.l.s4 1966171168
        %v4434 = vunpack.c.0.s8 %v4433
        %v4435 = vlaneseq
        %v4436 = vshrl.u32 %v4435, 7
        %v4437 = vsub.s32 %v4434, %v4436
        %v4438 = vrot.slane %v4116, %v4437
        %v4439 = vcombine.high %v4438, %v4438
        %v4441 = vunpack.c.l.s4 1966171168
        %v4442 = vunpack.c.0.s8 %v4441
        %v4443 = vlaneseq
        %v4444 = vshrl.u32 %v4443, 7
        %v4445 = vsub.s32 %v4442, %v4444
        %v4446 = vrot.slane %v4438, %v4445
        %v4448 = vunpack.c.l.s4 1966171168
        %v4449 = vunpack.c.0.s8 %v4448
        %v4450 = vlaneseq
        %v4451 = vshrl.u32 %v4450, 7
        %v4452 = vsub.s32 %v4449, %v4451
        %v4453 = vrot.slane %v4439, %v4452
        %v4454 = vcombine.high %v4446, %v4446
        %v4455 = vcombine.high %v4453, %v4453
        %v4457 = vunpack.c.l.s4 1966171168
        %v4458 = vunpack.c.0.s8 %v4457
        %v4459 = vlaneseq
        %v4460 = vshrl.u32 %v4459, 7
        %v4461 = vsub.s32 %v4458, %v4460
        %v4462 = vrot.slane %v4117, %v4461
        %v4463 = vcombine.high %v4462, %v4462
        %v4465 = vunpack.c.l.s4 1966171168
        %v4466 = vunpack.c.0.s8 %v4465
        %v4467 = vlaneseq
        %v4468 = vshrl.u32 %v4467, 7
        %v4469 = vsub.s32 %v4466, %v4468
        %v4470 = vrot.slane %v4462, %v4469
        %v4472 = vunpack.c.l.s4 1966171168
        %v4473 = vunpack.c.0.s8 %v4472
        %v4474 = vlaneseq
        %v4475 = vshrl.u32 %v4474, 7
        %v4476 = vsub.s32 %v4473, %v4475
        %v4477 = vrot.slane %v4463, %v4476
        %v4478 = vcombine.high %v4470, %v4470
        %v4479 = vcombine.high %v4477, %v4477
        %v4481 = vunpack.c.l.s4 1966171168
        %v4482 = vunpack.c.0.s8 %v4481
        %v4483 = vlaneseq
        %v4484 = vshrl.u32 %v4483, 7
        %v4485 = vsub.s32 %v4482, %v4484
        %v4486 = vrot.slane %v4118, %v4485
        %v4487 = vcombine.high %v4486, %v4486
        %v4489 = vunpack.c.l.s4 1966171168
        %v4490 = vunpack.c.0.s8 %v4489
        %v4491 = vlaneseq
        %v4492 = vshrl.u32 %v4491, 7
        %v4493 = vsub.s32 %v4490, %v4492
        %v4494 = vrot.slane %v4486, %v4493
        %v4496 = vunpack.c.l.s4 1966171168
        %v4497 = vunpack.c.0.s8 %v4496
        %v4498 = vlaneseq
        %v4499 = vshrl.u32 %v4498, 7
        %v4500 = vsub.s32 %v4497, %v4499
        %v4501 = vrot.slane %v4487, %v4500
        %v4502 = vcombine.high %v4494, %v4494
        %v4503 = vcombine.high %v4501, %v4501
        %v4505 = vunpack.c.l.s4 1966171168
        %v4506 = vunpack.c.0.s8 %v4505
        %v4507 = vlaneseq
        %v4508 = vshrl.u32 %v4507, 7
        %v4509 = vsub.s32 %v4506, %v4508
        %v4510 = vrot.slane %v4119, %v4509
        %v4511 = vcombine.high %v4510, %v4510
        %v4513 = vunpack.c.l.s4 1966171168
        %v4514 = vunpack.c.0.s8 %v4513
        %v4515 = vlaneseq
        %v4516 = vshrl.u32 %v4515, 7
        %v4517 = vsub.s32 %v4514, %v4516
        %v4518 = vrot.slane %v4510, %v4517
        %v4520 = vunpack.c.l.s4 1966171168
        %v4521 = vunpack.c.0.s8 %v4520
        %v4522 = vlaneseq
        %v4523 = vshrl.u32 %v4522, 7
        %v4524 = vsub.s32 %v4521, %v4523
        %v4525 = vrot.slane %v4511, %v4524
        %v4526 = vcombine.high %v4518, %v4518
        %v4527 = vcombine.high %v4525, %v4525
        %v4529 = vunpack.c.l.s4 1966171168
        %v4530 = vunpack.c.0.s8 %v4529
        %v4531 = vlaneseq
        %v4532 = vshrl.u32 %v4531, 7
        %v4533 = vsub.s32 %v4530, %v4532
        %v4534 = vrot.slane %v4120, %v4533
        %v4535 = vcombine.high %v4534, %v4534
        %v4537 = vunpack.c.l.s4 1966171168
        %v4538 = vunpack.c.0.s8 %v4537
        %v4539 = vlaneseq
        %v4540 = vshrl.u32 %v4539, 7
        %v4541 = vsub.s32 %v4538, %v4540
        %v4542 = vrot.slane %v4534, %v4541
        %v4544 = vunpack.c.l.s4 1966171168
        %v4545 = vunpack.c.0.s8 %v4544
        %v4546 = vlaneseq
        %v4547 = vshrl.u32 %v4546, 7
        %v4548 = vsub.s32 %v4545, %v4547
        %v4549 = vrot.slane %v4535, %v4548
        %v4550 = vcombine.high %v4542, %v4542
        %v4551 = vcombine.high %v4549, %v4549
        %v4553 = vunpack.c.l.s4 1966171168
        %v4554 = vunpack.c.0.s8 %v4553
        %v4555 = vlaneseq
        %v4556 = vshrl.u32 %v4555, 7
        %v4557 = vsub.s32 %v4554, %v4556
        %v4558 = vrot.slane %v4121, %v4557
        %v4559 = vcombine.high %v4558, %v4558
        %v4561 = vunpack.c.l.s4 1966171168
        %v4562 = vunpack.c.0.s8 %v4561
        %v4563 = vlaneseq
        %v4564 = vshrl.u32 %v4563, 7
        %v4565 = vsub.s32 %v4562, %v4564
        %v4566 = vrot.slane %v4558, %v4565
        %v4568 = vunpack.c.l.s4 1966171168
        %v4569 = vunpack.c.0.s8 %v4568
        %v4570 = vlaneseq
        %v4571 = vshrl.u32 %v4570, 7
        %v4572 = vsub.s32 %v4569, %v4571
        %v4573 = vrot.slane %v4559, %v4572
        %v4574 = vcombine.high %v4566, %v4566
        %v4575 = vcombine.high %v4573, %v4573
        %v4577 = vunpack.c.l.s4 1966171168
        %v4578 = vunpack.c.0.s8 %v4577
        %v4579 = vlaneseq
        %v4580 = vshrl.u32 %v4579, 7
        %v4581 = vsub.s32 %v4578, %v4580
        %v4582 = vrot.slane %v4122, %v4581
        %v4583 = vcombine.high %v4582, %v4582
        %v4585 = vunpack.c.l.s4 1966171168
        %v4586 = vunpack.c.0.s8 %v4585
        %v4587 = vlaneseq
        %v4588 = vshrl.u32 %v4587, 7
        %v4589 = vsub.s32 %v4586, %v4588
        %v4590 = vrot.slane %v4582, %v4589
        %v4592 = vunpack.c.l.s4 1966171168
        %v4593 = vunpack.c.0.s8 %v4592
        %v4594 = vlaneseq
        %v4595 = vshrl.u32 %v4594, 7
        %v4596 = vsub.s32 %v4593, %v4595
        %v4597 = vrot.slane %v4583, %v4596
        %v4598 = vcombine.high %v4590, %v4590
        %v4599 = vcombine.high %v4597, %v4597
        %v4601 = vunpack.c.l.s4 1966171168
        %v4602 = vunpack.c.0.s8 %v4601
        %v4603 = vlaneseq
        %v4604 = vshrl.u32 %v4603, 7
        %v4605 = vsub.s32 %v4602, %v4604
        %v4606 = vrot.slane %v4123, %v4605
        %v4607 = vcombine.high %v4606, %v4606
        %v4609 = vunpack.c.l.s4 1966171168
        %v4610 = vunpack.c.0.s8 %v4609
        %v4611 = vlaneseq
        %v4612 = vshrl.u32 %v4611, 7
        %v4613 = vsub.s32 %v4610, %v4612
        %v4614 = vrot.slane %v4606, %v4613
        %v4616 = vunpack.c.l.s4 1966171168
        %v4617 = vunpack.c.0.s8 %v4616
        %v4618 = vlaneseq
        %v4619 = vshrl.u32 %v4618, 7
        %v4620 = vsub.s32 %v4617, %v4619
        %v4621 = vrot.slane %v4607, %v4620
        %v4622 = vcombine.high %v4614, %v4614
        %v4623 = vcombine.high %v4621, %v4621
        %v4705 = vshrl.u32 %v4158, 16
        %v4707 = vrot.slane %v4705, 7
        %v4708 = vrot.slane %v4707, 1
        %v4710 = vshrl.u32 %v4165, 16
        %v4712 = vrot.slane %v4710, 7
        %v4713 = vrot.slane %v4712, 1
        %v4715 = vshrl.u32 %v4166, 16
        %v4717 = vrot.slane %v4715, 7
        %v4718 = vrot.slane %v4717, 1
        %v4720 = vshrl.u32 %v4167, 16
        %v4722 = vrot.slane %v4720, 7
        %v4723 = vrot.slane %v4722, 1
        %v4725 = vshrl.u32 %v4182, 16
        %v4727 = vrot.slane %v4725, 7
        %v4728 = vrot.slane %v4727, 1
        %v4730 = vshrl.u32 %v4189, 16
        %v4732 = vrot.slane %v4730, 7
        %v4733 = vrot.slane %v4732, 1
        %v4735 = vshrl.u32 %v4190, 16
        %v4737 = vrot.slane %v4735, 7
        %v4738 = vrot.slane %v4737, 1
        %v4740 = vshrl.u32 %v4191, 16
        %v4742 = vrot.slane %v4740, 7
        %v4743 = vrot.slane %v4742, 1
        %v4745 = vshrl.u32 %v4206, 16
        %v4747 = vrot.slane %v4745, 7
        %v4748 = vrot.slane %v4747, 1
        %v4750 = vshrl.u32 %v4213, 16
        %v4752 = vrot.slane %v4750, 7
        %v4753 = vrot.slane %v4752, 1
        %v4755 = vshrl.u32 %v4214, 16
        %v4757 = vrot.slane %v4755, 7
        %v4758 = vrot.slane %v4757, 1
        %v4760 = vshrl.u32 %v4215, 16
        %v4762 = vrot.slane %v4760, 7
        %v4763 = vrot.slane %v4762, 1
        %v4765 = vshrl.u32 %v4230, 16
        %v4767 = vrot.slane %v4765, 7
        %v4768 = vrot.slane %v4767, 1
        %v4770 = vshrl.u32 %v4237, 16
        %v4772 = vrot.slane %v4770, 7
        %v4773 = vrot.slane %v4772, 1
        %v4775 = vshrl.u32 %v4238, 16
        %v4777 = vrot.slane %v4775, 7
        %v4778 = vrot.slane %v4777, 1
        %v4780 = vshrl.u32 %v4239, 16
        %v4782 = vrot.slane %v4780, 7
        %v4783 = vrot.slane %v4782, 1
        %v4785 = vshrl.u32 %v4254, 16
        %v4787 = vrot.slane %v4785, 7
        %v4788 = vrot.slane %v4787, 1
        %v4790 = vshrl.u32 %v4261, 16
        %v4792 = vrot.slane %v4790, 7
        %v4793 = vrot.slane %v4792, 1
        %v4795 = vshrl.u32 %v4262, 16
        %v4797 = vrot.slane %v4795, 7
        %v4798 = vrot.slane %v4797, 1
        %v4800 = vshrl.u32 %v4263, 16
        %v4802 = vrot.slane %v4800, 7
        %v4803 = vrot.slane %v4802, 1
        %v4805 = vshrl.u32 %v4278, 16
        %v4807 = vrot.slane %v4805, 7
        %v4808 = vrot.slane %v4807, 1
        %v4810 = vshrl.u32 %v4285, 16
        %v4812 = vrot.slane %v4810, 7
        %v4813 = vrot.slane %v4812, 1
        %v4815 = vshrl.u32 %v4286, 16
        %v4817 = vrot.slane %v4815, 7
        %v4818 = vrot.slane %v4817, 1
        %v4820 = vshrl.u32 %v4287, 16
        %v4822 = vrot.slane %v4820, 7
        %v4823 = vrot.slane %v4822, 1
        %v4825 = vshrl.u32 %v4302, 16
        %v4827 = vrot.slane %v4825, 7
        %v4828 = vrot.slane %v4827, 1
        %v4830 = vshrl.u32 %v4309, 16
        %v4832 = vrot.slane %v4830, 7
        %v4833 = vrot.slane %v4832, 1
        %v4835 = vshrl.u32 %v4310, 16
        %v4837 = vrot.slane %v4835, 7
        %v4838 = vrot.slane %v4837, 1
        %v4840 = vshrl.u32 %v4311, 16
        %v4842 = vrot.slane %v4840, 7
        %v4843 = vrot.slane %v4842, 1
        %v4845 = vshrl.u32 %v4326, 16
        %v4847 = vrot.slane %v4845, 7
        %v4848 = vrot.slane %v4847, 1
        %v4850 = vshrl.u32 %v4333, 16
        %v4852 = vrot.slane %v4850, 7
        %v4853 = vrot.slane %v4852, 1
        %v4855 = vshrl.u32 %v4334, 16
        %v4857 = vrot.slane %v4855, 7
        %v4858 = vrot.slane %v4857, 1
        %v4860 = vshrl.u32 %v4335, 16
        %v4862 = vrot.slane %v4860, 7
        %v4863 = vrot.slane %v4862, 1
        %v4865 = vshrl.u32 %v4350, 16
        %v4867 = vrot.slane %v4865, 7
        %v4868 = vrot.slane %v4867, 1
        %v4870 = vshrl.u32 %v4357, 16
        %v4872 = vrot.slane %v4870, 7
        %v4873 = vrot.slane %v4872, 1
        %v4875 = vshrl.u32 %v4358, 16
        %v4877 = vrot.slane %v4875, 7
        %v4878 = vrot.slane %v4877, 1
        %v4880 = vshrl.u32 %v4359, 16
        %v4882 = vrot.slane %v4880, 7
        %v4883 = vrot.slane %v4882, 1
        %v4885 = vshrl.u32 %v4374, 16
        %v4887 = vrot.slane %v4885, 7
        %v4888 = vrot.slane %v4887, 1
        %v4890 = vshrl.u32 %v4381, 16
        %v4892 = vrot.slane %v4890, 7
        %v4893 = vrot.slane %v4892, 1
        %v4895 = vshrl.u32 %v4382, 16
        %v4897 = vrot.slane %v4895, 7
        %v4898 = vrot.slane %v4897, 1
        %v4900 = vshrl.u32 %v4383, 16
        %v4902 = vrot.slane %v4900, 7
        %v4903 = vrot.slane %v4902, 1
        %v4905 = vshrl.u32 %v4398, 16
        %v4907 = vrot.slane %v4905, 7
        %v4908 = vrot.slane %v4907, 1
        %v4910 = vshrl.u32 %v4405, 16
        %v4912 = vrot.slane %v4910, 7
        %v4913 = vrot.slane %v4912, 1
        %v4915 = vshrl.u32 %v4406, 16
        %v4917 = vrot.slane %v4915, 7
        %v4918 = vrot.slane %v4917, 1
        %v4920 = vshrl.u32 %v4407, 16
        %v4922 = vrot.slane %v4920, 7
        %v4923 = vrot.slane %v4922, 1
        %v4925 = vshrl.u32 %v4422, 16
        %v4927 = vrot.slane %v4925, 7
        %v4928 = vrot.slane %v4927, 1
        %v4930 = vshrl.u32 %v4429, 16
        %v4932 = vrot.slane %v4930, 7
        %v4933 = vrot.slane %v4932, 1
        %v4935 = vshrl.u32 %v4430, 16
        %v4937 = vrot.slane %v4935, 7
        %v4938 = vrot.slane %v4937, 1
        %v4940 = vshrl.u32 %v4431, 16
        %v4942 = vrot.slane %v4940, 7
        %v4943 = vrot.slane %v4942, 1
        %v4945 = vshrl.u32 %v4446, 16
        %v4947 = vrot.slane %v4945, 7
        %v4948 = vrot.slane %v4947, 1
        %v4950 = vshrl.u32 %v4453, 16
        %v4952 = vrot.slane %v4950, 7
        %v4953 = vrot.slane %v4952, 1
        %v4955 = vshrl.u32 %v4454, 16
        %v4957 = vrot.slane %v4955, 7
        %v4958 = vrot.slane %v4957, 1
        %v4960 = vshrl.u32 %v4455, 16
        %v4962 = vrot.slane %v4960, 7
        %v4963 = vrot.slane %v4962, 1
        %v4965 = vshrl.u32 %v4470, 16
        %v4967 = vrot.slane %v4965, 7
        %v4968 = vrot.slane %v4967, 1
        %v4970 = vshrl.u32 %v4477, 16
        %v4972 = vrot.slane %v4970, 7
        %v4973 = vrot.slane %v4972, 1
        %v4975 = vshrl.u32 %v4478, 16
        %v4977 = vrot.slane %v4975, 7
        %v4978 = vrot.slane %v4977, 1
        %v4980 = vshrl.u32 %v4479, 16
        %v4982 = vrot.slane %v4980, 7
        %v4983 = vrot.slane %v4982, 1
        %v4985 = vshrl.u32 %v4494, 16
        %v4987 = vrot.slane %v4985, 7
        %v4988 = vrot.slane %v4987, 1
        %v4990 = vshrl.u32 %v4501, 16
        %v4992 = vrot.slane %v4990, 7
        %v4993 = vrot.slane %v4992, 1
        %v4995 = vshrl.u32 %v4502, 16
        %v4997 = vrot.slane %v4995, 7
        %v4998 = vrot.slane %v4997, 1
        %v5000 = vshrl.u32 %v4503, 16
        %v5002 = vrot.slane %v5000, 7
        %v5003 = vrot.slane %v5002, 1
        %v5005 = vshrl.u32 %v4518, 16
        %v5007 = vrot.slane %v5005, 7
        %v5008 = vrot.slane %v5007, 1
        %v5010 = vshrl.u32 %v4525, 16
        %v5012 = vrot.slane %v5010, 7
        %v5013 = vrot.slane %v5012, 1
        %v5015 = vshrl.u32 %v4526, 16
        %v5017 = vrot.slane %v5015, 7
        %v5018 = vrot.slane %v5017, 1
        %v5020 = vshrl.u32 %v4527, 16
        %v5022 = vrot.slane %v5020, 7
        %v5023 = vrot.slane %v5022, 1
        %v5025 = vshrl.u32 %v4542, 16
        %v5027 = vrot.slane %v5025, 7
        %v5028 = vrot.slane %v5027, 1
        %v5030 = vshrl.u32 %v4549, 16
        %v5032 = vrot.slane %v5030, 7
        %v5033 = vrot.slane %v5032, 1
        %v5035 = vshrl.u32 %v4550, 16
        %v5037 = vrot.slane %v5035, 7
        %v5038 = vrot.slane %v5037, 1
        %v5040 = vshrl.u32 %v4551, 16
        %v5042 = vrot.slane %v5040, 7
        %v5043 = vrot.slane %v5042, 1
        %v5045 = vshrl.u32 %v4566, 16
        %v5047 = vrot.slane %v5045, 7
        %v5048 = vrot.slane %v5047, 1
        %v5050 = vshrl.u32 %v4573, 16
        %v5052 = vrot.slane %v5050, 7
        %v5053 = vrot.slane %v5052, 1
        %v5055 = vshrl.u32 %v4574, 16
        %v5057 = vrot.slane %v5055, 7
        %v5058 = vrot.slane %v5057, 1
        %v5060 = vshrl.u32 %v4575, 16
        %v5062 = vrot.slane %v5060, 7
        %v5063 = vrot.slane %v5062, 1
        %v5065 = vshrl.u32 %v4590, 16
        %v5067 = vrot.slane %v5065, 7
        %v5068 = vrot.slane %v5067, 1
        %v5070 = vshrl.u32 %v4597, 16
        %v5072 = vrot.slane %v5070, 7
        %v5073 = vrot.slane %v5072, 1
        %v5075 = vshrl.u32 %v4598, 16
        %v5077 = vrot.slane %v5075, 7
        %v5078 = vrot.slane %v5077, 1
        %v5080 = vshrl.u32 %v4599, 16
        %v5082 = vrot.slane %v5080, 7
        %v5083 = vrot.slane %v5082, 1
        %v5085 = vshrl.u32 %v4614, 16
        %v5087 = vrot.slane %v5085, 7
        %v5088 = vrot.slane %v5087, 1
        %v5090 = vshrl.u32 %v4621, 16
        %v5092 = vrot.slane %v5090, 7
        %v5093 = vrot.slane %v5092, 1
        %v5095 = vshrl.u32 %v4622, 16
        %v5097 = vrot.slane %v5095, 7
        %v5098 = vrot.slane %v5097, 1
        %v5100 = vshrl.u32 %v4623, 16
        %v5102 = vrot.slane %v5100, 7
        %v5103 = vrot.slane %v5102, 1
        %v5184 = vmax.bf16 %v4158, %v4708
        %v5185 = vmax.bf16 %v4165, %v4713
        %v5186 = vmax.bf16 %v4166, %v4718
        %v5187 = vmax.bf16 %v4167, %v4723
        %v5188 = vmax.bf16 %v4182, %v4728
        %v5189 = vmax.bf16 %v4189, %v4733
        %v5190 = vmax.bf16 %v4190, %v4738
        %v5191 = vmax.bf16 %v4191, %v4743
        %v5192 = vmax.bf16 %v4206, %v4748
        %v5193 = vmax.bf16 %v4213, %v4753
        %v5194 = vmax.bf16 %v4214, %v4758
        %v5195 = vmax.bf16 %v4215, %v4763
        %v5196 = vmax.bf16 %v4230, %v4768
        %v5197 = vmax.bf16 %v4237, %v4773
        %v5198 = vmax.bf16 %v4238, %v4778
        %v5199 = vmax.bf16 %v4239, %v4783
        %v5200 = vmax.bf16 %v4254, %v4788
        %v5201 = vmax.bf16 %v4261, %v4793
        %v5202 = vmax.bf16 %v4262, %v4798
        %v5203 = vmax.bf16 %v4263, %v4803
        %v5204 = vmax.bf16 %v4278, %v4808
        %v5205 = vmax.bf16 %v4285, %v4813
        %v5206 = vmax.bf16 %v4286, %v4818
        %v5207 = vmax.bf16 %v4287, %v4823
        %v5208 = vmax.bf16 %v4302, %v4828
        %v5209 = vmax.bf16 %v4309, %v4833
        %v5210 = vmax.bf16 %v4310, %v4838
        %v5211 = vmax.bf16 %v4311, %v4843
        %v5212 = vmax.bf16 %v4326, %v4848
        %v5213 = vmax.bf16 %v4333, %v4853
        %v5214 = vmax.bf16 %v4334, %v4858
        %v5215 = vmax.bf16 %v4335, %v4863
        %v5216 = vmax.bf16 %v4350, %v4868
        %v5217 = vmax.bf16 %v4357, %v4873
        %v5218 = vmax.bf16 %v4358, %v4878
        %v5219 = vmax.bf16 %v4359, %v4883
        %v5220 = vmax.bf16 %v4374, %v4888
        %v5221 = vmax.bf16 %v4381, %v4893
        %v5222 = vmax.bf16 %v4382, %v4898
        %v5223 = vmax.bf16 %v4383, %v4903
        %v5224 = vmax.bf16 %v4398, %v4908
        %v5225 = vmax.bf16 %v4405, %v4913
        %v5226 = vmax.bf16 %v4406, %v4918
        %v5227 = vmax.bf16 %v4407, %v4923
        %v5228 = vmax.bf16 %v4422, %v4928
        %v5229 = vmax.bf16 %v4429, %v4933
        %v5230 = vmax.bf16 %v4430, %v4938
        %v5231 = vmax.bf16 %v4431, %v4943
        %v5232 = vmax.bf16 %v4446, %v4948
        %v5233 = vmax.bf16 %v4453, %v4953
        %v5234 = vmax.bf16 %v4454, %v4958
        %v5235 = vmax.bf16 %v4455, %v4963
        %v5236 = vmax.bf16 %v4470, %v4968
        %v5237 = vmax.bf16 %v4477, %v4973
        %v5238 = vmax.bf16 %v4478, %v4978
        %v5239 = vmax.bf16 %v4479, %v4983
        %v5240 = vmax.bf16 %v4494, %v4988
        %v5241 = vmax.bf16 %v4501, %v4993
        %v5242 = vmax.bf16 %v4502, %v4998
        %v5243 = vmax.bf16 %v4503, %v5003
        %v5244 = vmax.bf16 %v4518, %v5008
        %v5245 = vmax.bf16 %v4525, %v5013
        %v5246 = vmax.bf16 %v4526, %v5018
        %v5247 = vmax.bf16 %v4527, %v5023
        %v5248 = vmax.bf16 %v4542, %v5028
        %v5249 = vmax.bf16 %v4549, %v5033
        %v5250 = vmax.bf16 %v4550, %v5038
        %v5251 = vmax.bf16 %v4551, %v5043
        %v5252 = vmax.bf16 %v4566, %v5048
        %v5253 = vmax.bf16 %v4573, %v5053
        %v5254 = vmax.bf16 %v4574, %v5058
        %v5255 = vmax.bf16 %v4575, %v5063
        %v5256 = vmax.bf16 %v4590, %v5068
        %v5257 = vmax.bf16 %v4597, %v5073
        %v5258 = vmax.bf16 %v4598, %v5078
        %v5259 = vmax.bf16 %v4599, %v5083
        %v5260 = vmax.bf16 %v4614, %v5088
        %v5261 = vmax.bf16 %v4621, %v5093
        %v5262 = vmax.bf16 %v4622, %v5098
        %v5263 = vmax.bf16 %v4623, %v5103
        %s5264 = smul.u32 %s25, 8
        %s5265 = ssub.s32 %s5264, 1
        %v5266 = vstv %s5265
        %v5267 = vadd.s32 %v5266, 1
        %v5268 = vadd.s32 %v5266, 2
        %v5269 = vadd.s32 %v5266, 3
        %v5270 = vadd.s32 %v5266, 4
        %v5271 = vadd.s32 %v5266, 5
        %v5272 = vadd.s32 %v5266, 6
        %v5273 = vadd.s32 %v5266, 7
        %v5274 = vadd.s32 %v5266, 8
        %v5275 = vadd.s32 %v5266, 9
        %vm5276 = vcmp.ge.s32.totalorder %v5266, 0
        %vm5277 = vcmp.ge.s32.totalorder %v5267, 0
        %vm5278 = vcmp.ge.s32.totalorder %v5268, 0
        %vm5279 = vcmp.ge.s32.totalorder %v5269, 0
        %vm5280 = vcmp.ge.s32.totalorder %v5270, 0
        %vm5281 = vcmp.ge.s32.totalorder %v5271, 0
        %vm5282 = vcmp.ge.s32.totalorder %v5272, 0
        %vm5283 = vcmp.ge.s32.totalorder %v5273, 0
        %vm5284 = vcmp.ge.s32.totalorder %v5274, 0
        %vm5285 = vcmp.ge.s32.totalorder %v5275, 0
        %vm5286 = vcmp.lt.s32.totalorder %v5266, 8
        %vm5287 = vcmp.lt.s32.totalorder %v5267, 8
        %vm5288 = vcmp.lt.s32.totalorder %v5268, 8
        %vm5289 = vcmp.lt.s32.totalorder %v5269, 8
        %vm5290 = vcmp.lt.s32.totalorder %v5270, 8
        %vm5291 = vcmp.lt.s32.totalorder %v5271, 8
        %vm5292 = vcmp.lt.s32.totalorder %v5272, 8
        %vm5293 = vcmp.lt.s32.totalorder %v5273, 8
        %vm5294 = vcmp.lt.s32.totalorder %v5274, 8
        %vm5295 = vcmp.lt.s32.totalorder %v5275, 8
        %vm5296 = vmand %vm5276, %vm5286
        %vm5297 = vmand %vm5277, %vm5287
        %vm5298 = vmand %vm5278, %vm5288
        %vm5299 = vmand %vm5279, %vm5289
        %vm5300 = vmand %vm5280, %vm5290
        %vm5301 = vmand %vm5281, %vm5291
        %vm5302 = vmand %vm5282, %vm5292
        %vm5303 = vmand %vm5283, %vm5293
        %vm5304 = vmand %vm5284, %vm5294
        %vm5305 = vmand %vm5285, %vm5295
        %v5306 = vsel %vm5296, 1, 0
        %v5307 = vsel %vm5297, 1, 0
        %v5308 = vsel %vm5298, 1, 0
        %v5309 = vsel %vm5299, 1, 0
        %v5310 = vsel %vm5300, 1, 0
        %v5311 = vsel %vm5301, 1, 0
        %v5312 = vsel %vm5302, 1, 0
        %v5313 = vsel %vm5303, 1, 0
        %v5314 = vsel %vm5304, 1, 0
        %v5315 = vsel %vm5305, 1, 0
        %vm5316 = vcmp.eq.s32.totalorder %v5306, 1
        %vm5317 = vcmp.eq.s32.totalorder %v5307, 1
        %vm5318 = vcmp.eq.s32.totalorder %v5308, 1
        %vm5319 = vcmp.eq.s32.totalorder %v5309, 1
        %vm5320 = vcmp.eq.s32.totalorder %v5310, 1
        %vm5321 = vcmp.eq.s32.totalorder %v5311, 1
        %vm5322 = vcmp.eq.s32.totalorder %v5312, 1
        %vm5323 = vcmp.eq.s32.totalorder %v5313, 1
        %vm5324 = vcmp.eq.s32.totalorder %v5314, 1
        %vm5325 = vcmp.eq.s32.totalorder %v5315, 1
        %v5326 = vsel %vm5316, 1, 0
        %v5327 = vsel %vm5317, 1, 0
        %v5328 = vsel %vm5318, 1, 0
        %v5329 = vsel %vm5319, 1, 0
        %v5330 = vsel %vm5320, 1, 0
        %v5331 = vsel %vm5321, 1, 0
        %v5332 = vsel %vm5322, 1, 0
        %v5333 = vsel %vm5323, 1, 0
        %v5334 = vsel %vm5324, 1, 0
        %v5335 = vsel %vm5325, 1, 0
        %v5336 = vpack.c.b16 %v5326, %v5326
        %v5337 = vpack.c.b16 %v5327, %v5327
        %v5338 = vpack.c.b16 %v5328, %v5328
        %v5339 = vpack.c.b16 %v5329, %v5329
        %v5340 = vpack.c.b16 %v5330, %v5330
        %v5341 = vpack.c.b16 %v5331, %v5331
        %v5342 = vpack.c.b16 %v5332, %v5332
        %v5343 = vpack.c.b16 %v5333, %v5333
        %v5344 = vpack.c.b16 %v5334, %v5334
        %v5345 = vpack.c.b16 %v5335, %v5335
        %vm5346 = vcmp.ne.s16.totalorder %v5336, 0
        %vm5347 = vcmp.ne.s16.totalorder %v5337, 0
        %vm5348 = vcmp.ne.s16.totalorder %v5338, 0
        %vm5349 = vcmp.ne.s16.totalorder %v5339, 0
        %vm5350 = vcmp.ne.s16.totalorder %v5340, 0
        %vm5351 = vcmp.ne.s16.totalorder %v5341, 0
        %vm5352 = vcmp.ne.s16.totalorder %v5342, 0
        %vm5353 = vcmp.ne.s16.totalorder %v5343, 0
        %vm5354 = vcmp.ne.s16.totalorder %v5344, 0
        %vm5355 = vcmp.ne.s16.totalorder %v5345, 0
        %v5356 = vsel %vm5346, %v5184, 0
        %v5357 = vsel %vm5346, %v5185, 0
        %v5358 = vsel %vm5346, %v5186, 0
        %v5359 = vsel %vm5346, %v5187, 0
        %v5360 = vsel %vm5346, %v5188, 0
        %v5361 = vsel %vm5346, %v5189, 0
        %v5362 = vsel %vm5346, %v5190, 0
        %v5363 = vsel %vm5346, %v5191, 0
        %v5364 = vsel %vm5347, %v5192, 0
        %v5365 = vsel %vm5347, %v5193, 0
        %v5366 = vsel %vm5347, %v5194, 0
        %v5367 = vsel %vm5347, %v5195, 0
        %v5368 = vsel %vm5347, %v5196, 0
        %v5369 = vsel %vm5347, %v5197, 0
        %v5370 = vsel %vm5347, %v5198, 0
        %v5371 = vsel %vm5347, %v5199, 0
        %v5372 = vsel %vm5348, %v5200, 0
        %v5373 = vsel %vm5348, %v5201, 0
        %v5374 = vsel %vm5348, %v5202, 0
        %v5375 = vsel %vm5348, %v5203, 0
        %v5376 = vsel %vm5348, %v5204, 0
        %v5377 = vsel %vm5348, %v5205, 0
        %v5378 = vsel %vm5348, %v5206, 0
        %v5379 = vsel %vm5348, %v5207, 0
        %v5380 = vsel %vm5349, %v5208, 0
        %v5381 = vsel %vm5349, %v5209, 0
        %v5382 = vsel %vm5349, %v5210, 0
        %v5383 = vsel %vm5349, %v5211, 0
        %v5384 = vsel %vm5349, %v5212, 0
        %v5385 = vsel %vm5349, %v5213, 0
        %v5386 = vsel %vm5349, %v5214, 0
        %v5387 = vsel %vm5349, %v5215, 0
        %v5388 = vsel %vm5350, %v5216, 0
        %v5389 = vsel %vm5350, %v5217, 0
        %v5390 = vsel %vm5350, %v5218, 0
        %v5391 = vsel %vm5350, %v5219, 0
        %v5392 = vsel %vm5350, %v5220, 0
        %v5393 = vsel %vm5350, %v5221, 0
        %v5394 = vsel %vm5350, %v5222, 0
        %v5395 = vsel %vm5350, %v5223, 0
        %v5396 = vsel %vm5351, %v5224, 0
        %v5397 = vsel %vm5351, %v5225, 0
        %v5398 = vsel %vm5351, %v5226, 0
        %v5399 = vsel %vm5351, %v5227, 0
        %v5400 = vsel %vm5351, %v5228, 0
        %v5401 = vsel %vm5351, %v5229, 0
        %v5402 = vsel %vm5351, %v5230, 0
        %v5403 = vsel %vm5351, %v5231, 0
        %v5404 = vsel %vm5352, %v5232, 0
        %v5405 = vsel %vm5352, %v5233, 0
        %v5406 = vsel %vm5352, %v5234, 0
        %v5407 = vsel %vm5352, %v5235, 0
        %v5408 = vsel %vm5352, %v5236, 0
        %v5409 = vsel %vm5352, %v5237, 0
        %v5410 = vsel %vm5352, %v5238, 0
        %v5411 = vsel %vm5352, %v5239, 0
        %v5412 = vsel %vm5353, %v5240, 0
        %v5413 = vsel %vm5353, %v5241, 0
        %v5414 = vsel %vm5353, %v5242, 0
        %v5415 = vsel %vm5353, %v5243, 0
        %v5416 = vsel %vm5353, %v5244, 0
        %v5417 = vsel %vm5353, %v5245, 0
        %v5418 = vsel %vm5353, %v5246, 0
        %v5419 = vsel %vm5353, %v5247, 0
        %v5420 = vsel %vm5354, %v5248, 0
        %v5421 = vsel %vm5354, %v5249, 0
        %v5422 = vsel %vm5354, %v5250, 0
        %v5423 = vsel %vm5354, %v5251, 0
        %v5424 = vsel %vm5354, %v5252, 0
        %v5425 = vsel %vm5354, %v5253, 0
        %v5426 = vsel %vm5354, %v5254, 0
        %v5427 = vsel %vm5354, %v5255, 0
        %v5428 = vsel %vm5355, %v5256, 0
        %v5429 = vsel %vm5355, %v5257, 0
        %v5430 = vsel %vm5355, %v5258, 0
        %v5431 = vsel %vm5355, %v5259, 0
        %v5432 = vsel %vm5355, %v5260, 0
        %v5433 = vsel %vm5355, %v5261, 0
        %v5434 = vsel %vm5355, %v5262, 0
        %v5435 = vsel %vm5355, %v5263, 0
        %v5517 = vunpack.c.l.s4 1966171168
        %v5518 = vunpack.c.0.s8 %v5517
        %v5519 = vlaneseq
        %v5520 = vshrl.u32 %v5519, 7
        %v5521 = vsub.s32 %v5518, %v5520
        %v5522 = vrot.slane %v5356, %v5521
        %v5524 = vunpack.c.l.s4 1966171168
        %v5525 = vunpack.c.0.s8 %v5524
        %v5526 = vlaneseq
        %v5527 = vshrl.u32 %v5526, 7
        %v5528 = vsub.s32 %v5525, %v5527
        %v5529 = vrot.slane %v5522, %v5528
        %v5531 = vunpack.c.l.s4 1966171168
        %v5532 = vunpack.c.0.s8 %v5531
        %v5533 = vlaneseq
        %v5534 = vshrl.u32 %v5533, 7
        %v5535 = vsub.s32 %v5532, %v5534
        %v5536 = vrot.slane %v5357, %v5535
        %v5538 = vunpack.c.l.s4 1966171168
        %v5539 = vunpack.c.0.s8 %v5538
        %v5540 = vlaneseq
        %v5541 = vshrl.u32 %v5540, 7
        %v5542 = vsub.s32 %v5539, %v5541
        %v5543 = vrot.slane %v5536, %v5542
        %v5545 = vunpack.c.l.s4 1966171168
        %v5546 = vunpack.c.0.s8 %v5545
        %v5547 = vlaneseq
        %v5548 = vshrl.u32 %v5547, 7
        %v5549 = vsub.s32 %v5546, %v5548
        %v5550 = vrot.slane %v5358, %v5549
        %v5552 = vunpack.c.l.s4 1966171168
        %v5553 = vunpack.c.0.s8 %v5552
        %v5554 = vlaneseq
        %v5555 = vshrl.u32 %v5554, 7
        %v5556 = vsub.s32 %v5553, %v5555
        %v5557 = vrot.slane %v5550, %v5556
        %v5559 = vunpack.c.l.s4 1966171168
        %v5560 = vunpack.c.0.s8 %v5559
        %v5561 = vlaneseq
        %v5562 = vshrl.u32 %v5561, 7
        %v5563 = vsub.s32 %v5560, %v5562
        %v5564 = vrot.slane %v5359, %v5563
        %v5566 = vunpack.c.l.s4 1966171168
        %v5567 = vunpack.c.0.s8 %v5566
        %v5568 = vlaneseq
        %v5569 = vshrl.u32 %v5568, 7
        %v5570 = vsub.s32 %v5567, %v5569
        %v5571 = vrot.slane %v5564, %v5570
        %v5573 = vunpack.c.l.s4 1966171168
        %v5574 = vunpack.c.0.s8 %v5573
        %v5575 = vlaneseq
        %v5576 = vshrl.u32 %v5575, 7
        %v5577 = vsub.s32 %v5574, %v5576
        %v5578 = vrot.slane %v5360, %v5577
        %v5580 = vunpack.c.l.s4 1966171168
        %v5581 = vunpack.c.0.s8 %v5580
        %v5582 = vlaneseq
        %v5583 = vshrl.u32 %v5582, 7
        %v5584 = vsub.s32 %v5581, %v5583
        %v5585 = vrot.slane %v5578, %v5584
        %v5587 = vunpack.c.l.s4 1966171168
        %v5588 = vunpack.c.0.s8 %v5587
        %v5589 = vlaneseq
        %v5590 = vshrl.u32 %v5589, 7
        %v5591 = vsub.s32 %v5588, %v5590
        %v5592 = vrot.slane %v5361, %v5591
        %v5594 = vunpack.c.l.s4 1966171168
        %v5595 = vunpack.c.0.s8 %v5594
        %v5596 = vlaneseq
        %v5597 = vshrl.u32 %v5596, 7
        %v5598 = vsub.s32 %v5595, %v5597
        %v5599 = vrot.slane %v5592, %v5598
        %v5601 = vunpack.c.l.s4 1966171168
        %v5602 = vunpack.c.0.s8 %v5601
        %v5603 = vlaneseq
        %v5604 = vshrl.u32 %v5603, 7
        %v5605 = vsub.s32 %v5602, %v5604
        %v5606 = vrot.slane %v5362, %v5605
        %v5608 = vunpack.c.l.s4 1966171168
        %v5609 = vunpack.c.0.s8 %v5608
        %v5610 = vlaneseq
        %v5611 = vshrl.u32 %v5610, 7
        %v5612 = vsub.s32 %v5609, %v5611
        %v5613 = vrot.slane %v5606, %v5612
        %v5615 = vunpack.c.l.s4 1966171168
        %v5616 = vunpack.c.0.s8 %v5615
        %v5617 = vlaneseq
        %v5618 = vshrl.u32 %v5617, 7
        %v5619 = vsub.s32 %v5616, %v5618
        %v5620 = vrot.slane %v5363, %v5619
        %v5622 = vunpack.c.l.s4 1966171168
        %v5623 = vunpack.c.0.s8 %v5622
        %v5624 = vlaneseq
        %v5625 = vshrl.u32 %v5624, 7
        %v5626 = vsub.s32 %v5623, %v5625
        %v5627 = vrot.slane %v5620, %v5626
        %v5629 = vunpack.c.l.s4 1966171168
        %v5630 = vunpack.c.0.s8 %v5629
        %v5631 = vlaneseq
        %v5632 = vshrl.u32 %v5631, 7
        %v5633 = vsub.s32 %v5630, %v5632
        %v5634 = vrot.slane %v5364, %v5633
        %v5636 = vunpack.c.l.s4 1966171168
        %v5637 = vunpack.c.0.s8 %v5636
        %v5638 = vlaneseq
        %v5639 = vshrl.u32 %v5638, 7
        %v5640 = vsub.s32 %v5637, %v5639
        %v5641 = vrot.slane %v5634, %v5640
        %v5643 = vunpack.c.l.s4 1966171168
        %v5644 = vunpack.c.0.s8 %v5643
        %v5645 = vlaneseq
        %v5646 = vshrl.u32 %v5645, 7
        %v5647 = vsub.s32 %v5644, %v5646
        %v5648 = vrot.slane %v5365, %v5647
        %v5650 = vunpack.c.l.s4 1966171168
        %v5651 = vunpack.c.0.s8 %v5650
        %v5652 = vlaneseq
        %v5653 = vshrl.u32 %v5652, 7
        %v5654 = vsub.s32 %v5651, %v5653
        %v5655 = vrot.slane %v5648, %v5654
        %v5657 = vunpack.c.l.s4 1966171168
        %v5658 = vunpack.c.0.s8 %v5657
        %v5659 = vlaneseq
        %v5660 = vshrl.u32 %v5659, 7
        %v5661 = vsub.s32 %v5658, %v5660
        %v5662 = vrot.slane %v5366, %v5661
        %v5664 = vunpack.c.l.s4 1966171168
        %v5665 = vunpack.c.0.s8 %v5664
        %v5666 = vlaneseq
        %v5667 = vshrl.u32 %v5666, 7
        %v5668 = vsub.s32 %v5665, %v5667
        %v5669 = vrot.slane %v5662, %v5668
        %v5671 = vunpack.c.l.s4 1966171168
        %v5672 = vunpack.c.0.s8 %v5671
        %v5673 = vlaneseq
        %v5674 = vshrl.u32 %v5673, 7
        %v5675 = vsub.s32 %v5672, %v5674
        %v5676 = vrot.slane %v5367, %v5675
        %v5678 = vunpack.c.l.s4 1966171168
        %v5679 = vunpack.c.0.s8 %v5678
        %v5680 = vlaneseq
        %v5681 = vshrl.u32 %v5680, 7
        %v5682 = vsub.s32 %v5679, %v5681
        %v5683 = vrot.slane %v5676, %v5682
        %v5685 = vunpack.c.l.s4 1966171168
        %v5686 = vunpack.c.0.s8 %v5685
        %v5687 = vlaneseq
        %v5688 = vshrl.u32 %v5687, 7
        %v5689 = vsub.s32 %v5686, %v5688
        %v5690 = vrot.slane %v5368, %v5689
        %v5692 = vunpack.c.l.s4 1966171168
        %v5693 = vunpack.c.0.s8 %v5692
        %v5694 = vlaneseq
        %v5695 = vshrl.u32 %v5694, 7
        %v5696 = vsub.s32 %v5693, %v5695
        %v5697 = vrot.slane %v5690, %v5696
        %v5699 = vunpack.c.l.s4 1966171168
        %v5700 = vunpack.c.0.s8 %v5699
        %v5701 = vlaneseq
        %v5702 = vshrl.u32 %v5701, 7
        %v5703 = vsub.s32 %v5700, %v5702
        %v5704 = vrot.slane %v5369, %v5703
        %v5706 = vunpack.c.l.s4 1966171168
        %v5707 = vunpack.c.0.s8 %v5706
        %v5708 = vlaneseq
        %v5709 = vshrl.u32 %v5708, 7
        %v5710 = vsub.s32 %v5707, %v5709
        %v5711 = vrot.slane %v5704, %v5710
        %v5713 = vunpack.c.l.s4 1966171168
        %v5714 = vunpack.c.0.s8 %v5713
        %v5715 = vlaneseq
        %v5716 = vshrl.u32 %v5715, 7
        %v5717 = vsub.s32 %v5714, %v5716
        %v5718 = vrot.slane %v5370, %v5717
        %v5720 = vunpack.c.l.s4 1966171168
        %v5721 = vunpack.c.0.s8 %v5720
        %v5722 = vlaneseq
        %v5723 = vshrl.u32 %v5722, 7
        %v5724 = vsub.s32 %v5721, %v5723
        %v5725 = vrot.slane %v5718, %v5724
        %v5727 = vunpack.c.l.s4 1966171168
        %v5728 = vunpack.c.0.s8 %v5727
        %v5729 = vlaneseq
        %v5730 = vshrl.u32 %v5729, 7
        %v5731 = vsub.s32 %v5728, %v5730
        %v5732 = vrot.slane %v5371, %v5731
        %v5734 = vunpack.c.l.s4 1966171168
        %v5735 = vunpack.c.0.s8 %v5734
        %v5736 = vlaneseq
        %v5737 = vshrl.u32 %v5736, 7
        %v5738 = vsub.s32 %v5735, %v5737
        %v5739 = vrot.slane %v5732, %v5738
        %v5741 = vunpack.c.l.s4 1966171168
        %v5742 = vunpack.c.0.s8 %v5741
        %v5743 = vlaneseq
        %v5744 = vshrl.u32 %v5743, 7
        %v5745 = vsub.s32 %v5742, %v5744
        %v5746 = vrot.slane %v5372, %v5745
        %v5748 = vunpack.c.l.s4 1966171168
        %v5749 = vunpack.c.0.s8 %v5748
        %v5750 = vlaneseq
        %v5751 = vshrl.u32 %v5750, 7
        %v5752 = vsub.s32 %v5749, %v5751
        %v5753 = vrot.slane %v5746, %v5752
        %v5755 = vunpack.c.l.s4 1966171168
        %v5756 = vunpack.c.0.s8 %v5755
        %v5757 = vlaneseq
        %v5758 = vshrl.u32 %v5757, 7
        %v5759 = vsub.s32 %v5756, %v5758
        %v5760 = vrot.slane %v5373, %v5759
        %v5762 = vunpack.c.l.s4 1966171168
        %v5763 = vunpack.c.0.s8 %v5762
        %v5764 = vlaneseq
        %v5765 = vshrl.u32 %v5764, 7
        %v5766 = vsub.s32 %v5763, %v5765
        %v5767 = vrot.slane %v5760, %v5766
        %v5769 = vunpack.c.l.s4 1966171168
        %v5770 = vunpack.c.0.s8 %v5769
        %v5771 = vlaneseq
        %v5772 = vshrl.u32 %v5771, 7
        %v5773 = vsub.s32 %v5770, %v5772
        %v5774 = vrot.slane %v5374, %v5773
        %v5776 = vunpack.c.l.s4 1966171168
        %v5777 = vunpack.c.0.s8 %v5776
        %v5778 = vlaneseq
        %v5779 = vshrl.u32 %v5778, 7
        %v5780 = vsub.s32 %v5777, %v5779
        %v5781 = vrot.slane %v5774, %v5780
        %v5783 = vunpack.c.l.s4 1966171168
        %v5784 = vunpack.c.0.s8 %v5783
        %v5785 = vlaneseq
        %v5786 = vshrl.u32 %v5785, 7
        %v5787 = vsub.s32 %v5784, %v5786
        %v5788 = vrot.slane %v5375, %v5787
        %v5790 = vunpack.c.l.s4 1966171168
        %v5791 = vunpack.c.0.s8 %v5790
        %v5792 = vlaneseq
        %v5793 = vshrl.u32 %v5792, 7
        %v5794 = vsub.s32 %v5791, %v5793
        %v5795 = vrot.slane %v5788, %v5794
        %v5797 = vunpack.c.l.s4 1966171168
        %v5798 = vunpack.c.0.s8 %v5797
        %v5799 = vlaneseq
        %v5800 = vshrl.u32 %v5799, 7
        %v5801 = vsub.s32 %v5798, %v5800
        %v5802 = vrot.slane %v5376, %v5801
        %v5804 = vunpack.c.l.s4 1966171168
        %v5805 = vunpack.c.0.s8 %v5804
        %v5806 = vlaneseq
        %v5807 = vshrl.u32 %v5806, 7
        %v5808 = vsub.s32 %v5805, %v5807
        %v5809 = vrot.slane %v5802, %v5808
        %v5811 = vunpack.c.l.s4 1966171168
        %v5812 = vunpack.c.0.s8 %v5811
        %v5813 = vlaneseq
        %v5814 = vshrl.u32 %v5813, 7
        %v5815 = vsub.s32 %v5812, %v5814
        %v5816 = vrot.slane %v5377, %v5815
        %v5818 = vunpack.c.l.s4 1966171168
        %v5819 = vunpack.c.0.s8 %v5818
        %v5820 = vlaneseq
        %v5821 = vshrl.u32 %v5820, 7
        %v5822 = vsub.s32 %v5819, %v5821
        %v5823 = vrot.slane %v5816, %v5822
        %v5825 = vunpack.c.l.s4 1966171168
        %v5826 = vunpack.c.0.s8 %v5825
        %v5827 = vlaneseq
        %v5828 = vshrl.u32 %v5827, 7
        %v5829 = vsub.s32 %v5826, %v5828
        %v5830 = vrot.slane %v5378, %v5829
        %v5832 = vunpack.c.l.s4 1966171168
        %v5833 = vunpack.c.0.s8 %v5832
        %v5834 = vlaneseq
        %v5835 = vshrl.u32 %v5834, 7
        %v5836 = vsub.s32 %v5833, %v5835
        %v5837 = vrot.slane %v5830, %v5836
        %v5839 = vunpack.c.l.s4 1966171168
        %v5840 = vunpack.c.0.s8 %v5839
        %v5841 = vlaneseq
        %v5842 = vshrl.u32 %v5841, 7
        %v5843 = vsub.s32 %v5840, %v5842
        %v5844 = vrot.slane %v5379, %v5843
        %v5846 = vunpack.c.l.s4 1966171168
        %v5847 = vunpack.c.0.s8 %v5846
        %v5848 = vlaneseq
        %v5849 = vshrl.u32 %v5848, 7
        %v5850 = vsub.s32 %v5847, %v5849
        %v5851 = vrot.slane %v5844, %v5850
        %v5853 = vunpack.c.l.s4 1966171168
        %v5854 = vunpack.c.0.s8 %v5853
        %v5855 = vlaneseq
        %v5856 = vshrl.u32 %v5855, 7
        %v5857 = vsub.s32 %v5854, %v5856
        %v5858 = vrot.slane %v5380, %v5857
        %v5860 = vunpack.c.l.s4 1966171168
        %v5861 = vunpack.c.0.s8 %v5860
        %v5862 = vlaneseq
        %v5863 = vshrl.u32 %v5862, 7
        %v5864 = vsub.s32 %v5861, %v5863
        %v5865 = vrot.slane %v5858, %v5864
        %v5867 = vunpack.c.l.s4 1966171168
        %v5868 = vunpack.c.0.s8 %v5867
        %v5869 = vlaneseq
        %v5870 = vshrl.u32 %v5869, 7
        %v5871 = vsub.s32 %v5868, %v5870
        %v5872 = vrot.slane %v5381, %v5871
        %v5874 = vunpack.c.l.s4 1966171168
        %v5875 = vunpack.c.0.s8 %v5874
        %v5876 = vlaneseq
        %v5877 = vshrl.u32 %v5876, 7
        %v5878 = vsub.s32 %v5875, %v5877
        %v5879 = vrot.slane %v5872, %v5878
        %v5881 = vunpack.c.l.s4 1966171168
        %v5882 = vunpack.c.0.s8 %v5881
        %v5883 = vlaneseq
        %v5884 = vshrl.u32 %v5883, 7
        %v5885 = vsub.s32 %v5882, %v5884
        %v5886 = vrot.slane %v5382, %v5885
        %v5888 = vunpack.c.l.s4 1966171168
        %v5889 = vunpack.c.0.s8 %v5888
        %v5890 = vlaneseq
        %v5891 = vshrl.u32 %v5890, 7
        %v5892 = vsub.s32 %v5889, %v5891
        %v5893 = vrot.slane %v5886, %v5892
        %v5895 = vunpack.c.l.s4 1966171168
        %v5896 = vunpack.c.0.s8 %v5895
        %v5897 = vlaneseq
        %v5898 = vshrl.u32 %v5897, 7
        %v5899 = vsub.s32 %v5896, %v5898
        %v5900 = vrot.slane %v5383, %v5899
        %v5902 = vunpack.c.l.s4 1966171168
        %v5903 = vunpack.c.0.s8 %v5902
        %v5904 = vlaneseq
        %v5905 = vshrl.u32 %v5904, 7
        %v5906 = vsub.s32 %v5903, %v5905
        %v5907 = vrot.slane %v5900, %v5906
        %v5909 = vunpack.c.l.s4 1966171168
        %v5910 = vunpack.c.0.s8 %v5909
        %v5911 = vlaneseq
        %v5912 = vshrl.u32 %v5911, 7
        %v5913 = vsub.s32 %v5910, %v5912
        %v5914 = vrot.slane %v5384, %v5913
        %v5916 = vunpack.c.l.s4 1966171168
        %v5917 = vunpack.c.0.s8 %v5916
        %v5918 = vlaneseq
        %v5919 = vshrl.u32 %v5918, 7
        %v5920 = vsub.s32 %v5917, %v5919
        %v5921 = vrot.slane %v5914, %v5920
        %v5923 = vunpack.c.l.s4 1966171168
        %v5924 = vunpack.c.0.s8 %v5923
        %v5925 = vlaneseq
        %v5926 = vshrl.u32 %v5925, 7
        %v5927 = vsub.s32 %v5924, %v5926
        %v5928 = vrot.slane %v5385, %v5927
        %v5930 = vunpack.c.l.s4 1966171168
        %v5931 = vunpack.c.0.s8 %v5930
        %v5932 = vlaneseq
        %v5933 = vshrl.u32 %v5932, 7
        %v5934 = vsub.s32 %v5931, %v5933
        %v5935 = vrot.slane %v5928, %v5934
        %v5937 = vunpack.c.l.s4 1966171168
        %v5938 = vunpack.c.0.s8 %v5937
        %v5939 = vlaneseq
        %v5940 = vshrl.u32 %v5939, 7
        %v5941 = vsub.s32 %v5938, %v5940
        %v5942 = vrot.slane %v5386, %v5941
        %v5944 = vunpack.c.l.s4 1966171168
        %v5945 = vunpack.c.0.s8 %v5944
        %v5946 = vlaneseq
        %v5947 = vshrl.u32 %v5946, 7
        %v5948 = vsub.s32 %v5945, %v5947
        %v5949 = vrot.slane %v5942, %v5948
        %v5951 = vunpack.c.l.s4 1966171168
        %v5952 = vunpack.c.0.s8 %v5951
        %v5953 = vlaneseq
        %v5954 = vshrl.u32 %v5953, 7
        %v5955 = vsub.s32 %v5952, %v5954
        %v5956 = vrot.slane %v5387, %v5955
        %v5958 = vunpack.c.l.s4 1966171168
        %v5959 = vunpack.c.0.s8 %v5958
        %v5960 = vlaneseq
        %v5961 = vshrl.u32 %v5960, 7
        %v5962 = vsub.s32 %v5959, %v5961
        %v5963 = vrot.slane %v5956, %v5962
        %v5965 = vunpack.c.l.s4 1966171168
        %v5966 = vunpack.c.0.s8 %v5965
        %v5967 = vlaneseq
        %v5968 = vshrl.u32 %v5967, 7
        %v5969 = vsub.s32 %v5966, %v5968
        %v5970 = vrot.slane %v5388, %v5969
        %v5972 = vunpack.c.l.s4 1966171168
        %v5973 = vunpack.c.0.s8 %v5972
        %v5974 = vlaneseq
        %v5975 = vshrl.u32 %v5974, 7
        %v5976 = vsub.s32 %v5973, %v5975
        %v5977 = vrot.slane %v5970, %v5976
        %v5979 = vunpack.c.l.s4 1966171168
        %v5980 = vunpack.c.0.s8 %v5979
        %v5981 = vlaneseq
        %v5982 = vshrl.u32 %v5981, 7
        %v5983 = vsub.s32 %v5980, %v5982
        %v5984 = vrot.slane %v5389, %v5983
        %v5986 = vunpack.c.l.s4 1966171168
        %v5987 = vunpack.c.0.s8 %v5986
        %v5988 = vlaneseq
        %v5989 = vshrl.u32 %v5988, 7
        %v5990 = vsub.s32 %v5987, %v5989
        %v5991 = vrot.slane %v5984, %v5990
        %v5993 = vunpack.c.l.s4 1966171168
        %v5994 = vunpack.c.0.s8 %v5993
        %v5995 = vlaneseq
        %v5996 = vshrl.u32 %v5995, 7
        %v5997 = vsub.s32 %v5994, %v5996
        %v5998 = vrot.slane %v5390, %v5997
        %v6000 = vunpack.c.l.s4 1966171168
        %v6001 = vunpack.c.0.s8 %v6000
        %v6002 = vlaneseq
        %v6003 = vshrl.u32 %v6002, 7
        %v6004 = vsub.s32 %v6001, %v6003
        %v6005 = vrot.slane %v5998, %v6004
        %v6007 = vunpack.c.l.s4 1966171168
        %v6008 = vunpack.c.0.s8 %v6007
        %v6009 = vlaneseq
        %v6010 = vshrl.u32 %v6009, 7
        %v6011 = vsub.s32 %v6008, %v6010
        %v6012 = vrot.slane %v5391, %v6011
        %v6014 = vunpack.c.l.s4 1966171168
        %v6015 = vunpack.c.0.s8 %v6014
        %v6016 = vlaneseq
        %v6017 = vshrl.u32 %v6016, 7
        %v6018 = vsub.s32 %v6015, %v6017
        %v6019 = vrot.slane %v6012, %v6018
        %v6021 = vunpack.c.l.s4 1966171168
        %v6022 = vunpack.c.0.s8 %v6021
        %v6023 = vlaneseq
        %v6024 = vshrl.u32 %v6023, 7
        %v6025 = vsub.s32 %v6022, %v6024
        %v6026 = vrot.slane %v5392, %v6025
        %v6028 = vunpack.c.l.s4 1966171168
        %v6029 = vunpack.c.0.s8 %v6028
        %v6030 = vlaneseq
        %v6031 = vshrl.u32 %v6030, 7
        %v6032 = vsub.s32 %v6029, %v6031
        %v6033 = vrot.slane %v6026, %v6032
        %v6035 = vunpack.c.l.s4 1966171168
        %v6036 = vunpack.c.0.s8 %v6035
        %v6037 = vlaneseq
        %v6038 = vshrl.u32 %v6037, 7
        %v6039 = vsub.s32 %v6036, %v6038
        %v6040 = vrot.slane %v5393, %v6039
        %v6042 = vunpack.c.l.s4 1966171168
        %v6043 = vunpack.c.0.s8 %v6042
        %v6044 = vlaneseq
        %v6045 = vshrl.u32 %v6044, 7
        %v6046 = vsub.s32 %v6043, %v6045
        %v6047 = vrot.slane %v6040, %v6046
        %v6049 = vunpack.c.l.s4 1966171168
        %v6050 = vunpack.c.0.s8 %v6049
        %v6051 = vlaneseq
        %v6052 = vshrl.u32 %v6051, 7
        %v6053 = vsub.s32 %v6050, %v6052
        %v6054 = vrot.slane %v5394, %v6053
        %v6056 = vunpack.c.l.s4 1966171168
        %v6057 = vunpack.c.0.s8 %v6056
        %v6058 = vlaneseq
        %v6059 = vshrl.u32 %v6058, 7
        %v6060 = vsub.s32 %v6057, %v6059
        %v6061 = vrot.slane %v6054, %v6060
        %v6063 = vunpack.c.l.s4 1966171168
        %v6064 = vunpack.c.0.s8 %v6063
        %v6065 = vlaneseq
        %v6066 = vshrl.u32 %v6065, 7
        %v6067 = vsub.s32 %v6064, %v6066
        %v6068 = vrot.slane %v5395, %v6067
        %v6070 = vunpack.c.l.s4 1966171168
        %v6071 = vunpack.c.0.s8 %v6070
        %v6072 = vlaneseq
        %v6073 = vshrl.u32 %v6072, 7
        %v6074 = vsub.s32 %v6071, %v6073
        %v6075 = vrot.slane %v6068, %v6074
        %v6077 = vunpack.c.l.s4 1966171168
        %v6078 = vunpack.c.0.s8 %v6077
        %v6079 = vlaneseq
        %v6080 = vshrl.u32 %v6079, 7
        %v6081 = vsub.s32 %v6078, %v6080
        %v6082 = vrot.slane %v5396, %v6081
        %v6084 = vunpack.c.l.s4 1966171168
        %v6085 = vunpack.c.0.s8 %v6084
        %v6086 = vlaneseq
        %v6087 = vshrl.u32 %v6086, 7
        %v6088 = vsub.s32 %v6085, %v6087
        %v6089 = vrot.slane %v6082, %v6088
        %v6091 = vunpack.c.l.s4 1966171168
        %v6092 = vunpack.c.0.s8 %v6091
        %v6093 = vlaneseq
        %v6094 = vshrl.u32 %v6093, 7
        %v6095 = vsub.s32 %v6092, %v6094
        %v6096 = vrot.slane %v5397, %v6095
        %v6098 = vunpack.c.l.s4 1966171168
        %v6099 = vunpack.c.0.s8 %v6098
        %v6100 = vlaneseq
        %v6101 = vshrl.u32 %v6100, 7
        %v6102 = vsub.s32 %v6099, %v6101
        %v6103 = vrot.slane %v6096, %v6102
        %v6105 = vunpack.c.l.s4 1966171168
        %v6106 = vunpack.c.0.s8 %v6105
        %v6107 = vlaneseq
        %v6108 = vshrl.u32 %v6107, 7
        %v6109 = vsub.s32 %v6106, %v6108
        %v6110 = vrot.slane %v5398, %v6109
        %v6112 = vunpack.c.l.s4 1966171168
        %v6113 = vunpack.c.0.s8 %v6112
        %v6114 = vlaneseq
        %v6115 = vshrl.u32 %v6114, 7
        %v6116 = vsub.s32 %v6113, %v6115
        %v6117 = vrot.slane %v6110, %v6116
        %v6119 = vunpack.c.l.s4 1966171168
        %v6120 = vunpack.c.0.s8 %v6119
        %v6121 = vlaneseq
        %v6122 = vshrl.u32 %v6121, 7
        %v6123 = vsub.s32 %v6120, %v6122
        %v6124 = vrot.slane %v5399, %v6123
        %v6126 = vunpack.c.l.s4 1966171168
        %v6127 = vunpack.c.0.s8 %v6126
        %v6128 = vlaneseq
        %v6129 = vshrl.u32 %v6128, 7
        %v6130 = vsub.s32 %v6127, %v6129
        %v6131 = vrot.slane %v6124, %v6130
        %v6133 = vunpack.c.l.s4 1966171168
        %v6134 = vunpack.c.0.s8 %v6133
        %v6135 = vlaneseq
        %v6136 = vshrl.u32 %v6135, 7
        %v6137 = vsub.s32 %v6134, %v6136
        %v6138 = vrot.slane %v5400, %v6137
        %v6140 = vunpack.c.l.s4 1966171168
        %v6141 = vunpack.c.0.s8 %v6140
        %v6142 = vlaneseq
        %v6143 = vshrl.u32 %v6142, 7
        %v6144 = vsub.s32 %v6141, %v6143
        %v6145 = vrot.slane %v6138, %v6144
        %v6147 = vunpack.c.l.s4 1966171168
        %v6148 = vunpack.c.0.s8 %v6147
        %v6149 = vlaneseq
        %v6150 = vshrl.u32 %v6149, 7
        %v6151 = vsub.s32 %v6148, %v6150
        %v6152 = vrot.slane %v5401, %v6151
        %v6154 = vunpack.c.l.s4 1966171168
        %v6155 = vunpack.c.0.s8 %v6154
        %v6156 = vlaneseq
        %v6157 = vshrl.u32 %v6156, 7
        %v6158 = vsub.s32 %v6155, %v6157
        %v6159 = vrot.slane %v6152, %v6158
        %v6161 = vunpack.c.l.s4 1966171168
        %v6162 = vunpack.c.0.s8 %v6161
        %v6163 = vlaneseq
        %v6164 = vshrl.u32 %v6163, 7
        %v6165 = vsub.s32 %v6162, %v6164
        %v6166 = vrot.slane %v5402, %v6165
        %v6168 = vunpack.c.l.s4 1966171168
        %v6169 = vunpack.c.0.s8 %v6168
        %v6170 = vlaneseq
        %v6171 = vshrl.u32 %v6170, 7
        %v6172 = vsub.s32 %v6169, %v6171
        %v6173 = vrot.slane %v6166, %v6172
        %v6175 = vunpack.c.l.s4 1966171168
        %v6176 = vunpack.c.0.s8 %v6175
        %v6177 = vlaneseq
        %v6178 = vshrl.u32 %v6177, 7
        %v6179 = vsub.s32 %v6176, %v6178
        %v6180 = vrot.slane %v5403, %v6179
        %v6182 = vunpack.c.l.s4 1966171168
        %v6183 = vunpack.c.0.s8 %v6182
        %v6184 = vlaneseq
        %v6185 = vshrl.u32 %v6184, 7
        %v6186 = vsub.s32 %v6183, %v6185
        %v6187 = vrot.slane %v6180, %v6186
        %v6189 = vunpack.c.l.s4 1966171168
        %v6190 = vunpack.c.0.s8 %v6189
        %v6191 = vlaneseq
        %v6192 = vshrl.u32 %v6191, 7
        %v6193 = vsub.s32 %v6190, %v6192
        %v6194 = vrot.slane %v5404, %v6193
        %v6196 = vunpack.c.l.s4 1966171168
        %v6197 = vunpack.c.0.s8 %v6196
        %v6198 = vlaneseq
        %v6199 = vshrl.u32 %v6198, 7
        %v6200 = vsub.s32 %v6197, %v6199
        %v6201 = vrot.slane %v6194, %v6200
        %v6203 = vunpack.c.l.s4 1966171168
        %v6204 = vunpack.c.0.s8 %v6203
        %v6205 = vlaneseq
        %v6206 = vshrl.u32 %v6205, 7
        %v6207 = vsub.s32 %v6204, %v6206
        %v6208 = vrot.slane %v5405, %v6207
        %v6210 = vunpack.c.l.s4 1966171168
        %v6211 = vunpack.c.0.s8 %v6210
        %v6212 = vlaneseq
        %v6213 = vshrl.u32 %v6212, 7
        %v6214 = vsub.s32 %v6211, %v6213
        %v6215 = vrot.slane %v6208, %v6214
        %v6217 = vunpack.c.l.s4 1966171168
        %v6218 = vunpack.c.0.s8 %v6217
        %v6219 = vlaneseq
        %v6220 = vshrl.u32 %v6219, 7
        %v6221 = vsub.s32 %v6218, %v6220
        %v6222 = vrot.slane %v5406, %v6221
        %v6224 = vunpack.c.l.s4 1966171168
        %v6225 = vunpack.c.0.s8 %v6224
        %v6226 = vlaneseq
        %v6227 = vshrl.u32 %v6226, 7
        %v6228 = vsub.s32 %v6225, %v6227
        %v6229 = vrot.slane %v6222, %v6228
        %v6231 = vunpack.c.l.s4 1966171168
        %v6232 = vunpack.c.0.s8 %v6231
        %v6233 = vlaneseq
        %v6234 = vshrl.u32 %v6233, 7
        %v6235 = vsub.s32 %v6232, %v6234
        %v6236 = vrot.slane %v5407, %v6235
        %v6238 = vunpack.c.l.s4 1966171168
        %v6239 = vunpack.c.0.s8 %v6238
        %v6240 = vlaneseq
        %v6241 = vshrl.u32 %v6240, 7
        %v6242 = vsub.s32 %v6239, %v6241
        %v6243 = vrot.slane %v6236, %v6242
        %v6245 = vunpack.c.l.s4 1966171168
        %v6246 = vunpack.c.0.s8 %v6245
        %v6247 = vlaneseq
        %v6248 = vshrl.u32 %v6247, 7
        %v6249 = vsub.s32 %v6246, %v6248
        %v6250 = vrot.slane %v5408, %v6249
        %v6252 = vunpack.c.l.s4 1966171168
        %v6253 = vunpack.c.0.s8 %v6252
        %v6254 = vlaneseq
        %v6255 = vshrl.u32 %v6254, 7
        %v6256 = vsub.s32 %v6253, %v6255
        %v6257 = vrot.slane %v6250, %v6256
        %v6259 = vunpack.c.l.s4 1966171168
        %v6260 = vunpack.c.0.s8 %v6259
        %v6261 = vlaneseq
        %v6262 = vshrl.u32 %v6261, 7
        %v6263 = vsub.s32 %v6260, %v6262
        %v6264 = vrot.slane %v5409, %v6263
        %v6266 = vunpack.c.l.s4 1966171168
        %v6267 = vunpack.c.0.s8 %v6266
        %v6268 = vlaneseq
        %v6269 = vshrl.u32 %v6268, 7
        %v6270 = vsub.s32 %v6267, %v6269
        %v6271 = vrot.slane %v6264, %v6270
        %v6273 = vunpack.c.l.s4 1966171168
        %v6274 = vunpack.c.0.s8 %v6273
        %v6275 = vlaneseq
        %v6276 = vshrl.u32 %v6275, 7
        %v6277 = vsub.s32 %v6274, %v6276
        %v6278 = vrot.slane %v5410, %v6277
        %v6280 = vunpack.c.l.s4 1966171168
        %v6281 = vunpack.c.0.s8 %v6280
        %v6282 = vlaneseq
        %v6283 = vshrl.u32 %v6282, 7
        %v6284 = vsub.s32 %v6281, %v6283
        %v6285 = vrot.slane %v6278, %v6284
        %v6287 = vunpack.c.l.s4 1966171168
        %v6288 = vunpack.c.0.s8 %v6287
        %v6289 = vlaneseq
        %v6290 = vshrl.u32 %v6289, 7
        %v6291 = vsub.s32 %v6288, %v6290
        %v6292 = vrot.slane %v5411, %v6291
        %v6294 = vunpack.c.l.s4 1966171168
        %v6295 = vunpack.c.0.s8 %v6294
        %v6296 = vlaneseq
        %v6297 = vshrl.u32 %v6296, 7
        %v6298 = vsub.s32 %v6295, %v6297
        %v6299 = vrot.slane %v6292, %v6298
        %v6301 = vunpack.c.l.s4 1966171168
        %v6302 = vunpack.c.0.s8 %v6301
        %v6303 = vlaneseq
        %v6304 = vshrl.u32 %v6303, 7
        %v6305 = vsub.s32 %v6302, %v6304
        %v6306 = vrot.slane %v5412, %v6305
        %v6308 = vunpack.c.l.s4 1966171168
        %v6309 = vunpack.c.0.s8 %v6308
        %v6310 = vlaneseq
        %v6311 = vshrl.u32 %v6310, 7
        %v6312 = vsub.s32 %v6309, %v6311
        %v6313 = vrot.slane %v6306, %v6312
        %v6315 = vunpack.c.l.s4 1966171168
        %v6316 = vunpack.c.0.s8 %v6315
        %v6317 = vlaneseq
        %v6318 = vshrl.u32 %v6317, 7
        %v6319 = vsub.s32 %v6316, %v6318
        %v6320 = vrot.slane %v5413, %v6319
        %v6322 = vunpack.c.l.s4 1966171168
        %v6323 = vunpack.c.0.s8 %v6322
        %v6324 = vlaneseq
        %v6325 = vshrl.u32 %v6324, 7
        %v6326 = vsub.s32 %v6323, %v6325
        %v6327 = vrot.slane %v6320, %v6326
        %v6329 = vunpack.c.l.s4 1966171168
        %v6330 = vunpack.c.0.s8 %v6329
        %v6331 = vlaneseq
        %v6332 = vshrl.u32 %v6331, 7
        %v6333 = vsub.s32 %v6330, %v6332
        %v6334 = vrot.slane %v5414, %v6333
        %v6336 = vunpack.c.l.s4 1966171168
        %v6337 = vunpack.c.0.s8 %v6336
        %v6338 = vlaneseq
        %v6339 = vshrl.u32 %v6338, 7
        %v6340 = vsub.s32 %v6337, %v6339
        %v6341 = vrot.slane %v6334, %v6340
        %v6343 = vunpack.c.l.s4 1966171168
        %v6344 = vunpack.c.0.s8 %v6343
        %v6345 = vlaneseq
        %v6346 = vshrl.u32 %v6345, 7
        %v6347 = vsub.s32 %v6344, %v6346
        %v6348 = vrot.slane %v5415, %v6347
        %v6350 = vunpack.c.l.s4 1966171168
        %v6351 = vunpack.c.0.s8 %v6350
        %v6352 = vlaneseq
        %v6353 = vshrl.u32 %v6352, 7
        %v6354 = vsub.s32 %v6351, %v6353
        %v6355 = vrot.slane %v6348, %v6354
        %v6357 = vunpack.c.l.s4 1966171168
        %v6358 = vunpack.c.0.s8 %v6357
        %v6359 = vlaneseq
        %v6360 = vshrl.u32 %v6359, 7
        %v6361 = vsub.s32 %v6358, %v6360
        %v6362 = vrot.slane %v5416, %v6361
        %v6364 = vunpack.c.l.s4 1966171168
        %v6365 = vunpack.c.0.s8 %v6364
        %v6366 = vlaneseq
        %v6367 = vshrl.u32 %v6366, 7
        %v6368 = vsub.s32 %v6365, %v6367
        %v6369 = vrot.slane %v6362, %v6368
        %v6371 = vunpack.c.l.s4 1966171168
        %v6372 = vunpack.c.0.s8 %v6371
        %v6373 = vlaneseq
        %v6374 = vshrl.u32 %v6373, 7
        %v6375 = vsub.s32 %v6372, %v6374
        %v6376 = vrot.slane %v5417, %v6375
        %v6378 = vunpack.c.l.s4 1966171168
        %v6379 = vunpack.c.0.s8 %v6378
        %v6380 = vlaneseq
        %v6381 = vshrl.u32 %v6380, 7
        %v6382 = vsub.s32 %v6379, %v6381
        %v6383 = vrot.slane %v6376, %v6382
        %v6385 = vunpack.c.l.s4 1966171168
        %v6386 = vunpack.c.0.s8 %v6385
        %v6387 = vlaneseq
        %v6388 = vshrl.u32 %v6387, 7
        %v6389 = vsub.s32 %v6386, %v6388
        %v6390 = vrot.slane %v5418, %v6389
        %v6392 = vunpack.c.l.s4 1966171168
        %v6393 = vunpack.c.0.s8 %v6392
        %v6394 = vlaneseq
        %v6395 = vshrl.u32 %v6394, 7
        %v6396 = vsub.s32 %v6393, %v6395
        %v6397 = vrot.slane %v6390, %v6396
        %v6399 = vunpack.c.l.s4 1966171168
        %v6400 = vunpack.c.0.s8 %v6399
        %v6401 = vlaneseq
        %v6402 = vshrl.u32 %v6401, 7
        %v6403 = vsub.s32 %v6400, %v6402
        %v6404 = vrot.slane %v5419, %v6403
        %v6406 = vunpack.c.l.s4 1966171168
        %v6407 = vunpack.c.0.s8 %v6406
        %v6408 = vlaneseq
        %v6409 = vshrl.u32 %v6408, 7
        %v6410 = vsub.s32 %v6407, %v6409
        %v6411 = vrot.slane %v6404, %v6410
        %v6413 = vunpack.c.l.s4 1966171168
        %v6414 = vunpack.c.0.s8 %v6413
        %v6415 = vlaneseq
        %v6416 = vshrl.u32 %v6415, 7
        %v6417 = vsub.s32 %v6414, %v6416
        %v6418 = vrot.slane %v5420, %v6417
        %v6420 = vunpack.c.l.s4 1966171168
        %v6421 = vunpack.c.0.s8 %v6420
        %v6422 = vlaneseq
        %v6423 = vshrl.u32 %v6422, 7
        %v6424 = vsub.s32 %v6421, %v6423
        %v6425 = vrot.slane %v6418, %v6424
        %v6427 = vunpack.c.l.s4 1966171168
        %v6428 = vunpack.c.0.s8 %v6427
        %v6429 = vlaneseq
        %v6430 = vshrl.u32 %v6429, 7
        %v6431 = vsub.s32 %v6428, %v6430
        %v6432 = vrot.slane %v5421, %v6431
        %v6434 = vunpack.c.l.s4 1966171168
        %v6435 = vunpack.c.0.s8 %v6434
        %v6436 = vlaneseq
        %v6437 = vshrl.u32 %v6436, 7
        %v6438 = vsub.s32 %v6435, %v6437
        %v6439 = vrot.slane %v6432, %v6438
        %v6441 = vunpack.c.l.s4 1966171168
        %v6442 = vunpack.c.0.s8 %v6441
        %v6443 = vlaneseq
        %v6444 = vshrl.u32 %v6443, 7
        %v6445 = vsub.s32 %v6442, %v6444
        %v6446 = vrot.slane %v5422, %v6445
        %v6448 = vunpack.c.l.s4 1966171168
        %v6449 = vunpack.c.0.s8 %v6448
        %v6450 = vlaneseq
        %v6451 = vshrl.u32 %v6450, 7
        %v6452 = vsub.s32 %v6449, %v6451
        %v6453 = vrot.slane %v6446, %v6452
        %v6455 = vunpack.c.l.s4 1966171168
        %v6456 = vunpack.c.0.s8 %v6455
        %v6457 = vlaneseq
        %v6458 = vshrl.u32 %v6457, 7
        %v6459 = vsub.s32 %v6456, %v6458
        %v6460 = vrot.slane %v5423, %v6459
        %v6462 = vunpack.c.l.s4 1966171168
        %v6463 = vunpack.c.0.s8 %v6462
        %v6464 = vlaneseq
        %v6465 = vshrl.u32 %v6464, 7
        %v6466 = vsub.s32 %v6463, %v6465
        %v6467 = vrot.slane %v6460, %v6466
        %v6469 = vunpack.c.l.s4 1966171168
        %v6470 = vunpack.c.0.s8 %v6469
        %v6471 = vlaneseq
        %v6472 = vshrl.u32 %v6471, 7
        %v6473 = vsub.s32 %v6470, %v6472
        %v6474 = vrot.slane %v5424, %v6473
        %v6476 = vunpack.c.l.s4 1966171168
        %v6477 = vunpack.c.0.s8 %v6476
        %v6478 = vlaneseq
        %v6479 = vshrl.u32 %v6478, 7
        %v6480 = vsub.s32 %v6477, %v6479
        %v6481 = vrot.slane %v6474, %v6480
        %v6483 = vunpack.c.l.s4 1966171168
        %v6484 = vunpack.c.0.s8 %v6483
        %v6485 = vlaneseq
        %v6486 = vshrl.u32 %v6485, 7
        %v6487 = vsub.s32 %v6484, %v6486
        %v6488 = vrot.slane %v5425, %v6487
        %v6490 = vunpack.c.l.s4 1966171168
        %v6491 = vunpack.c.0.s8 %v6490
        %v6492 = vlaneseq
        %v6493 = vshrl.u32 %v6492, 7
        %v6494 = vsub.s32 %v6491, %v6493
        %v6495 = vrot.slane %v6488, %v6494
        %v6497 = vunpack.c.l.s4 1966171168
        %v6498 = vunpack.c.0.s8 %v6497
        %v6499 = vlaneseq
        %v6500 = vshrl.u32 %v6499, 7
        %v6501 = vsub.s32 %v6498, %v6500
        %v6502 = vrot.slane %v5426, %v6501
        %v6504 = vunpack.c.l.s4 1966171168
        %v6505 = vunpack.c.0.s8 %v6504
        %v6506 = vlaneseq
        %v6507 = vshrl.u32 %v6506, 7
        %v6508 = vsub.s32 %v6505, %v6507
        %v6509 = vrot.slane %v6502, %v6508
        %v6511 = vunpack.c.l.s4 1966171168
        %v6512 = vunpack.c.0.s8 %v6511
        %v6513 = vlaneseq
        %v6514 = vshrl.u32 %v6513, 7
        %v6515 = vsub.s32 %v6512, %v6514
        %v6516 = vrot.slane %v5427, %v6515
        %v6518 = vunpack.c.l.s4 1966171168
        %v6519 = vunpack.c.0.s8 %v6518
        %v6520 = vlaneseq
        %v6521 = vshrl.u32 %v6520, 7
        %v6522 = vsub.s32 %v6519, %v6521
        %v6523 = vrot.slane %v6516, %v6522
        %v6525 = vunpack.c.l.s4 1966171168
        %v6526 = vunpack.c.0.s8 %v6525
        %v6527 = vlaneseq
        %v6528 = vshrl.u32 %v6527, 7
        %v6529 = vsub.s32 %v6526, %v6528
        %v6530 = vrot.slane %v5428, %v6529
        %v6532 = vunpack.c.l.s4 1966171168
        %v6533 = vunpack.c.0.s8 %v6532
        %v6534 = vlaneseq
        %v6535 = vshrl.u32 %v6534, 7
        %v6536 = vsub.s32 %v6533, %v6535
        %v6537 = vrot.slane %v6530, %v6536
        %v6539 = vunpack.c.l.s4 1966171168
        %v6540 = vunpack.c.0.s8 %v6539
        %v6541 = vlaneseq
        %v6542 = vshrl.u32 %v6541, 7
        %v6543 = vsub.s32 %v6540, %v6542
        %v6544 = vrot.slane %v5429, %v6543
        %v6546 = vunpack.c.l.s4 1966171168
        %v6547 = vunpack.c.0.s8 %v6546
        %v6548 = vlaneseq
        %v6549 = vshrl.u32 %v6548, 7
        %v6550 = vsub.s32 %v6547, %v6549
        %v6551 = vrot.slane %v6544, %v6550
        %v6553 = vunpack.c.l.s4 1966171168
        %v6554 = vunpack.c.0.s8 %v6553
        %v6555 = vlaneseq
        %v6556 = vshrl.u32 %v6555, 7
        %v6557 = vsub.s32 %v6554, %v6556
        %v6558 = vrot.slane %v5430, %v6557
        %v6560 = vunpack.c.l.s4 1966171168
        %v6561 = vunpack.c.0.s8 %v6560
        %v6562 = vlaneseq
        %v6563 = vshrl.u32 %v6562, 7
        %v6564 = vsub.s32 %v6561, %v6563
        %v6565 = vrot.slane %v6558, %v6564
        %v6567 = vunpack.c.l.s4 1966171168
        %v6568 = vunpack.c.0.s8 %v6567
        %v6569 = vlaneseq
        %v6570 = vshrl.u32 %v6569, 7
        %v6571 = vsub.s32 %v6568, %v6570
        %v6572 = vrot.slane %v5431, %v6571
        %v6574 = vunpack.c.l.s4 1966171168
        %v6575 = vunpack.c.0.s8 %v6574
        %v6576 = vlaneseq
        %v6577 = vshrl.u32 %v6576, 7
        %v6578 = vsub.s32 %v6575, %v6577
        %v6579 = vrot.slane %v6572, %v6578
        %v6581 = vunpack.c.l.s4 1966171168
        %v6582 = vunpack.c.0.s8 %v6581
        %v6583 = vlaneseq
        %v6584 = vshrl.u32 %v6583, 7
        %v6585 = vsub.s32 %v6582, %v6584
        %v6586 = vrot.slane %v5432, %v6585
        %v6588 = vunpack.c.l.s4 1966171168
        %v6589 = vunpack.c.0.s8 %v6588
        %v6590 = vlaneseq
        %v6591 = vshrl.u32 %v6590, 7
        %v6592 = vsub.s32 %v6589, %v6591
        %v6593 = vrot.slane %v6586, %v6592
        %v6595 = vunpack.c.l.s4 1966171168
        %v6596 = vunpack.c.0.s8 %v6595
        %v6597 = vlaneseq
        %v6598 = vshrl.u32 %v6597, 7
        %v6599 = vsub.s32 %v6596, %v6598
        %v6600 = vrot.slane %v5433, %v6599
        %v6602 = vunpack.c.l.s4 1966171168
        %v6603 = vunpack.c.0.s8 %v6602
        %v6604 = vlaneseq
        %v6605 = vshrl.u32 %v6604, 7
        %v6606 = vsub.s32 %v6603, %v6605
        %v6607 = vrot.slane %v6600, %v6606
        %v6609 = vunpack.c.l.s4 1966171168
        %v6610 = vunpack.c.0.s8 %v6609
        %v6611 = vlaneseq
        %v6612 = vshrl.u32 %v6611, 7
        %v6613 = vsub.s32 %v6610, %v6612
        %v6614 = vrot.slane %v5434, %v6613
        %v6616 = vunpack.c.l.s4 1966171168
        %v6617 = vunpack.c.0.s8 %v6616
        %v6618 = vlaneseq
        %v6619 = vshrl.u32 %v6618, 7
        %v6620 = vsub.s32 %v6617, %v6619
        %v6621 = vrot.slane %v6614, %v6620
        %v6623 = vunpack.c.l.s4 1966171168
        %v6624 = vunpack.c.0.s8 %v6623
        %v6625 = vlaneseq
        %v6626 = vshrl.u32 %v6625, 7
        %v6627 = vsub.s32 %v6624, %v6626
        %v6628 = vrot.slane %v5435, %v6627
        %v6630 = vunpack.c.l.s4 1966171168
        %v6631 = vunpack.c.0.s8 %v6630
        %v6632 = vlaneseq
        %v6633 = vshrl.u32 %v6632, 7
        %v6634 = vsub.s32 %v6631, %v6633
        %v6635 = vrot.slane %v6628, %v6634
        %v6636 = vunpack.c.l.b16 %v5529
        %v6637 = vunpack.c.l.b16 %v5543
        %v6638 = vunpack.c.l.b16 %v5557
        %v6639 = vunpack.c.l.b16 %v5571
        %v6640 = vunpack.c.l.b16 %v5585
        %v6641 = vunpack.c.l.b16 %v5599
        %v6642 = vunpack.c.l.b16 %v5613
        %v6643 = vunpack.c.l.b16 %v5627
        %v6644 = vunpack.c.l.b16 %v5641
        %v6645 = vunpack.c.l.b16 %v5655
        %v6646 = vunpack.c.l.b16 %v5669
        %v6647 = vunpack.c.l.b16 %v5683
        %v6648 = vunpack.c.l.b16 %v5697
        %v6649 = vunpack.c.l.b16 %v5711
        %v6650 = vunpack.c.l.b16 %v5725
        %v6651 = vunpack.c.l.b16 %v5739
        %v6652 = vunpack.c.l.b16 %v5753
        %v6653 = vunpack.c.l.b16 %v5767
        %v6654 = vunpack.c.l.b16 %v5781
        %v6655 = vunpack.c.l.b16 %v5795
        %v6656 = vunpack.c.l.b16 %v5809
        %v6657 = vunpack.c.l.b16 %v5823
        %v6658 = vunpack.c.l.b16 %v5837
        %v6659 = vunpack.c.l.b16 %v5851
        %v6660 = vunpack.c.l.b16 %v5865
        %v6661 = vunpack.c.l.b16 %v5879
        %v6662 = vunpack.c.l.b16 %v5893
        %v6663 = vunpack.c.l.b16 %v5907
        %v6664 = vunpack.c.l.b16 %v5921
        %v6665 = vunpack.c.l.b16 %v5935
        %v6666 = vunpack.c.l.b16 %v5949
        %v6667 = vunpack.c.l.b16 %v5963
        %v6668 = vunpack.c.l.b16 %v5977
        %v6669 = vunpack.c.l.b16 %v5991
        %v6670 = vunpack.c.l.b16 %v6005
        %v6671 = vunpack.c.l.b16 %v6019
        %v6672 = vunpack.c.l.b16 %v6033
        %v6673 = vunpack.c.l.b16 %v6047
        %v6674 = vunpack.c.l.b16 %v6061
        %v6675 = vunpack.c.l.b16 %v6075
        %v6676 = vunpack.c.l.b16 %v6089
        %v6677 = vunpack.c.l.b16 %v6103
        %v6678 = vunpack.c.l.b16 %v6117
        %v6679 = vunpack.c.l.b16 %v6131
        %v6680 = vunpack.c.l.b16 %v6145
        %v6681 = vunpack.c.l.b16 %v6159
        %v6682 = vunpack.c.l.b16 %v6173
        %v6683 = vunpack.c.l.b16 %v6187
        %v6684 = vunpack.c.l.b16 %v6201
        %v6685 = vunpack.c.l.b16 %v6215
        %v6686 = vunpack.c.l.b16 %v6229
        %v6687 = vunpack.c.l.b16 %v6243
        %v6688 = vunpack.c.l.b16 %v6257
        %v6689 = vunpack.c.l.b16 %v6271
        %v6690 = vunpack.c.l.b16 %v6285
        %v6691 = vunpack.c.l.b16 %v6299
        %v6692 = vunpack.c.l.b16 %v6313
        %v6693 = vunpack.c.l.b16 %v6327
        %v6694 = vunpack.c.l.b16 %v6341
        %v6695 = vunpack.c.l.b16 %v6355
        %v6696 = vunpack.c.l.b16 %v6369
        %v6697 = vunpack.c.l.b16 %v6383
        %v6698 = vunpack.c.l.b16 %v6397
        %v6699 = vunpack.c.l.b16 %v6411
        %v6700 = vunpack.c.l.b16 %v6425
        %v6701 = vunpack.c.l.b16 %v6439
        %v6702 = vunpack.c.l.b16 %v6453
        %v6703 = vunpack.c.l.b16 %v6467
        %v6704 = vunpack.c.l.b16 %v6481
        %v6705 = vunpack.c.l.b16 %v6495
        %v6706 = vunpack.c.l.b16 %v6509
        %v6707 = vunpack.c.l.b16 %v6523
        %v6708 = vunpack.c.l.b16 %v6537
        %v6709 = vunpack.c.l.b16 %v6551
        %v6710 = vunpack.c.l.b16 %v6565
        %v6711 = vunpack.c.l.b16 %v6579
        %v6712 = vunpack.c.l.b16 %v6593
        %v6713 = vunpack.c.l.b16 %v6607
        %v6714 = vunpack.c.l.b16 %v6621
        %v6715 = vunpack.c.l.b16 %v6635
        %v6716 = vrot.slane %v6636, 7
        %v6717 = vrot.slane %v6637, 6
        %vm6718 = vcmask 1042434
        %v6719 = vsel %vm6718, %v6717, %v6716
        %v6720 = vrot.slane %v6638, 5
        %vm6721 = vcmask 1043459
        %v6722 = vsel %vm6721, %v6720, %v6719
        %v6723 = vrot.slane %v6639, 4
        %vm6724 = vcmask 1044484
        %v6725 = vsel %vm6724, %v6723, %v6722
        %v6726 = vrot.slane %v6640, 3
        %vm6727 = vcmask 1045509
        %v6728 = vsel %vm6727, %v6726, %v6725
        %v6729 = vrot.slane %v6641, 2
        %vm6730 = vcmask 1046534
        %v6731 = vsel %vm6730, %v6729, %v6728
        %v6732 = vrot.slane %v6642, 1
        %vm6733 = vcmask 1047559
        %v6734 = vsel %vm6733, %v6732, %v6731
        %v6735 = vrot.slane %v6644, 7
        %v6736 = vrot.slane %v6645, 6
        %v6737 = vsel %vm6718, %v6736, %v6735
        %v6738 = vrot.slane %v6646, 5
        %v6739 = vsel %vm6721, %v6738, %v6737
        %v6740 = vrot.slane %v6647, 4
        %v6741 = vsel %vm6724, %v6740, %v6739
        %v6742 = vrot.slane %v6648, 3
        %v6743 = vsel %vm6727, %v6742, %v6741
        %v6744 = vrot.slane %v6649, 2
        %v6745 = vsel %vm6730, %v6744, %v6743
        %v6746 = vrot.slane %v6650, 1
        %v6747 = vsel %vm6733, %v6746, %v6745
        %v6748 = vrot.slane %v6652, 7
        %v6749 = vrot.slane %v6653, 6
        %v6750 = vsel %vm6718, %v6749, %v6748
        %v6751 = vrot.slane %v6654, 5
        %v6752 = vsel %vm6721, %v6751, %v6750
        %v6753 = vrot.slane %v6655, 4
        %v6754 = vsel %vm6724, %v6753, %v6752
        %v6755 = vrot.slane %v6656, 3
        %v6756 = vsel %vm6727, %v6755, %v6754
        %v6757 = vrot.slane %v6657, 2
        %v6758 = vsel %vm6730, %v6757, %v6756
        %v6759 = vrot.slane %v6658, 1
        %v6760 = vsel %vm6733, %v6759, %v6758
        %v6761 = vrot.slane %v6660, 7
        %v6762 = vrot.slane %v6661, 6
        %v6763 = vsel %vm6718, %v6762, %v6761
        %v6764 = vrot.slane %v6662, 5
        %v6765 = vsel %vm6721, %v6764, %v6763
        %v6766 = vrot.slane %v6663, 4
        %v6767 = vsel %vm6724, %v6766, %v6765
        %v6768 = vrot.slane %v6664, 3
        %v6769 = vsel %vm6727, %v6768, %v6767
        %v6770 = vrot.slane %v6665, 2
        %v6771 = vsel %vm6730, %v6770, %v6769
        %v6772 = vrot.slane %v6666, 1
        %v6773 = vsel %vm6733, %v6772, %v6771
        %v6774 = vrot.slane %v6668, 7
        %v6775 = vrot.slane %v6669, 6
        %v6776 = vsel %vm6718, %v6775, %v6774
        %v6777 = vrot.slane %v6670, 5
        %v6778 = vsel %vm6721, %v6777, %v6776
        %v6779 = vrot.slane %v6671, 4
        %v6780 = vsel %vm6724, %v6779, %v6778
        %v6781 = vrot.slane %v6672, 3
        %v6782 = vsel %vm6727, %v6781, %v6780
        %v6783 = vrot.slane %v6673, 2
        %v6784 = vsel %vm6730, %v6783, %v6782
        %v6785 = vrot.slane %v6674, 1
        %v6786 = vsel %vm6733, %v6785, %v6784
        %v6787 = vrot.slane %v6676, 7
        %v6788 = vrot.slane %v6677, 6
        %v6789 = vsel %vm6718, %v6788, %v6787
        %v6790 = vrot.slane %v6678, 5
        %v6791 = vsel %vm6721, %v6790, %v6789
        %v6792 = vrot.slane %v6679, 4
        %v6793 = vsel %vm6724, %v6792, %v6791
        %v6794 = vrot.slane %v6680, 3
        %v6795 = vsel %vm6727, %v6794, %v6793
        %v6796 = vrot.slane %v6681, 2
        %v6797 = vsel %vm6730, %v6796, %v6795
        %v6798 = vrot.slane %v6682, 1
        %v6799 = vsel %vm6733, %v6798, %v6797
        %v6800 = vrot.slane %v6684, 7
        %v6801 = vrot.slane %v6685, 6
        %v6802 = vsel %vm6718, %v6801, %v6800
        %v6803 = vrot.slane %v6686, 5
        %v6804 = vsel %vm6721, %v6803, %v6802
        %v6805 = vrot.slane %v6687, 4
        %v6806 = vsel %vm6724, %v6805, %v6804
        %v6807 = vrot.slane %v6688, 3
        %v6808 = vsel %vm6727, %v6807, %v6806
        %v6809 = vrot.slane %v6689, 2
        %v6810 = vsel %vm6730, %v6809, %v6808
        %v6811 = vrot.slane %v6690, 1
        %v6812 = vsel %vm6733, %v6811, %v6810
        %v6813 = vrot.slane %v6692, 7
        %v6814 = vrot.slane %v6693, 6
        %v6815 = vsel %vm6718, %v6814, %v6813
        %v6816 = vrot.slane %v6694, 5
        %v6817 = vsel %vm6721, %v6816, %v6815
        %v6818 = vrot.slane %v6695, 4
        %v6819 = vsel %vm6724, %v6818, %v6817
        %v6820 = vrot.slane %v6696, 3
        %v6821 = vsel %vm6727, %v6820, %v6819
        %v6822 = vrot.slane %v6697, 2
        %v6823 = vsel %vm6730, %v6822, %v6821
        %v6824 = vrot.slane %v6698, 1
        %v6825 = vsel %vm6733, %v6824, %v6823
        %v6826 = vrot.slane %v6700, 7
        %v6827 = vrot.slane %v6701, 6
        %v6828 = vsel %vm6718, %v6827, %v6826
        %v6829 = vrot.slane %v6702, 5
        %v6830 = vsel %vm6721, %v6829, %v6828
        %v6831 = vrot.slane %v6703, 4
        %v6832 = vsel %vm6724, %v6831, %v6830
        %v6833 = vrot.slane %v6704, 3
        %v6834 = vsel %vm6727, %v6833, %v6832
        %v6835 = vrot.slane %v6705, 2
        %v6836 = vsel %vm6730, %v6835, %v6834
        %v6837 = vrot.slane %v6706, 1
        %v6838 = vsel %vm6733, %v6837, %v6836
        %v6839 = vrot.slane %v6708, 7
        %v6840 = vrot.slane %v6709, 6
        %v6841 = vsel %vm6718, %v6840, %v6839
        %v6842 = vrot.slane %v6710, 5
        %v6843 = vsel %vm6721, %v6842, %v6841
        %v6844 = vrot.slane %v6711, 4
        %v6845 = vsel %vm6724, %v6844, %v6843
        %v6846 = vrot.slane %v6712, 3
        %v6847 = vsel %vm6727, %v6846, %v6845
        %v6848 = vrot.slane %v6713, 2
        %v6849 = vsel %vm6730, %v6848, %v6847
        %v6850 = vrot.slane %v6714, 1
        %v6851 = vsel %vm6733, %v6850, %v6849
        %v6852 = vpack.c.b16 %v6643, %v6734
        %v6853 = vpack.c.b16 %v6651, %v6747
        %v6854 = vpack.c.b16 %v6659, %v6760
        %v6855 = vpack.c.b16 %v6667, %v6773
        %v6856 = vpack.c.b16 %v6675, %v6786
        %v6857 = vpack.c.b16 %v6683, %v6799
        %v6858 = vpack.c.b16 %v6691, %v6812
        %v6859 = vpack.c.b16 %v6699, %v6825
        %v6860 = vpack.c.b16 %v6707, %v6838
        %v6861 = vpack.c.b16 %v6715, %v6851
        %vm6872 = vcmask 1040384
        %vm6873 = vsmask.f32 256
        %vm6874 = vmand %vm6872, %vm6873
        %v6875 = vsel %vm6874, 0, %v6852
        %v6876 = vsel %vm6874, 0, %v6853
        %v6877 = vsel %vm6874, 0, %v6854
        %v6878 = vsel %vm6874, 0, %v6855
        %v6879 = vsel %vm6874, 0, %v6856
        %v6880 = vsel %vm6874, 0, %v6857
        %v6881 = vsel %vm6874, 0, %v6858
        %v6882 = vsel %vm6874, 0, %v6859
        %v6883 = vsel %vm6874, 0, %v6860
        %v6884 = vsel %vm6874, 0, %v6861
        %vm6885 = vcmask 1044480
        %vm6886 = vsmask.f32 4352
        %vm6887 = vmand %vm6885, %vm6886
        %v6888 = vsel %vm6887, %v6875, 0
        %v6889 = vsel %vm6887, %v6876, 0
        %v6890 = vsel %vm6887, %v6877, 0
        %v6891 = vsel %vm6887, %v6878, 0
        %v6892 = vsel %vm6887, %v6879, 0
        %v6893 = vsel %vm6887, %v6880, 0
        %v6894 = vsel %vm6887, %v6881, 0
        %v6895 = vsel %vm6887, %v6882, 0
        %v6896 = vsel %vm6887, %v6883, 0
        %v6897 = vsel %vm6887, %v6884, 0
        %v6899 = vshrl.u32 %v6888, 16
        %v6901 = vshll.u32 %v6888, 16
        %v6903 = vrot.slane %v6901, 1
        %v6904 = vor.u32 %v6899, %v6903
        %v6906 = vshll.u32 %v6889, 16
        %v6908 = vrot.slane %v6906, 1
        %v6909 = vsel %vm1542, %v6904, %v6908
        %v6910 = vshrl.u32 %v6889, 16
        %v6912 = vor.u32 %v6910, %v6908
        %v6914 = vshll.u32 %v6890, 16
        %v6916 = vrot.slane %v6914, 1
        %v6917 = vsel %vm1542, %v6912, %v6916
        %v6918 = vshrl.u32 %v6890, 16
        %v6920 = vor.u32 %v6918, %v6916
        %v6922 = vshll.u32 %v6891, 16
        %v6924 = vrot.slane %v6922, 1
        %v6925 = vsel %vm1542, %v6920, %v6924
        %v6926 = vshrl.u32 %v6891, 16
        %v6928 = vor.u32 %v6926, %v6924
        %v6930 = vshll.u32 %v6892, 16
        %v6932 = vrot.slane %v6930, 1
        %v6933 = vsel %vm1542, %v6928, %v6932
        %v6934 = vshrl.u32 %v6892, 16
        %v6936 = vor.u32 %v6934, %v6932
        %v6938 = vshll.u32 %v6893, 16
        %v6940 = vrot.slane %v6938, 1
        %v6941 = vsel %vm1542, %v6936, %v6940
        %v6942 = vshrl.u32 %v6893, 16
        %v6944 = vor.u32 %v6942, %v6940
        %v6946 = vshll.u32 %v6894, 16
        %v6948 = vrot.slane %v6946, 1
        %v6949 = vsel %vm1542, %v6944, %v6948
        %v6950 = vshrl.u32 %v6894, 16
        %v6952 = vor.u32 %v6950, %v6948
        %v6954 = vshll.u32 %v6895, 16
        %v6956 = vrot.slane %v6954, 1
        %v6957 = vsel %vm1542, %v6952, %v6956
        %v6958 = vshrl.u32 %v6895, 16
        %v6960 = vor.u32 %v6958, %v6956
        %v6962 = vshll.u32 %v6896, 16
        %v6964 = vrot.slane %v6962, 1
        %v6965 = vsel %vm1542, %v6960, %v6964
        %6966 = vrot.lane.b32.xlu0 %v6909, 64
        %v6967 = vpop.permute.xlu0 %6966
        %6968 = vrot.lane.b32.xlu0 %v6917, 64
        %v6969 = vpop.permute.xlu0 %6968
        %6970 = vrot.lane.b32.xlu0 %v6925, 64
        %v6971 = vpop.permute.xlu0 %6970
        %6972 = vrot.lane.b32.xlu0 %v6933, 64
        %v6973 = vpop.permute.xlu0 %6972
        %6974 = vrot.lane.b32.xlu0 %v6941, 64
        %v6975 = vpop.permute.xlu0 %6974
        %6976 = vrot.lane.b32.xlu0 %v6949, 64
        %v6977 = vpop.permute.xlu0 %6976
        %6978 = vrot.lane.b32.xlu0 %v6957, 64
        %v6979 = vpop.permute.xlu0 %6978
        %6980 = vrot.lane.b32.xlu0 %v6965, 64
        %v6981 = vpop.permute.xlu0 %6980
        %v6991 = vrot.slane %v6888, 1
        %v6992 = vrot.slane %v6889, 1
        %v6993 = vsel %vm1878, %v6991, %v6992
        %v6994 = vrot.slane %v6890, 1
        %v6995 = vsel %vm1878, %v6992, %v6994
        %v6996 = vrot.slane %v6891, 1
        %v6997 = vsel %vm1878, %v6994, %v6996
        %v6998 = vrot.slane %v6892, 1
        %v6999 = vsel %vm1878, %v6996, %v6998
        %v7000 = vrot.slane %v6893, 1
        %v7001 = vsel %vm1878, %v6998, %v7000
        %v7002 = vrot.slane %v6894, 1
        %v7003 = vsel %vm1878, %v7000, %v7002
        %v7004 = vrot.slane %v6895, 1
        %v7005 = vsel %vm1878, %v7002, %v7004
        %v7006 = vrot.slane %v6896, 1
        %v7007 = vsel %vm1878, %v7004, %v7006
        %7008 = vrot.lane.b32.xlu0 %v6889, 64
        %v7009 = vpop.permute.xlu0 %7008
        %7010 = vrot.lane.b32.xlu0 %v6890, 64
        %v7011 = vpop.permute.xlu0 %7010
        %7012 = vrot.lane.b32.xlu0 %v6891, 64
        %v7013 = vpop.permute.xlu0 %7012
        %7014 = vrot.lane.b32.xlu0 %v6892, 64
        %v7015 = vpop.permute.xlu0 %7014
        %7016 = vrot.lane.b32.xlu0 %v6893, 64
        %v7017 = vpop.permute.xlu0 %7016
        %7018 = vrot.lane.b32.xlu0 %v6894, 64
        %v7019 = vpop.permute.xlu0 %7018
        %7020 = vrot.lane.b32.xlu0 %v6895, 64
        %v7021 = vpop.permute.xlu0 %7020
        %7022 = vrot.lane.b32.xlu0 %v6896, 64
        %v7023 = vpop.permute.xlu0 %7022
        %v7024 = vshrl.u32 %v6896, 16
        %v7026 = vor.u32 %v7024, %v6964
        %v7028 = vshll.u32 %v6897, 16
        %v7030 = vrot.slane %v7028, 1
        %v7031 = vsel %vm1542, %v7026, %v7030
        %v7033 = vrot.slane %v6897, 1
        %v7034 = vsel %vm1878, %v7006, %v7033
        %7035 = vrot.lane.b32.xlu0 %v6995, 64
        %v7036 = vpop.permute.xlu0 %7035
        %7037 = vrot.lane.b32.xlu0 %v6997, 64
        %v7038 = vpop.permute.xlu0 %7037
        %7039 = vrot.lane.b32.xlu0 %v6999, 64
        %v7040 = vpop.permute.xlu0 %7039
        %7041 = vrot.lane.b32.xlu0 %v7001, 64
        %v7042 = vpop.permute.xlu0 %7041
        %7043 = vrot.lane.b32.xlu0 %v7003, 64
        %v7044 = vpop.permute.xlu0 %7043
        %7045 = vrot.lane.b32.xlu0 %v7005, 64
        %v7046 = vpop.permute.xlu0 %7045
        %7047 = vrot.lane.b32.xlu0 %v7007, 64
        %v7048 = vpop.permute.xlu0 %7047
        %7049 = vrot.lane.b32.xlu0 %v7034, 64
        %v7050 = vpop.permute.xlu0 %7049
        %v7051 = vshrl.u32 %v6897, 16
        %v7053 = vor.u32 %v7051, %v7030
        %v7055 = vshll.u32 0, 16
        %v7057 = vrot.slane %v7055, 1
        %v7058 = vsel %vm1542, %v7053, %v7057
        %7059 = vrot.lane.b32.xlu0 %v7031, 64
        %v7060 = vpop.permute.xlu0 %7059
        %7061 = vrot.lane.b32.xlu0 %v7058, 64
        %v7062 = vpop.permute.xlu0 %7061
        %v7064 = vrot.slane 0, 1
        %v7065 = vsel %vm1878, %v7033, %v7064
        %v7067 = vsel %vm2347, %v6888, %v6967
        %v7070 = vsel %vm2347, %v6889, %v6969
        %v7073 = vsel %vm2347, %v6890, %v6971
        %v7076 = vsel %vm2347, %v6891, %v6973
        %v7079 = vsel %vm2347, %v6892, %v6975
        %v7082 = vsel %vm2347, %v6893, %v6977
        %v7085 = vsel %vm2347, %v6894, %v6979
        %v7088 = vsel %vm2347, %v6895, %v6981
        %v7092 = vsel %vm2347, %v6993, %v7009
        %v7096 = vsel %vm2347, %v6995, %v7011
        %v7100 = vsel %vm2347, %v6997, %v7013
        %v7104 = vsel %vm2347, %v6999, %v7015
        %v7108 = vsel %vm2347, %v7001, %v7017
        %v7112 = vsel %vm2347, %v7003, %v7019
        %v7116 = vsel %vm2347, %v7005, %v7021
        %v7120 = vsel %vm2347, %v7007, %v7023
        %v7124 = vsel %vm2347, %v6917, %v7036
        %v7128 = vsel %vm2347, %v6925, %v7038
        %v7132 = vsel %vm2347, %v6933, %v7040
        %v7136 = vsel %vm2347, %v6941, %v7042
        %v7140 = vsel %vm2347, %v6949, %v7044
        %v7144 = vsel %vm2347, %v6957, %v7046
        %v7148 = vsel %vm2347, %v6965, %v7048
        %v7152 = vsel %vm2347, %v7031, %v7050
        %v7155 = vsel %vm2347, %v6896, %v7060
        %v7158 = vsel %vm2347, %v6897, %v7062
        %v7160 = vld [vmem:[%s5] sm:$0xf]
        %v7161 = vld [vmem:[%s5 + $0x4] sm:$0xf]
        %v7162 = vld [vmem:[%s5 + $0x8] sm:$0xf]
        %v7163 = vld [vmem:[%s5 + $0xc] sm:$0xf]
        %v7164 = vld [vmem:[%s5 + $0x10] sm:$0xf]
        %v7165 = vld [vmem:[%s5 + $0x14] sm:$0xf]
        %v7166 = vld [vmem:[%s5 + $0x18] sm:$0xf]
        %v7167 = vld [vmem:[%s5 + $0x1c] sm:$0xf]
        %v7168 = vld [vmem:[%s5 + $0x20] sm:$0xf]
        %v7169 = vld [vmem:[%s5 + $0x24] sm:$0xf]
        %v7170 = vld [vmem:[%s5 + $0x28] sm:$0xf]
        %v7171 = vld [vmem:[%s5 + $0x2c] sm:$0xf]
        %v7172 = vld [vmem:[%s5 + $0x30] sm:$0xf]
        %v7173 = vld [vmem:[%s5 + $0x34] sm:$0xf]
        %v7174 = vld [vmem:[%s5 + $0x38] sm:$0xf]
        %v7175 = vld [vmem:[%s5 + $0x3c] sm:$0xf]
        %v7176 = vld [vmem:[%s5 + $0x40] sm:$0xf]
        %v7177 = vld [vmem:[%s5 + $0x44] sm:$0xf]
        %v7178 = vld [vmem:[%s5 + $0x48] sm:$0xf]
        %v7179 = vld [vmem:[%s5 + $0x4c] sm:$0xf]
        %v7180 = vld [vmem:[%s5 + $0x50] sm:$0xf]
        %v7181 = vld [vmem:[%s5 + $0x54] sm:$0xf]
        %v7182 = vld [vmem:[%s5 + $0x58] sm:$0xf]
        %v7183 = vld [vmem:[%s5 + $0x5c] sm:$0xf]
        %v7184 = vld [vmem:[%s5 + $0x60] sm:$0xf]
        %v7185 = vld [vmem:[%s5 + $0x64] sm:$0xf]
        %v7186 = vld [vmem:[%s5 + $0x68] sm:$0xf]
        %v7187 = vld [vmem:[%s5 + $0x6c] sm:$0xf]
        %v7188 = vld [vmem:[%s5 + $0x70] sm:$0xf]
        %v7189 = vld [vmem:[%s5 + $0x74] sm:$0xf]
        %v7190 = vld [vmem:[%s5 + $0x78] sm:$0xf]
        %v7191 = vld [vmem:[%s5 + $0x7c] sm:$0xf]
        %v7192 = vld [vmem:[%s5 + $0x80] sm:$0xf]
        %v7193 = vld [vmem:[%s5 + $0x84] sm:$0xf]
        %v7194 = vld [vmem:[%s5 + $0x88] sm:$0xf]
        %v7195 = vld [vmem:[%s5 + $0x8c] sm:$0xf]
        %v7196 = vld [vmem:[%s5 + $0x90] sm:$0xf]
        %v7197 = vld [vmem:[%s5 + $0x94] sm:$0xf]
        %v7198 = vld [vmem:[%s5 + $0x98] sm:$0xf]
        %v7199 = vld [vmem:[%s5 + $0x9c] sm:$0xf]
        %v7200 = vld [vmem:[%s5 + $0xa0] sm:$0xf]
        %v7201 = vld [vmem:[%s5 + $0xa4] sm:$0xf]
        %v7202 = vld [vmem:[%s5 + $0xa8] sm:$0xf]
        %v7203 = vld [vmem:[%s5 + $0xac] sm:$0xf]
        %v7204 = vld [vmem:[%s5 + $0xb0] sm:$0xf]
        %v7205 = vld [vmem:[%s5 + $0xb4] sm:$0xf]
        %v7206 = vld [vmem:[%s5 + $0xb8] sm:$0xf]
        %v7207 = vld [vmem:[%s5 + $0xbc] sm:$0xf]
        %v7208 = vld [vmem:[%s5 + $0xc0] sm:$0xf]
        %v7209 = vld [vmem:[%s5 + $0xc4] sm:$0xf]
        %v7210 = vld [vmem:[%s5 + $0xc8] sm:$0xf]
        %v7211 = vld [vmem:[%s5 + $0xcc] sm:$0xf]
        %v7212 = vld [vmem:[%s5 + $0xd0] sm:$0xf]
        %v7213 = vld [vmem:[%s5 + $0xd4] sm:$0xf]
        %v7214 = vld [vmem:[%s5 + $0xd8] sm:$0xf]
        %v7215 = vld [vmem:[%s5 + $0xdc] sm:$0xf]
        %v7216 = vld [vmem:[%s5 + $0xe0] sm:$0xf]
        %v7217 = vld [vmem:[%s5 + $0xe4] sm:$0xf]
        %v7218 = vld [vmem:[%s5 + $0xe8] sm:$0xf]
        %v7219 = vld [vmem:[%s5 + $0xec] sm:$0xf]
        %v7220 = vld [vmem:[%s5 + $0xf0] sm:$0xf]
        %v7221 = vld [vmem:[%s5 + $0xf4] sm:$0xf]
        %v7222 = vld [vmem:[%s5 + $0xf8] sm:$0xf]
        %v7223 = vld [vmem:[%s5 + $0xfc] sm:$0xf]
        %v7224 = vld [vmem:[%s5 + $0x100] sm:$0xf]
        %v7225 = vld [vmem:[%s5 + $0x104] sm:$0xf]
        %v7226 = vld [vmem:[%s5 + $0x108] sm:$0xf]
        %v7227 = vld [vmem:[%s5 + $0x10c] sm:$0xf]
        %v7228 = vld [vmem:[%s5 + $0x110] sm:$0xf]
        %v7229 = vld [vmem:[%s5 + $0x114] sm:$0xf]
        %v7230 = vld [vmem:[%s5 + $0x118] sm:$0xf]
        %v7231 = vld [vmem:[%s5 + $0x11c] sm:$0xf]
        %v7232 = vld [vmem:[%s6] sm:$0x1]
        %v7234 = vlaneseq
        %v7235 = vshrl.u32 %v7234, 7
        %v7236 = vsub.s32 0, %v7235
        %v7237 = vrot.slane %v7232, %v7236
        %v7311 = vunpack.c.l.b16 %v7160
        %v7312 = vunpack.c.l.b16 %v7161
        %v7313 = vunpack.c.l.b16 %v7162
        %v7314 = vunpack.c.l.b16 %v7163
        %v7315 = vunpack.c.l.b16 %v7164
        %v7316 = vunpack.c.l.b16 %v7165
        %v7317 = vunpack.c.l.b16 %v7166
        %v7318 = vunpack.c.l.b16 %v7167
        %v7319 = vunpack.c.l.b16 %v7168
        %v7320 = vunpack.c.l.b16 %v7169
        %v7321 = vunpack.c.l.b16 %v7170
        %v7322 = vunpack.c.l.b16 %v7171
        %v7323 = vunpack.c.l.b16 %v7172
        %v7324 = vunpack.c.l.b16 %v7173
        %v7325 = vunpack.c.l.b16 %v7174
        %v7326 = vunpack.c.l.b16 %v7175
        %v7327 = vunpack.c.l.b16 %v7176
        %v7328 = vunpack.c.l.b16 %v7177
        %v7329 = vunpack.c.l.b16 %v7178
        %v7330 = vunpack.c.l.b16 %v7179
        %v7331 = vunpack.c.l.b16 %v7180
        %v7332 = vunpack.c.l.b16 %v7181
        %v7333 = vunpack.c.l.b16 %v7182
        %v7334 = vunpack.c.l.b16 %v7183
        %v7335 = vunpack.c.l.b16 %v7184
        %v7336 = vunpack.c.l.b16 %v7185
        %v7337 = vunpack.c.l.b16 %v7186
        %v7338 = vunpack.c.l.b16 %v7187
        %v7339 = vunpack.c.l.b16 %v7188
        %v7340 = vunpack.c.l.b16 %v7189
        %v7341 = vunpack.c.l.b16 %v7190
        %v7342 = vunpack.c.l.b16 %v7191
        %v7343 = vunpack.c.l.b16 %v7192
        %v7344 = vunpack.c.l.b16 %v7193
        %v7345 = vunpack.c.l.b16 %v7194
        %v7346 = vunpack.c.l.b16 %v7195
        %v7347 = vunpack.c.l.b16 %v7196
        %v7348 = vunpack.c.l.b16 %v7197
        %v7349 = vunpack.c.l.b16 %v7198
        %v7350 = vunpack.c.l.b16 %v7199
        %v7351 = vunpack.c.l.b16 %v7200
        %v7352 = vunpack.c.l.b16 %v7201
        %v7353 = vunpack.c.l.b16 %v7202
        %v7354 = vunpack.c.l.b16 %v7203
        %v7355 = vunpack.c.l.b16 %v7204
        %v7356 = vunpack.c.l.b16 %v7205
        %v7357 = vunpack.c.l.b16 %v7206
        %v7358 = vunpack.c.l.b16 %v7207
        %v7359 = vunpack.c.l.b16 %v7208
        %v7360 = vunpack.c.l.b16 %v7209
        %v7361 = vunpack.c.l.b16 %v7210
        %v7362 = vunpack.c.l.b16 %v7211
        %v7363 = vunpack.c.l.b16 %v7212
        %v7364 = vunpack.c.l.b16 %v7213
        %v7365 = vunpack.c.l.b16 %v7214
        %v7366 = vunpack.c.l.b16 %v7215
        %v7367 = vunpack.c.l.b16 %v7216
        %v7368 = vunpack.c.l.b16 %v7217
        %v7369 = vunpack.c.l.b16 %v7218
        %v7370 = vunpack.c.l.b16 %v7219
        %v7371 = vunpack.c.l.b16 %v7220
        %v7372 = vunpack.c.l.b16 %v7221
        %v7373 = vunpack.c.l.b16 %v7222
        %v7374 = vunpack.c.l.b16 %v7223
        %v7375 = vunpack.c.l.b16 %v7224
        %v7376 = vunpack.c.l.b16 %v7225
        %v7377 = vunpack.c.l.b16 %v7226
        %v7378 = vunpack.c.l.b16 %v7227
        %v7379 = vunpack.c.l.b16 %v7228
        %v7380 = vunpack.c.l.b16 %v7229
        %v7381 = vunpack.c.l.b16 %v7230
        %v7382 = vunpack.c.l.b16 %v7231
        %v7383 = vpack.c.b16 %v7312, %v7311
        %v7384 = vpack.c.b16 %v7314, %v7313
        %v7385 = vpack.c.b16 %v7316, %v7315
        %v7386 = vpack.c.b16 %v7318, %v7317
        %v7387 = vpack.c.b16 %v7320, %v7319
        %v7388 = vpack.c.b16 %v7322, %v7321
        %v7389 = vpack.c.b16 %v7324, %v7323
        %v7390 = vpack.c.b16 %v7326, %v7325
        %v7391 = vpack.c.b16 %v7328, %v7327
        %v7392 = vpack.c.b16 %v7330, %v7329
        %v7393 = vpack.c.b16 %v7332, %v7331
        %v7394 = vpack.c.b16 %v7334, %v7333
        %v7395 = vpack.c.b16 %v7336, %v7335
        %v7396 = vpack.c.b16 %v7338, %v7337
        %v7397 = vpack.c.b16 %v7340, %v7339
        %v7398 = vpack.c.b16 %v7342, %v7341
        %v7399 = vpack.c.b16 %v7344, %v7343
        %v7400 = vpack.c.b16 %v7346, %v7345
        %v7401 = vpack.c.b16 %v7348, %v7347
        %v7402 = vpack.c.b16 %v7350, %v7349
        %v7403 = vpack.c.b16 %v7352, %v7351
        %v7404 = vpack.c.b16 %v7354, %v7353
        %v7405 = vpack.c.b16 %v7356, %v7355
        %v7406 = vpack.c.b16 %v7358, %v7357
        %v7407 = vpack.c.b16 %v7360, %v7359
        %v7408 = vpack.c.b16 %v7362, %v7361
        %v7409 = vpack.c.b16 %v7364, %v7363
        %v7410 = vpack.c.b16 %v7366, %v7365
        %v7411 = vpack.c.b16 %v7368, %v7367
        %v7412 = vpack.c.b16 %v7370, %v7369
        %v7413 = vpack.c.b16 %v7372, %v7371
        %v7414 = vpack.c.b16 %v7374, %v7373
        %v7415 = vpack.c.b16 %v7376, %v7375
        %v7416 = vpack.c.b16 %v7378, %v7377
        %v7417 = vpack.c.b16 %v7380, %v7379
        %v7418 = vpack.c.b16 %v7382, %v7381
        %v7455 = vsel %vm2347, %v6997, 0
        %v7457 = vsel %vm2347, %v6999, 0
        %v7459 = vsel %vm2347, %v7001, 0
        %v7461 = vsel %vm2347, %v7003, 0
        %v7463 = vsel %vm2347, %v7005, 0
        %v7465 = vsel %vm2347, %v7007, 0
        %v7468 = vsel %vm2347, %v7034, 0
        %v7471 = vsel %vm2347, %v7065, 0
        %7473 = vmatprep.subr.bf16.mxu0 0
        %7474 = vmatpush1.bf16.msra.mxu0 %v7383
        %7475 = vmatprep.subr.bf16.mxu0 0
        %7476 = vmatpush1.bf16.msra.mxu0 %v7384
        %7477 = vmatprep.subr.bf16.mxu0 0
        %7478 = vmatpush1.bf16.msra.mxu0 %v7385
        %7479 = vmatprep.subr.bf16.mxu0 0
        %7480 = vmatpush1.bf16.msra.mxu0 %v7386
        %7481 = vmatprep.subr.bf16.mxu0 0
        %7482 = vmatpush1.bf16.msra.mxu0 %v7387
        %7483 = vmatprep.subr.bf16.mxu0 0
        %7484 = vmatpush1.bf16.msra.mxu0 %v7388
        %7485 = vmatprep.subr.bf16.mxu0 0
        %7486 = vmatpush1.bf16.msra.mxu0 %v7389
        %7487 = vmatprep.subr.bf16.mxu0 0
        %7488 = vmatpush1.bf16.msra.mxu0 %v7390
        %7489 = vmatprep.subr.bf16.mxu0 0
        %7490 = vmatpush1.bf16.msra.mxu0 %v7391
        %7491 = vmatprep.subr.bf16.mxu0 0
        %7492 = vmatpush1.bf16.msra.mxu0 %v7392
        %7493 = vmatprep.subr.bf16.mxu0 0
        %7494 = vmatpush1.bf16.msra.mxu0 %v7393
        %7495 = vmatprep.subr.bf16.mxu0 0
        %7496 = vmatpush1.bf16.msra.mxu0 %v7394
        %7497 = vmatprep.subr.bf16.mxu0 0
        %7498 = vmatpush1.bf16.msra.mxu0 %v7395
        %7499 = vmatprep.subr.bf16.mxu0 0
        %7500 = vmatpush1.bf16.msra.mxu0 %v7396
        %7501 = vmatprep.subr.bf16.mxu0 0
        %7502 = vmatpush1.bf16.msra.mxu0 %v7397
        %7503 = vmatprep.subr.bf16.mxu0 0
        %7504 = vmatpush1.bf16.msra.mxu0 %v7398
        %7505 = vmatprep.mubr.bf16.mxu0 %v7092
        %7506 = vmatmul.mubr.bf16.gmra.mrb[0].mxu0 %v7067
        %v7507 = vpop.f32.mrb[0].mxu0
        %v7508 = vadd.f32 %v7237, %v7507
        %v7509 = vpop.f32.mrb[0].mxu0
        %v7510 = vpop.f32.mrb[0].mxu0
        %v7511 = vpop.f32.mrb[0].mxu0
        %7512 = vmatprep.mubr.bf16.mxu0 %v7096
        %7513 = vmatmul.mubr.bf16.gmra.mrb[0].mxu0 %v7070
        %v7514 = vpop.f32.mrb[0].mxu0
        %v7515 = vadd.f32 %v7237, %v7514
        %v7516 = vpop.f32.mrb[0].mxu0
        %v7517 = vpop.f32.mrb[0].mxu0
        %v7518 = vpop.f32.mrb[0].mxu0
        %7519 = vmatprep.mubr.bf16.mxu0 %v7100
        %7520 = vmatmul.mubr.bf16.gmra.mrb[0].mxu0 %v7073
        %v7521 = vpop.f32.mrb[0].mxu0
        %v7522 = vadd.f32 %v7237, %v7521
        %v7523 = vpop.f32.mrb[0].mxu0
        %v7524 = vpop.f32.mrb[0].mxu0
        %v7525 = vpop.f32.mrb[0].mxu0
        %7526 = vmatprep.mubr.bf16.mxu0 %v7104
        %7527 = vmatmul.mubr.bf16.gmra.mrb[0].mxu0 %v7076
        %v7528 = vpop.f32.mrb[0].mxu0
        %v7529 = vadd.f32 %v7237, %v7528
        %v7530 = vpop.f32.mrb[0].mxu0
        %v7531 = vpop.f32.mrb[0].mxu0
        %v7532 = vpop.f32.mrb[0].mxu0
        %7533 = vmatprep.mubr.bf16.mxu0 %v7108
        %7534 = vmatmul.mubr.bf16.gmra.mrb[0].mxu0 %v7079
        %v7535 = vpop.f32.mrb[0].mxu0
        %v7536 = vadd.f32 %v7237, %v7535
        %v7537 = vpop.f32.mrb[0].mxu0
        %v7538 = vpop.f32.mrb[0].mxu0
        %v7539 = vpop.f32.mrb[0].mxu0
        %7540 = vmatprep.mubr.bf16.mxu0 %v7112
        %7541 = vmatmul.mubr.bf16.gmra.mrb[0].mxu0 %v7082
        %v7542 = vpop.f32.mrb[0].mxu0
        %v7543 = vadd.f32 %v7237, %v7542
        %v7544 = vpop.f32.mrb[0].mxu0
        %v7545 = vpop.f32.mrb[0].mxu0
        %v7546 = vpop.f32.mrb[0].mxu0
        %7547 = vmatprep.mubr.bf16.mxu0 %v7116
        %7548 = vmatmul.mubr.bf16.gmra.mrb[0].mxu0 %v7085
        %v7549 = vpop.f32.mrb[0].mxu0
        %v7550 = vadd.f32 %v7237, %v7549
        %v7551 = vpop.f32.mrb[0].mxu0
        %v7552 = vpop.f32.mrb[0].mxu0
        %v7553 = vpop.f32.mrb[0].mxu0
        %7554 = vmatprep.mubr.bf16.mxu0 %v7120
        %7555 = vmatmul.mubr.bf16.gmra.mrb[0].mxu0 %v7088
        %v7556 = vpop.f32.mrb[0].mxu0
        %v7557 = vadd.f32 %v7237, %v7556
        %v7558 = vpop.f32.mrb[0].mxu0
        %v7559 = vpop.f32.mrb[0].mxu0
        %v7560 = vpop.f32.mrb[0].mxu0
        %7561 = vdwg.mxu0
        %7562 = vmatprep.subr.bf16.mxu0 0
        %7563 = vmatpush1.bf16.msra.mxu0 %v7399
        %7564 = vmatprep.subr.bf16.mxu0 0
        %7565 = vmatpush1.bf16.msra.mxu0 %v7400
        %7566 = vmatprep.subr.bf16.mxu0 0
        %7567 = vmatpush1.bf16.msra.mxu0 %v7401
        %7568 = vmatprep.subr.bf16.mxu0 0
        %7569 = vmatpush1.bf16.msra.mxu0 %v7402
        %7570 = vmatprep.subr.bf16.mxu0 0
        %7571 = vmatpush1.bf16.msra.mxu0 %v7403
        %7572 = vmatprep.subr.bf16.mxu0 0
        %7573 = vmatpush1.bf16.msra.mxu0 %v7404
        %7574 = vmatprep.subr.bf16.mxu0 0
        %7575 = vmatpush1.bf16.msra.mxu0 %v7405
        %7576 = vmatprep.subr.bf16.mxu0 0
        %7577 = vmatpush1.bf16.msra.mxu0 %v7406
        %7578 = vmatprep.subr.bf16.mxu0 0
        %7579 = vmatpush1.bf16.msra.mxu0 %v7407
        %7580 = vmatprep.subr.bf16.mxu0 0
        %7581 = vmatpush1.bf16.msra.mxu0 %v7408
        %7582 = vmatprep.subr.bf16.mxu0 0
        %7583 = vmatpush1.bf16.msra.mxu0 %v7409
        %7584 = vmatprep.subr.bf16.mxu0 0
        %7585 = vmatpush1.bf16.msra.mxu0 %v7410
        %7586 = vmatprep.subr.bf16.mxu0 0
        %7587 = vmatpush1.bf16.msra.mxu0 %v7411
        %7588 = vmatprep.subr.bf16.mxu0 0
        %7589 = vmatpush1.bf16.msra.mxu0 %v7412
        %7590 = vmatprep.subr.bf16.mxu0 0
        %7591 = vmatpush1.bf16.msra.mxu0 %v7413
        %7592 = vmatprep.subr.bf16.mxu0 0
        %7593 = vmatpush1.bf16.msra.mxu0 %v7414
        %7594 = vmatprep.mubr.bf16.mxu0 %v7073
        %7595 = vmatmul.mubr.bf16.gmra.mrb[0].mxu0 %v7124
        %v7596 = vpop.f32.mrb[0].mxu0
        %v7597 = vadd.f32 %v7508, %v7596
        %v7598 = vpop.f32.mrb[0].mxu0
        %v7599 = vpop.f32.mrb[0].mxu0
        %v7600 = vpop.f32.mrb[0].mxu0
        %7601 = vmatprep.mubr.bf16.mxu0 %v7076
        %7602 = vmatmul.mubr.bf16.gmra.mrb[0].mxu0 %v7128
        %v7603 = vpop.f32.mrb[0].mxu0
        %v7604 = vadd.f32 %v7515, %v7603
        %v7605 = vpop.f32.mrb[0].mxu0
        %v7606 = vpop.f32.mrb[0].mxu0
        %v7607 = vpop.f32.mrb[0].mxu0
        %7608 = vmatprep.mubr.bf16.mxu0 %v7079
        %7609 = vmatmul.mubr.bf16.gmra.mrb[0].mxu0 %v7132
        %v7610 = vpop.f32.mrb[0].mxu0
        %v7611 = vadd.f32 %v7522, %v7610
        %v7612 = vpop.f32.mrb[0].mxu0
        %v7613 = vpop.f32.mrb[0].mxu0
        %v7614 = vpop.f32.mrb[0].mxu0
        %7615 = vmatprep.mubr.bf16.mxu0 %v7082
        %7616 = vmatmul.mubr.bf16.gmra.mrb[0].mxu0 %v7136
        %v7617 = vpop.f32.mrb[0].mxu0
        %v7618 = vadd.f32 %v7529, %v7617
        %v7619 = vpop.f32.mrb[0].mxu0
        %v7620 = vpop.f32.mrb[0].mxu0
        %v7621 = vpop.f32.mrb[0].mxu0
        %7622 = vmatprep.mubr.bf16.mxu0 %v7085
        %7623 = vmatmul.mubr.bf16.gmra.mrb[0].mxu0 %v7140
        %v7624 = vpop.f32.mrb[0].mxu0
        %v7625 = vadd.f32 %v7536, %v7624
        %v7626 = vpop.f32.mrb[0].mxu0
        %v7627 = vpop.f32.mrb[0].mxu0
        %v7628 = vpop.f32.mrb[0].mxu0
        %7629 = vmatprep.mubr.bf16.mxu0 %v7088
        %7630 = vmatmul.mubr.bf16.gmra.mrb[0].mxu0 %v7144
        %v7631 = vpop.f32.mrb[0].mxu0
        %v7632 = vadd.f32 %v7543, %v7631
        %v7633 = vpop.f32.mrb[0].mxu0
        %v7634 = vpop.f32.mrb[0].mxu0
        %v7635 = vpop.f32.mrb[0].mxu0
        %7636 = vmatprep.mubr.bf16.mxu0 %v7155
        %7637 = vmatmul.mubr.bf16.gmra.mrb[0].mxu0 %v7148
        %v7638 = vpop.f32.mrb[0].mxu0
        %v7639 = vadd.f32 %v7550, %v7638
        %v7640 = vpop.f32.mrb[0].mxu0
        %v7641 = vpop.f32.mrb[0].mxu0
        %v7642 = vpop.f32.mrb[0].mxu0
        %7643 = vmatprep.mubr.bf16.mxu0 %v7158
        %7644 = vmatmul.mubr.bf16.gmra.mrb[0].mxu0 %v7152
        %v7645 = vpop.f32.mrb[0].mxu0
        %v7646 = vadd.f32 %v7557, %v7645
        %v7647 = vpop.f32.mrb[0].mxu0
        %v7648 = vpop.f32.mrb[0].mxu0
        %v7649 = vpop.f32.mrb[0].mxu0
        %7650 = vdwg.mxu0
        %7651 = vmatprep.subr.bf16.mxu0 0
        %7652 = vmatpush1.bf16.msra.mxu0 %v7415
        %7653 = vmatprep.subr.bf16.mxu0 0
        %7654 = vmatpush1.bf16.msra.mxu0 %v7416
        %7655 = vmatprep.subr.bf16.mxu0 0
        %7656 = vmatpush1.bf16.msra.mxu0 %v7417
        %7657 = vmatprep.subr.bf16.mxu0 0
        %7658 = vmatpush1.bf16.msra.mxu0 %v7418
        %7659 = vmatprep.subr.bf16.mxu0 0
        %7660 = vmatpush1.bf16.msra.mxu0 0
        %7661 = vmatprep.subr.bf16.mxu0 0
        %7662 = vmatpush1.bf16.msra.mxu0 0
        %7663 = vmatprep.subr.bf16.mxu0 0
        %7664 = vmatpush1.bf16.msra.mxu0 0
        %7665 = vmatprep.subr.bf16.mxu0 0
        %7666 = vmatpush1.bf16.msra.mxu0 0
        %7667 = vmatprep.subr.bf16.mxu0 0
        %7668 = vmatpush1.bf16.msra.mxu0 0
        %7669 = vmatprep.subr.bf16.mxu0 0
        %7670 = vmatpush1.bf16.msra.mxu0 0
        %7671 = vmatprep.subr.bf16.mxu0 0
        %7672 = vmatpush1.bf16.msra.mxu0 0
        %7673 = vmatprep.subr.bf16.mxu0 0
        %7674 = vmatpush1.bf16.msra.mxu0 0
        %7675 = vmatprep.subr.bf16.mxu0 0
        %7676 = vmatpush1.bf16.msra.mxu0 0
        %7677 = vmatprep.subr.bf16.mxu0 0
        %7678 = vmatpush1.bf16.msra.mxu0 0
        %7679 = vmatprep.subr.bf16.mxu0 0
        %7680 = vmatpush1.bf16.msra.mxu0 0
        %7681 = vmatprep.subr.bf16.mxu0 0
        %7682 = vmatpush1.bf16.msra.mxu0 0
        %7683 = vmatprep.mubr.bf16.mxu0 0
        %7684 = vmatmul.mubr.bf16.gmra.mrb[0].mxu0 %v7455
        %v7685 = vpop.f32.mrb[0].mxu0
        %v7686 = vadd.f32 %v7597, %v7685
        %v7687 = vpop.f32.mrb[0].mxu0
        %v7688 = vpop.f32.mrb[0].mxu0
        %v7689 = vpop.f32.mrb[0].mxu0
        %7690 = vmatprep.mubr.bf16.mxu0 0
        %7691 = vmatmul.mubr.bf16.gmra.mrb[0].mxu0 %v7457
        %v7692 = vpop.f32.mrb[0].mxu0
        %v7693 = vadd.f32 %v7604, %v7692
        %v7694 = vpop.f32.mrb[0].mxu0
        %v7695 = vpop.f32.mrb[0].mxu0
        %v7696 = vpop.f32.mrb[0].mxu0
        %7697 = vmatprep.mubr.bf16.mxu0 0
        %7698 = vmatmul.mubr.bf16.gmra.mrb[0].mxu0 %v7459
        %v7699 = vpop.f32.mrb[0].mxu0
        %v7700 = vadd.f32 %v7611, %v7699
        %v7701 = vpop.f32.mrb[0].mxu0
        %v7702 = vpop.f32.mrb[0].mxu0
        %v7703 = vpop.f32.mrb[0].mxu0
        %7704 = vmatprep.mubr.bf16.mxu0 0
        %7705 = vmatmul.mubr.bf16.gmra.mrb[0].mxu0 %v7461
        %v7706 = vpop.f32.mrb[0].mxu0
        %v7707 = vadd.f32 %v7618, %v7706
        %v7708 = vpop.f32.mrb[0].mxu0
        %v7709 = vpop.f32.mrb[0].mxu0
        %v7710 = vpop.f32.mrb[0].mxu0
        %7711 = vmatprep.mubr.bf16.mxu0 0
        %7712 = vmatmul.mubr.bf16.gmra.mrb[0].mxu0 %v7463
        %v7713 = vpop.f32.mrb[0].mxu0
        %v7714 = vadd.f32 %v7625, %v7713
        %v7715 = vpop.f32.mrb[0].mxu0
        %v7716 = vpop.f32.mrb[0].mxu0
        %v7717 = vpop.f32.mrb[0].mxu0
        %7718 = vmatprep.mubr.bf16.mxu0 0
        %7719 = vmatmul.mubr.bf16.gmra.mrb[0].mxu0 %v7465
        %v7720 = vpop.f32.mrb[0].mxu0
        %v7721 = vadd.f32 %v7632, %v7720
        %v7722 = vpop.f32.mrb[0].mxu0
        %v7723 = vpop.f32.mrb[0].mxu0
        %v7724 = vpop.f32.mrb[0].mxu0
        %7725 = vmatprep.mubr.bf16.mxu0 0
        %7726 = vmatmul.mubr.bf16.gmra.mrb[0].mxu0 %v7468
        %v7727 = vpop.f32.mrb[0].mxu0
        %v7728 = vadd.f32 %v7639, %v7727
        %v7729 = vpop.f32.mrb[0].mxu0
        %v7730 = vpop.f32.mrb[0].mxu0
        %v7731 = vpop.f32.mrb[0].mxu0
        %7732 = vmatprep.mubr.bf16.mxu0 0
        %7733 = vmatmul.mubr.bf16.gmra.mrb[0].mxu0 %v7471
        %v7734 = vpop.f32.mrb[0].mxu0
        %v7735 = vadd.f32 %v7646, %v7734
        %v7736 = vpop.f32.mrb[0].mxu0
        %v7737 = vpop.f32.mrb[0].mxu0
        %v7738 = vpop.f32.mrb[0].mxu0
        %7739 = vdwg.mxu0
        %7740 = vst [vmem:[%s295] sm:$0xff] %v7686
        %7741 = vst [vmem:[%s295 + $0x8] sm:$0xff] %v7693
        %7742 = vst [vmem:[%s295 + $0x10] sm:$0xff] %v7700
        %7743 = vst [vmem:[%s295 + $0x18] sm:$0xff] %v7707
        %7744 = vst [vmem:[%s295 + $0x20] sm:$0xff] %v7714
        %7745 = vst [vmem:[%s295 + $0x28] sm:$0xff] %v7721
        %7746 = vst [vmem:[%s295 + $0x30] sm:$0xff] %v7728
        %7747 = vst [vmem:[%s295 + $0x38] sm:$0xff] %v7735
        %s7748 = sand.u32 %s197, 1
        %s7749 = scalar_lea.sflag [#allocation3], %s7748
        %s7750 = sand.u32 %s197, 1
        %s7751 = smul.addr %s7750, 64
        %s7752 = scalar_lea.vmem [#allocation2], %s7751
        // Predicated region
        $region49: #{vgg19_slice1_forward.1} parent=47 // pred_check
          %p7753 = pneg %p207
        $region50: #{vgg19_slice1_forward.1} parent=47 // pred_check_branch
          %7755 = sbr.rel (%p7753) target = $region52
        $region51: #{vgg19_slice1_forward.1} parent=47 // pred_region
          %s7756 = smul.u32 8, %s25
          %s7758 = ssub.s32 1024, 1024
          %7759 = vsyncadd %s7749, %s7758
          %s7760 = smul.addr %s26, 8
          %s7761 = sadd.s32 %s7756, %s7760
          %s7762 = smul.addr %s7761, 128
          %s7763 = scalar_lea.hbm %s7, %s7762
          %s7764 = sshll.u32 %s7752, 4
          %s7765 = int_to_ptr.vmem [resolvable:$true] %s7764
          %7770 = dma.vmem_to_hbm [thread:$0]  %s7765, 1024, %s7763, %s7749, 128, 128, 8
        $region52: #{vgg19_slice1_forward.1} parent=47 // pred_fallthru
          _
      $region48: #{vgg19_slice1_forward.1} parent=5 // pred_fallthru
        _
      %p7771 = scmp.le.s32.totalorder 2, %s16
      // Predicated region
      $region53: #{vgg19_slice1_forward.1} parent=5 // pred_check
        %p7772 = pneg %p7771
      $region54: #{vgg19_slice1_forward.1} parent=5 // pred_check_branch
        %7774 = sbr.rel (%p7772) target = $region56
      $region55: #{vgg19_slice1_forward.1} parent=5 // pred_region
        %s7775 = ssub.s32 %s16, 2
        // Predicated region
        $region57: #{vgg19_slice1_forward.1} parent=55 // pred_check
          %p7776 = pneg %p213
        $region58: #{vgg19_slice1_forward.1} parent=55 // pred_check_branch
          %7778 = sbr.rel (%p7776) target = $region60
        $region59: #{vgg19_slice1_forward.1} parent=55 // pred_region
          %s7779 = sand.u32 %s198, 1
          %s7780 = scalar_lea.sflag [#allocation3], %s7779
          %s7781 = sand.u32 %s198, 1
          %s7782 = smul.addr %s7781, 64
          %s7783 = scalar_lea.vmem [#allocation2], %s7782
          %7784 = dma.done %s7780, 1024
        $region60: #{vgg19_slice1_forward.1} parent=55 // pred_fallthru
          _
      $region56: #{vgg19_slice1_forward.1} parent=5 // pred_fallthru
        _
    $region6: #{vgg19_slice1_forward.1} parent=1 // loop_footer
      %s20 = sadd.s32 1, %s16
    $region7: #{vgg19_slice1_forward.1} parent=1 // loop_footer_branch
      %15 = sbr.rel target = $region3
    $region8: #{vgg19_slice1_forward.1} parent=1 // loop_exit
      _
    %7785 = vsyncpa [#allocation3], 1
    %s7786 = scalar_lea.sflag [#allocation3], 1
    %7787 = vsyncpa %s7786, 1

</llo_original>
